<compile_context>
chip_gen: v6e
topology: v6e:2x2x1
jax: 0.10.0
libtpu: 0.0.40
codegen_flags: <defaults>
</compile_context>

<pallas_src>
import functools

import jax
import jax.numpy as jnp
from jax.experimental import pallas as pl
from jax.experimental.pallas import tpu as pltpu


def _attention_kernel(x_ref, wq_ref, wk_ref, wv_ref, wp_ref, bp_ref, o_ref,
                      *, num_heads, head_dim, approx_recip):
    # x_ref : (Bb, N, C)  bf16 block (Bb batch elements per grid step)
    # wq/wk/wv_ref : (C, C) bf16   (softmax scale pre-folded into wq)
    # wp_ref : (C, C) bf16
    # bp_ref : (1, C) fp32
    # o_ref  : (Bb, N, C)
    Bb, N, C = x_ref.shape
    H, hd = num_heads, head_dim
    f32, bf16 = jnp.float32, jnp.bfloat16

    # ---- dense full-C QKV projections (one wide MXU matmul each) -------------
    x2 = x_ref[...].reshape(Bb * N, C)                                   # (M, C) bf16
    q2 = jnp.dot(x2, wq_ref[...], preferred_element_type=f32)            # (M, C) fp32
    k2 = jnp.dot(x2, wk_ref[...], preferred_element_type=f32)
    v2 = jnp.dot(x2, wv_ref[...], preferred_element_type=f32)

    def to_heads(t):
        # (M, C) fp32 -> (Bb*H, N, hd) bf16 ; columns are already head-major.
        t = t.reshape(Bb, N, H, hd)
        t = jnp.transpose(t, (0, 2, 1, 3))                               # (Bb, H, N, hd)
        return t.reshape(Bb * H, N, hd).astype(bf16)

    qh, kh, vh = to_heads(q2), to_heads(k2), to_heads(v2)

    # ---- attention core, batched over all (batch, head) groups ---------------
    s = jnp.einsum('gnd,gmd->gnm', qh, kh, preferred_element_type=f32)   # (G, N, N)
    s = s - jnp.max(s, axis=-1, keepdims=True)                           # stable softmax
    p = jnp.exp(s)
    denom = jnp.sum(p, axis=-1, keepdims=True)
    p = p * pl.reciprocal(denom, approx=approx_recip)
    # attn_drop has p=0.0 -> identity
    ctx = jnp.einsum('gnm,gmd->gnd', p.astype(bf16), vh,
                     preferred_element_type=f32)                         # (G, N, hd)

    # ---- head merge + output projection: one dense (M, C) @ (C, C) matmul ----
    ctx2 = jnp.transpose(ctx.reshape(Bb, H, N, hd), (0, 2, 1, 3))        # (Bb, N, H, hd)
    ctx2 = ctx2.reshape(Bb * N, C).astype(bf16)
    out = jnp.dot(ctx2, wp_ref[...], preferred_element_type=f32)         # (M, C) fp32
    out = out + bp_ref[...]                                              # broadcast bias
    # proj_drop has p=0.0 -> identity
    o_ref[...] = out.reshape(Bb, N, C).astype(o_ref.dtype)


def attention_pallas(x, w_qkv, w_proj, b_proj, *, num_heads,
                     block_b=None, approx_recip=True):
    """x: (B, N, C); w_qkv: (C, 3C) [x @ W convention]; w_proj: (C, C); b_proj: (C,)."""
    B, N, C = x.shape
    H = num_heads
    hd = C // H
    scale = hd ** (-0.5)

    # Pick how many batch elements to process per grid step: large enough that
    # M = block_b * N fills the MXU / amortizes per-step overhead, small enough
    # to keep several steps for pipelining on real batch sizes.
    if block_b is None:
        max_rows = 512
        block_b = 1
        for d in range(1, B + 1):
            if B % d == 0 and d * N <= max_rows:
                block_b = d
    assert B % block_b == 0, "block_b must divide B"

    # Host-side weight prep (plain XLA, zero kernel cost):
    #  - split fused QKV weight into three dense (C, C) projections,
    #  - fold the softmax scale into the Q weight,
    #  - cast matmul operands to bf16 (fp32 accumulation inside the kernel).
    wq = (w_qkv[:, 0:C] * scale).astype(jnp.bfloat16)
    wk = w_qkv[:, C:2 * C].astype(jnp.bfloat16)
    wv = w_qkv[:, 2 * C:3 * C].astype(jnp.bfloat16)
    wp = w_proj.astype(jnp.bfloat16)
    b2d = b_proj.reshape(1, C).astype(jnp.float32)
    x_bf = x.astype(jnp.bfloat16)

    kernel = functools.partial(_attention_kernel, num_heads=H, head_dim=hd,
                               approx_recip=approx_recip)

    return pl.pallas_call(
        kernel,
        out_shape=jax.ShapeDtypeStruct((B, N, C), x.dtype),
        grid_spec=pltpu.PrefetchScalarGridSpec(
            num_scalar_prefetch=0,
            grid=(B // block_b,),
            in_specs=[
                pl.BlockSpec((block_b, N, C), lambda b: (b, 0, 0)),  # x block
                pl.BlockSpec((C, C), lambda b: (0, 0)),              # Wq (shared)
                pl.BlockSpec((C, C), lambda b: (0, 0)),              # Wk (shared)
                pl.BlockSpec((C, C), lambda b: (0, 0)),              # Wv (shared)
                pl.BlockSpec((C, C), lambda b: (0, 0)),              # Wproj (shared)
                pl.BlockSpec((1, C), lambda b: (0, 0)),              # proj bias
            ],
            out_specs=pl.BlockSpec((block_b, N, C), lambda b: (b, 0, 0)),
        ),
        compiler_params=pltpu.CompilerParams(
            dimension_semantics=("parallel",),  # batch axis splits across TCs (v7x)
        ),
    )(x_bf, wq, wk, wv, wp, b2d)


def attention_reference(x, w_qkv, w_proj, b_proj, *, num_heads):
    """Pure-JAX fp32 reference mirroring the PyTorch forward."""
    B, N, C = x.shape
    head_dim = C // num_heads
    scale = head_dim ** (-0.5)
    qkv = x @ w_qkv                                           # (B, N, 3C)
    qkv = qkv.reshape(B, N, 3, num_heads, head_dim)
    qkv = jnp.transpose(qkv, (2, 0, 3, 1, 4))                 # (3, B, H, N, hd)
    q, k, v = qkv[0], qkv[1], qkv[2]
    attn = (q @ jnp.swapaxes(k, -2, -1)) * scale              # (B, H, N, N)
    attn = jax.nn.softmax(attn, axis=-1)
    ctx = attn @ v                                            # (B, H, N, hd)
    ctx = jnp.transpose(ctx, (0, 2, 1, 3)).reshape(B, N, C)
    return ctx @ w_proj + b_proj


if __name__ == "__main__":
    # Small shapes consistent with the module: dim=32, num_heads=8 -> head_dim=4.
    # (Toy shape only: production ViT should use C a multiple of 128 and hd >= 64
    #  so lanes are dense; conclusions from this shape don't transfer to perf.)
    B, N, C = 2, 8, 32
    num_heads = 8

    key = jax.random.PRNGKey(0)
    kx, kqkv, kproj, kbias = jax.random.split(key, 4)

    x = jax.random.normal(kx, (B, N, C), dtype=jnp.float32)
    # nn.Linear shapes qkv (3C, C) / proj (C, C), pre-transposed to (in, out).
    w_qkv = 0.02 * jax.random.normal(kqkv, (C, 3 * C), dtype=jnp.float32)   # qkv_bias=False
    w_proj = 0.02 * jax.random.normal(kproj, (C, C), dtype=jnp.float32)
    b_proj = 0.02 * jax.random.normal(kbias, (C,), dtype=jnp.float32)

    out = attention_pallas(x, w_qkv, w_proj, b_proj, num_heads=num_heads)
    out = jax.block_until_ready(out)

    ref = attention_reference(x, w_qkv, w_proj, b_proj, num_heads=num_heads)
    assert out.shape == (B, N, C)
    # Tolerance relaxed for bf16 MXU operands + approx reciprocal (fp32 reference).
    assert jnp.allclose(out, ref, atol=2e-2, rtol=2e-2), "mismatch vs JAX reference"

    print("KERNEL_OK")
</pallas_src>

<mosaic_0001>
module attributes {stable_mosaic.version = 11 : i64} {
  func.func @_attention_kernel(%arg0: i32, %arg1: memref<2x8x32xbf16, #tpu.memory_space<vmem>>, %arg2: memref<32x32xbf16, #tpu.memory_space<vmem>>, %arg3: memref<32x32xbf16, #tpu.memory_space<vmem>>, %arg4: memref<32x32xbf16, #tpu.memory_space<vmem>>, %arg5: memref<32x32xbf16, #tpu.memory_space<vmem>>, %arg6: memref<1x32xf32, #tpu.memory_space<vmem>>, %arg7: memref<2x8x32xf32, #tpu.memory_space<vmem>>) attributes {dimension_semantics = [#tpu.dimension_semantics<parallel>], iteration_bounds = array<i64: 1>, scalar_prefetch = 0 : i64, scratch_operands = 0 : i64, tpu.core_type = #tpu.core_type<tc>, window_params = [{transform_indices = @transform_0, window_bounds = array<i64: 2, 8, 32>}, {pipeline_mode = #tpu.pipeline_mode<synchronous>, transform_indices = @transform_1, window_bounds = array<i64: 32, 32>}, {pipeline_mode = #tpu.pipeline_mode<synchronous>, transform_indices = @transform_2, window_bounds = array<i64: 32, 32>}, {pipeline_mode = #tpu.pipeline_mode<synchronous>, transform_indices = @transform_3, window_bounds = array<i64: 32, 32>}, {pipeline_mode = #tpu.pipeline_mode<synchronous>, transform_indices = @transform_4, window_bounds = array<i64: 32, 32>}, {pipeline_mode = #tpu.pipeline_mode<synchronous>, transform_indices = @transform_5, window_bounds = array<i64: 1, 32>}, {transform_indices = @transform_6, window_bounds = array<i64: 2, 8, 32>}]} {
    %c0 = arith.constant 0 : index
    %c0_0 = arith.constant 0 : index
    %c0_1 = arith.constant 0 : index
    %0 = vector.load %arg1[%c0, %c0_0, %c0_1] : memref<2x8x32xbf16, #tpu.memory_space<vmem>>, vector<2x8x32xbf16>
    %1 = vector.shape_cast %0 : vector<2x8x32xbf16> to vector<16x32xbf16>
    %c0_2 = arith.constant 0 : index
    %c0_3 = arith.constant 0 : index
    %2 = vector.load %arg2[%c0_2, %c0_3] : memref<32x32xbf16, #tpu.memory_space<vmem>>, vector<32x32xbf16>
    %cst = arith.constant dense<0.000000e+00> : vector<16x32xf32>
    %3 = tpu.matmul %1, %2, %cst {dimension_numbers = #tpu.dot_dimension_numbers<[1], [0], [0], [1], [0, 0, 1, 1], [], []>} : vector<16x32xbf16>, vector<32x32xbf16>, vector<16x32xf32> -> vector<16x32xf32>
    %c0_4 = arith.constant 0 : index
    %c0_5 = arith.constant 0 : index
    %4 = vector.load %arg3[%c0_4, %c0_5] : memref<32x32xbf16, #tpu.memory_space<vmem>>, vector<32x32xbf16>
    %cst_6 = arith.constant dense<0.000000e+00> : vector<16x32xf32>
    %5 = tpu.matmul %1, %4, %cst_6 {dimension_numbers = #tpu.dot_dimension_numbers<[1], [0], [0], [1], [0, 0, 1, 1], [], []>} : vector<16x32xbf16>, vector<32x32xbf16>, vector<16x32xf32> -> vector<16x32xf32>
    %c0_7 = arith.constant 0 : index
    %c0_8 = arith.constant 0 : index
    %6 = vector.load %arg4[%c0_7, %c0_8] : memref<32x32xbf16, #tpu.memory_space<vmem>>, vector<32x32xbf16>
    %cst_9 = arith.constant dense<0.000000e+00> : vector<16x32xf32>
    %7 = tpu.matmul %1, %6, %cst_9 {dimension_numbers = #tpu.dot_dimension_numbers<[1], [0], [0], [1], [0, 0, 1, 1], [], []>} : vector<16x32xbf16>, vector<32x32xbf16>, vector<16x32xf32> -> vector<16x32xf32>
    %8 = vector.shape_cast %3 : vector<16x32xf32> to vector<2x8x8x4xf32>
    %9 = tpu.transpose %8, [0, 2, 1, 3] : vector<2x8x8x4xf32> -> vector<2x8x8x4xf32>
    %10 = vector.shape_cast %9 : vector<2x8x8x4xf32> to vector<16x8x4xf32>
    %11 = arith.truncf %10 : vector<16x8x4xf32> to vector<16x8x4xbf16>
    %12 = vector.shape_cast %5 : vector<16x32xf32> to vector<2x8x8x4xf32>
    %13 = tpu.transpose %12, [0, 2, 1, 3] : vector<2x8x8x4xf32> -> vector<2x8x8x4xf32>
    %14 = vector.shape_cast %13 : vector<2x8x8x4xf32> to vector<16x8x4xf32>
    %15 = arith.truncf %14 : vector<16x8x4xf32> to vector<16x8x4xbf16>
    %16 = vector.shape_cast %7 : vector<16x32xf32> to vector<2x8x8x4xf32>
    %17 = tpu.transpose %16, [0, 2, 1, 3] : vector<2x8x8x4xf32> -> vector<2x8x8x4xf32>
    %18 = vector.shape_cast %17 : vector<2x8x8x4xf32> to vector<16x8x4xf32>
    %19 = arith.truncf %18 : vector<16x8x4xf32> to vector<16x8x4xbf16>
    "tpu.trace_start"() <{level = 10 : i32, message = "gnd,gmd->gnm"}> : () -> ()
    %cst_10 = arith.constant dense<0.000000e+00> : vector<16x8x8xf32>
    %20 = tpu.matmul %11, %15, %cst_10 {dimension_numbers = #tpu.dot_dimension_numbers<[2], [2], [1], [1], [0, 0, 0, 1, 1, 1], [0], [0]>} : vector<16x8x4xbf16>, vector<16x8x4xbf16>, vector<16x8x8xf32> -> vector<16x8x8xf32>
    "tpu.trace_stop"() : () -> ()
    %cst_11 = arith.constant dense<0xFF800000> : vector<16x8xf32>
    %21 = vector.multi_reduction <maximumf>, %20, %cst_11 [2] : vector<16x8x8xf32> to vector<16x8xf32>
    %22 = vector.shape_cast %21 : vector<16x8xf32> to vector<16x8x1xf32>
    %23 = vector.broadcast %22 : vector<16x8x1xf32> to vector<16x8x8xf32>
    %24 = arith.subf %20, %23 : vector<16x8x8xf32>
    %25 = math.exp %24 : vector<16x8x8xf32>
    %cst_12 = arith.constant dense<0.000000e+00> : vector<16x8xf32>
    %26 = vector.multi_reduction <add>, %25, %cst_12 [2] : vector<16x8x8xf32> to vector<16x8xf32>
    %27 = vector.shape_cast %26 : vector<16x8xf32> to vector<16x8x1xf32>
    %28 = tpu.reciprocal %27 {approx = true} : vector<16x8x1xf32> -> vector<16x8x1xf32>
    %29 = vector.broadcast %28 : vector<16x8x1xf32> to vector<16x8x8xf32>
    %30 = arith.mulf %25, %29 : vector<16x8x8xf32>
    %31 = arith.truncf %30 : vector<16x8x8xf32> to vector<16x8x8xbf16>
    "tpu.trace_start"() <{level = 10 : i32, message = "gnm,gmd->gnd"}> : () -> ()
    %cst_13 = arith.constant dense<0.000000e+00> : vector<16x8x4xf32>
    %32 = tpu.matmul %31, %19, %cst_13 {dimension_numbers = #tpu.dot_dimension_numbers<[2], [1], [1], [2], [0, 0, 0, 1, 1, 2], [0], [0]>} : vector<16x8x8xbf16>, vector<16x8x4xbf16>, vector<16x8x4xf32> -> vector<16x8x4xf32>
    "tpu.trace_stop"() : () -> ()
    %33 = vector.shape_cast %32 : vector<16x8x4xf32> to vector<2x8x8x4xf32>
    %34 = tpu.transpose %33, [0, 2, 1, 3] : vector<2x8x8x4xf32> -> vector<2x8x8x4xf32>
    %35 = vector.shape_cast %34 : vector<2x8x8x4xf32> to vector<16x32xf32>
    %36 = arith.truncf %35 : vector<16x32xf32> to vector<16x32xbf16>
    %c0_14 = arith.constant 0 : index
    %c0_15 = arith.constant 0 : index
    %37 = vector.load %arg5[%c0_14, %c0_15] : memref<32x32xbf16, #tpu.memory_space<vmem>>, vector<32x32xbf16>
    %cst_16 = arith.constant dense<0.000000e+00> : vector<16x32xf32>
    %38 = tpu.matmul %36, %37, %cst_16 {dimension_numbers = #tpu.dot_dimension_numbers<[1], [0], [0], [1], [0, 0, 1, 1], [], []>} : vector<16x32xbf16>, vector<32x32xbf16>, vector<16x32xf32> -> vector<16x32xf32>
    %c0_17 = arith.constant 0 : index
    %c0_18 = arith.constant 0 : index
    %39 = vector.load %arg6[%c0_17, %c0_18] : memref<1x32xf32, #tpu.memory_space<vmem>>, vector<1x32xf32>
    %40 = vector.broadcast %39 : vector<1x32xf32> to vector<16x32xf32>
    %41 = arith.addf %38, %40 : vector<16x32xf32>
    %42 = vector.shape_cast %41 : vector<16x32xf32> to vector<2x8x32xf32>
    %c0_19 = arith.constant 0 : index
    %c0_20 = arith.constant 0 : index
    %c0_21 = arith.constant 0 : index
    %43 = vector.load %arg7[%c0_19, %c0_20, %c0_21] : memref<2x8x32xf32, #tpu.memory_space<vmem>>, vector<2x8x32xf32>
    tpu.vector_store %arg7[%c0_19, %c0_20, %c0_21], %42 {strides = array<i32>} : memref<2x8x32xf32, #tpu.memory_space<vmem>>, vector<2x8x32xf32>,
    return
  }
  func.func @transform_0(%arg0: i32) -> (i32, i32, i32) {
    %c0_i32 = arith.constant 0 : i32
    %c0_i32_0 = arith.constant 0 : i32
    %c0_i32_1 = arith.constant 0 : i32
    return %arg0, %c0_i32, %c0_i32_0 : i32, i32, i32
  }
  func.func @transform_1(%arg0: i32) -> (i32, i32) {
    %c0_i32 = arith.constant 0 : i32
    %c0_i32_0 = arith.constant 0 : i32
    %c0_i32_1 = arith.constant 0 : i32
    return %c0_i32, %c0_i32_0 : i32, i32
  }
  func.func @transform_2(%arg0: i32) -> (i32, i32) {
    %c0_i32 = arith.constant 0 : i32
    %c0_i32_0 = arith.constant 0 : i32
    %c0_i32_1 = arith.constant 0 : i32
    return %c0_i32, %c0_i32_0 : i32, i32
  }
  func.func @transform_3(%arg0: i32) -> (i32, i32) {
    %c0_i32 = arith.constant 0 : i32
    %c0_i32_0 = arith.constant 0 : i32
    %c0_i32_1 = arith.constant 0 : i32
    return %c0_i32, %c0_i32_0 : i32, i32
  }
  func.func @transform_4(%arg0: i32) -> (i32, i32) {
    %c0_i32 = arith.constant 0 : i32
    %c0_i32_0 = arith.constant 0 : i32
    %c0_i32_1 = arith.constant 0 : i32
    return %c0_i32, %c0_i32_0 : i32, i32
  }
  func.func @transform_5(%arg0: i32) -> (i32, i32) {
    %c0_i32 = arith.constant 0 : i32
    %c0_i32_0 = arith.constant 0 : i32
    %c0_i32_1 = arith.constant 0 : i32
    return %c0_i32, %c0_i32_0 : i32, i32
  }
  func.func @transform_6(%arg0: i32) -> (i32, i32, i32) {
    %c0_i32 = arith.constant 0 : i32
    %c0_i32_0 = arith.constant 0 : i32
    %c0_i32_1 = arith.constant 0 : i32
    return %arg0, %c0_i32, %c0_i32_0 : i32, i32, i32
  }
}

</mosaic_0001>

<llo_original>
// kernel: tpu_custom_call.1
$region0: #{tpu_custom_call.1}
  #allocation0 [shape = 'u32[]', space=smem, size = 0x4, offset = 0x4, fixed_abs, tag = 'smem constant byte address 0x4 - core index']
  #allocation1 [shape = 'u32[144,128]{1,0:T(1,128)}', space=vmem, size = 0x12000, scoped, tag = 'internal scratch']
  %s0 = inlined_call_operand.hbm [shape: bf16[2,8,32], index: 0, kind: input, shape index: {}]
  %s1 = inlined_call_operand.hbm [shape: bf16[32,32], index: 1, kind: input, shape index: {}]
  %s2 = inlined_call_operand.hbm [shape: bf16[32,32], index: 2, kind: input, shape index: {}]
  %s3 = inlined_call_operand.hbm [shape: bf16[32,32], index: 3, kind: input, shape index: {}]
  %s4 = inlined_call_operand.hbm [shape: bf16[32,32], index: 4, kind: input, shape index: {}]
  %s5 = inlined_call_operand.vmem [shape: f32[1,32], index: 5, kind: input, shape index: {}]
  %s6 = inlined_call_operand.hbm [shape: f32[2,8,32], index: 6, kind: output, shape index: {}]
  %s7 = sld [smem:[#allocation0]]
  $region54: #{tpu_custom_call.1} parent=0
    _
  %s9 = ssub.s32 1, %s7
  %s10 = scalar_select 0, %s9, %s7
  $region1: #{tpu_custom_call.1} parent=0
    #allocation2 [shape = 'u8[4096]{0}', space=vmem, size = 0x1000, scoped, tag = 'input window, operand 0, single buffered']
    #allocation3 [shape = 's32[1]{0}', space=sflag, size = 0x4, scoped, tag = 'scoped memory for tpu_custom_call.1']
    #allocation4 [shape = 's32[1]{0}', space=sflag, size = 0x4, scoped, tag = 'scoped memory for tpu_custom_call.1']
    #allocation5 [shape = 'u8[8192]{0}', space=vmem, size = 0x2000, scoped, tag = 'input window, operand 1, single buffered']
    #allocation6 [shape = 's32[1]{0}', space=sflag, size = 0x4, scoped, tag = 'scoped memory for tpu_custom_call.1']
    #allocation7 [shape = 'u8[8192]{0}', space=vmem, size = 0x2000, scoped, tag = 'input window, operand 2, single buffered']
    #allocation8 [shape = 'u8[8192]{0}', space=vmem, size = 0x2000, scoped, tag = 'input window, operand 3, single buffered']
    #allocation9 [shape = 's32[1]{0}', space=sflag, size = 0x4, scoped, tag = 'scoped memory for tpu_custom_call.1']
    #allocation10 [shape = 'u8[8192]{0}', space=vmem, size = 0x2000, scoped, tag = 'input window, operand 4, single buffered']
    #allocation11 [shape = 'u8[8192]{0}', space=vmem, size = 0x2000, scoped, tag = 'output window, operand 0, single buffered']
    %11 = vsyncpa [#allocation3], 0
    %12 = vsyncpa [#allocation6], 0
    %13 = vsyncpa [#allocation9], 0
    %14 = vsyncpa [#allocation4], 0
    // Predicated region
    $region2: #{tpu_custom_call.1} parent=1 // pred_check
      _
    $region3: #{tpu_custom_call.1} parent=1 // pred_check_branch
      %16 = sbr.rel (0) target = $region5
    $region4: #{tpu_custom_call.1} parent=1 // pred_region
      %s18 = ssub.s32 128, 128
      %19 = vsyncadd [#allocation3], %s18
      %s20 = sshll.u32 [#allocation2], 4
      %s21 = int_to_ptr.vmem [resolvable:$true] %s20
      %26 = dma.hbm_to_vmem [thread:$0]  %s0, 128, %s21, [#allocation3], 64, 64, 4
    $region5: #{tpu_custom_call.1} parent=1 // pred_fallthru
      _
    // Predicated region
    $region6: #{tpu_custom_call.1} parent=1 // pred_check
      _
    $region7: #{tpu_custom_call.1} parent=1 // pred_check_branch
      %28 = sbr.rel (0) target = $region9
    $region8: #{tpu_custom_call.1} parent=1 // pred_region
      %s30 = ssub.s32 256, 256
      %31 = vsyncadd [#allocation6], %s30
      %s32 = sshll.u32 [#allocation5], 4
      %s33 = int_to_ptr.vmem [resolvable:$true] %s32
      %38 = dma.hbm_to_vmem [thread:$0]  %s1, 256, %s33, [#allocation6], 64, 64, 4
    $region9: #{tpu_custom_call.1} parent=1 // pred_fallthru
      _
    // Predicated region
    $region10: #{tpu_custom_call.1} parent=1 // pred_check
      _
    $region11: #{tpu_custom_call.1} parent=1 // pred_check_branch
      %40 = sbr.rel (0) target = $region13
    $region12: #{tpu_custom_call.1} parent=1 // pred_region
      %s42 = ssub.s32 256, 256
      %43 = vsyncadd [#allocation6], %s42
      %s44 = sshll.u32 [#allocation7], 4
      %s45 = int_to_ptr.vmem [resolvable:$true] %s44
      %50 = dma.hbm_to_vmem [thread:$0]  %s2, 256, %s45, [#allocation6], 64, 64, 4
    $region13: #{tpu_custom_call.1} parent=1 // pred_fallthru
      _
    // Predicated region
    $region14: #{tpu_custom_call.1} parent=1 // pred_check
      _
    $region15: #{tpu_custom_call.1} parent=1 // pred_check_branch
      %52 = sbr.rel (0) target = $region17
    $region16: #{tpu_custom_call.1} parent=1 // pred_region
      %s54 = ssub.s32 256, 256
      %55 = vsyncadd [#allocation9], %s54
      %s56 = sshll.u32 [#allocation8], 4
      %s57 = int_to_ptr.vmem [resolvable:$true] %s56
      %62 = dma.hbm_to_vmem [thread:$0]  %s3, 256, %s57, [#allocation9], 64, 64, 4
    $region17: #{tpu_custom_call.1} parent=1 // pred_fallthru
      _
    // Predicated region
    $region18: #{tpu_custom_call.1} parent=1 // pred_check
      _
    $region19: #{tpu_custom_call.1} parent=1 // pred_check_branch
      %64 = sbr.rel (0) target = $region21
    $region20: #{tpu_custom_call.1} parent=1 // pred_region
      %s66 = ssub.s32 256, 256
      %67 = vsyncadd [#allocation9], %s66
      %s68 = sshll.u32 [#allocation10], 4
      %s69 = int_to_ptr.vmem [resolvable:$true] %s68
      %74 = dma.hbm_to_vmem [thread:$0]  %s4, 256, %s69, [#allocation9], 64, 64, 4
    $region21: #{tpu_custom_call.1} parent=1 // pred_fallthru
      _
    // Predicated region
    $region22: #{tpu_custom_call.1} parent=1 // pred_check
      _
    $region23: #{tpu_custom_call.1} parent=1 // pred_check_branch
      %76 = sbr.rel (0) target = $region25
    $region24: #{tpu_custom_call.1} parent=1 // pred_region
      _
    $region25: #{tpu_custom_call.1} parent=1 // pred_fallthru
      _
    // Predicated region
    $region26: #{tpu_custom_call.1} parent=1 // pred_check
      _
    $region27: #{tpu_custom_call.1} parent=1 // pred_check_branch
      %78 = sbr.rel (0) target = $region29
    $region28: #{tpu_custom_call.1} parent=1 // pred_region
      %79 = dma.done [#allocation3], 128
    $region29: #{tpu_custom_call.1} parent=1 // pred_fallthru
      _
    // Predicated region
    $region30: #{tpu_custom_call.1} parent=1 // pred_check
      _
    $region31: #{tpu_custom_call.1} parent=1 // pred_check_branch
      %81 = sbr.rel (0) target = $region33
    $region32: #{tpu_custom_call.1} parent=1 // pred_region
      %82 = dma.done [#allocation6], 256
    $region33: #{tpu_custom_call.1} parent=1 // pred_fallthru
      _
    // Predicated region
    $region34: #{tpu_custom_call.1} parent=1 // pred_check
      _
    $region35: #{tpu_custom_call.1} parent=1 // pred_check_branch
      %84 = sbr.rel (0) target = $region37
    $region36: #{tpu_custom_call.1} parent=1 // pred_region
      %85 = dma.done [#allocation6], 256
    $region37: #{tpu_custom_call.1} parent=1 // pred_fallthru
      _
    // Predicated region
    $region38: #{tpu_custom_call.1} parent=1 // pred_check
      _
    $region39: #{tpu_custom_call.1} parent=1 // pred_check_branch
      %87 = sbr.rel (0) target = $region41
    $region40: #{tpu_custom_call.1} parent=1 // pred_region
      %88 = dma.done [#allocation9], 256
    $region41: #{tpu_custom_call.1} parent=1 // pred_fallthru
      _
    // Predicated region
    $region42: #{tpu_custom_call.1} parent=1 // pred_check
      _
    $region43: #{tpu_custom_call.1} parent=1 // pred_check_branch
      %90 = sbr.rel (0) target = $region45
    $region44: #{tpu_custom_call.1} parent=1 // pred_region
      %91 = dma.done [#allocation9], 256
    $region45: #{tpu_custom_call.1} parent=1 // pred_fallthru
      _
    %v93 = vld [vmem:[#allocation2] sm:$0xf]
    %v94 = vld [vmem:[#allocation2 + $0x4] sm:$0xf]
    %v95 = vld [vmem:[#allocation5] sm:$0xf]
    %v96 = vld [vmem:[#allocation5 + $0x4] sm:$0xf]
    %v97 = vld [vmem:[#allocation5 + $0x8] sm:$0xf]
    %v98 = vld [vmem:[#allocation5 + $0xc] sm:$0xf]
    %v101 = vunpack.c.l.b16 %v93
    %v102 = vunpack.c.l.b16 %v94
    %v103 = vpack.c.b16 %v102, %v101
    %v108 = vunpack.c.l.b16 %v95
    %v109 = vunpack.c.l.b16 %v96
    %v110 = vunpack.c.l.b16 %v97
    %v111 = vunpack.c.l.b16 %v98
    %v112 = vpack.c.b16 %v109, %v108
    %v113 = vpack.c.b16 %v111, %v110
    %vm116 = vcmask 261120
    %v118 = vsel %vm116, %v103, 0
    %120 = vmatprep.subr.bf16.mxu0 0
    %121 = vmatpush1.bf16.msra.mxu0 0
    %122 = vmatprep.subr.bf16.mxu0 0
    %123 = vmatpush1.bf16.msra.mxu0 0
    %124 = vmatprep.subr.bf16.mxu0 0
    %125 = vmatpush1.bf16.msra.mxu0 0
    %126 = vmatprep.subr.bf16.mxu0 0
    %127 = vmatpush1.bf16.msra.mxu0 0
    %128 = vmatprep.subr.bf16.mxu0 0
    %129 = vmatpush1.bf16.msra.mxu0 0
    %130 = vmatprep.subr.bf16.mxu0 0
    %131 = vmatpush1.bf16.msra.mxu0 0
    %132 = vmatprep.subr.bf16.mxu0 0
    %133 = vmatpush1.bf16.msra.mxu0 %v113
    %134 = vmatprep.subr.bf16.mxu0 0
    %135 = vmatpush1.bf16.msra.mxu0 %v112
    %136 = vmatprep.subr.bf16.mxu0 0
    %137 = vmatpush2.bf16.msra.mxu0 0
    %138 = vmatprep.subr.bf16.mxu0 0
    %139 = vmatpush2.bf16.msra.mxu0 0
    %140 = vmatprep.subr.bf16.mxu0 0
    %141 = vmatpush2.bf16.msra.mxu0 0
    %142 = vmatprep.subr.bf16.mxu0 0
    %143 = vmatpush2.bf16.msra.mxu0 0
    %144 = vmatprep.subr.bf16.mxu0 0
    %145 = vmatpush2.bf16.msra.mxu0 0
    %146 = vmatprep.subr.bf16.mxu0 0
    %147 = vmatpush2.bf16.msra.mxu0 0
    %148 = vmatprep.subr.bf16.mxu0 0
    %149 = vmatpush2.bf16.msra.mxu0 0
    %150 = vmatprep.subr.bf16.mxu0 0
    %151 = vmatpush2.bf16.msra.mxu0 0
    %152 = vmatprep.mubr.bf16.mxu0 0
    %153 = vmatmul.mubr.bf16.gmra.mxu0 %v118
    %v154 = vpop.f32.mrf.mxu0
    %v155 = vadd.f32 0.0, %v154
    %v156 = vpop.f32.mrf.mxu0
    %v157 = vpop.f32.mrf.mxu0
    %v158 = vadd.f32 0.0, %v157
    %v159 = vpop.f32.mrf.mxu0
    %160 = vdwg.mxu0
    %v161 = vld [vmem:[#allocation7] sm:$0xf]
    %v162 = vld [vmem:[#allocation7 + $0x4] sm:$0xf]
    %v163 = vld [vmem:[#allocation7 + $0x8] sm:$0xf]
    %v164 = vld [vmem:[#allocation7 + $0xc] sm:$0xf]
    %v169 = vunpack.c.l.b16 %v161
    %v170 = vunpack.c.l.b16 %v162
    %v171 = vunpack.c.l.b16 %v163
    %v172 = vunpack.c.l.b16 %v164
    %v173 = vpack.c.b16 %v170, %v169
    %v174 = vpack.c.b16 %v172, %v171
    %177 = vmatprep.subr.bf16.mxu0 0
    %178 = vmatpush1.bf16.msra.mxu0 0
    %179 = vmatprep.subr.bf16.mxu0 0
    %180 = vmatpush1.bf16.msra.mxu0 0
    %181 = vmatprep.subr.bf16.mxu0 0
    %182 = vmatpush1.bf16.msra.mxu0 0
    %183 = vmatprep.subr.bf16.mxu0 0
    %184 = vmatpush1.bf16.msra.mxu0 0
    %185 = vmatprep.subr.bf16.mxu0 0
    %186 = vmatpush1.bf16.msra.mxu0 0
    %187 = vmatprep.subr.bf16.mxu0 0
    %188 = vmatpush1.bf16.msra.mxu0 0
    %189 = vmatprep.subr.bf16.mxu0 0
    %190 = vmatpush1.bf16.msra.mxu0 %v174
    %191 = vmatprep.subr.bf16.mxu0 0
    %192 = vmatpush1.bf16.msra.mxu0 %v173
    %193 = vmatprep.subr.bf16.mxu0 0
    %194 = vmatpush2.bf16.msra.mxu0 0
    %195 = vmatprep.subr.bf16.mxu0 0
    %196 = vmatpush2.bf16.msra.mxu0 0
    %197 = vmatprep.subr.bf16.mxu0 0
    %198 = vmatpush2.bf16.msra.mxu0 0
    %199 = vmatprep.subr.bf16.mxu0 0
    %200 = vmatpush2.bf16.msra.mxu0 0
    %201 = vmatprep.subr.bf16.mxu0 0
    %202 = vmatpush2.bf16.msra.mxu0 0
    %203 = vmatprep.subr.bf16.mxu0 0
    %204 = vmatpush2.bf16.msra.mxu0 0
    %205 = vmatprep.subr.bf16.mxu0 0
    %206 = vmatpush2.bf16.msra.mxu0 0
    %207 = vmatprep.subr.bf16.mxu0 0
    %208 = vmatpush2.bf16.msra.mxu0 0
    %209 = vmatprep.mubr.bf16.mxu0 0
    %210 = vmatmul.mubr.bf16.gmra.mxu0 %v118
    %v211 = vpop.f32.mrf.mxu0
    %v212 = vadd.f32 0.0, %v211
    %v213 = vpop.f32.mrf.mxu0
    %v214 = vpop.f32.mrf.mxu0
    %v215 = vadd.f32 0.0, %v214
    %v216 = vpop.f32.mrf.mxu0
    %217 = vdwg.mxu0
    %v218 = vld [vmem:[#allocation8] sm:$0xf]
    %v219 = vld [vmem:[#allocation8 + $0x4] sm:$0xf]
    %v220 = vld [vmem:[#allocation8 + $0x8] sm:$0xf]
    %v221 = vld [vmem:[#allocation8 + $0xc] sm:$0xf]
    %v226 = vunpack.c.l.b16 %v218
    %v227 = vunpack.c.l.b16 %v219
    %v228 = vunpack.c.l.b16 %v220
    %v229 = vunpack.c.l.b16 %v221
    %v230 = vpack.c.b16 %v227, %v226
    %v231 = vpack.c.b16 %v229, %v228
    %234 = vmatprep.subr.bf16.mxu0 0
    %235 = vmatpush1.bf16.msra.mxu0 0
    %236 = vmatprep.subr.bf16.mxu0 0
    %237 = vmatpush1.bf16.msra.mxu0 0
    %238 = vmatprep.subr.bf16.mxu0 0
    %239 = vmatpush1.bf16.msra.mxu0 0
    %240 = vmatprep.subr.bf16.mxu0 0
    %241 = vmatpush1.bf16.msra.mxu0 0
    %242 = vmatprep.subr.bf16.mxu0 0
    %243 = vmatpush1.bf16.msra.mxu0 0
    %244 = vmatprep.subr.bf16.mxu0 0
    %245 = vmatpush1.bf16.msra.mxu0 0
    %246 = vmatprep.subr.bf16.mxu0 0
    %247 = vmatpush1.bf16.msra.mxu0 %v231
    %248 = vmatprep.subr.bf16.mxu0 0
    %249 = vmatpush1.bf16.msra.mxu0 %v230
    %250 = vmatprep.subr.bf16.mxu0 0
    %251 = vmatpush2.bf16.msra.mxu0 0
    %252 = vmatprep.subr.bf16.mxu0 0
    %253 = vmatpush2.bf16.msra.mxu0 0
    %254 = vmatprep.subr.bf16.mxu0 0
    %255 = vmatpush2.bf16.msra.mxu0 0
    %256 = vmatprep.subr.bf16.mxu0 0
    %257 = vmatpush2.bf16.msra.mxu0 0
    %258 = vmatprep.subr.bf16.mxu0 0
    %259 = vmatpush2.bf16.msra.mxu0 0
    %260 = vmatprep.subr.bf16.mxu0 0
    %261 = vmatpush2.bf16.msra.mxu0 0
    %262 = vmatprep.subr.bf16.mxu0 0
    %263 = vmatpush2.bf16.msra.mxu0 0
    %264 = vmatprep.subr.bf16.mxu0 0
    %265 = vmatpush2.bf16.msra.mxu0 0
    %266 = vmatprep.mubr.bf16.mxu0 0
    %267 = vmatmul.mubr.bf16.gmra.mxu0 %v118
    %v268 = vpop.f32.mrf.mxu0
    %v269 = vadd.f32 0.0, %v268
    %v270 = vpop.f32.mrf.mxu0
    %v271 = vpop.f32.mrf.mxu0
    %v272 = vadd.f32 0.0, %v271
    %v273 = vpop.f32.mrf.mxu0
    %274 = vdwg.mxu0
    %277 = vrot.lane.b32.xlu0 %v155, 124
    %v278 = vpop.permute.xlu0 %277
    %279 = vrot.lane.b32.xlu0 %v158, 124
    %v280 = vpop.permute.xlu0 %279
    %283 = vrot.lane.b32.xlu0 %v155, 120
    %v284 = vpop.permute.xlu0 %283
    %285 = vrot.lane.b32.xlu0 %v158, 120
    %v286 = vpop.permute.xlu0 %285
    %289 = vrot.lane.b32.xlu0 %v155, 116
    %v290 = vpop.permute.xlu0 %289
    %291 = vrot.lane.b32.xlu0 %v158, 116
    %v292 = vpop.permute.xlu0 %291
    %295 = vrot.lane.b32.xlu0 %v155, 112
    %v296 = vpop.permute.xlu0 %295
    %297 = vrot.lane.b32.xlu0 %v158, 112
    %v298 = vpop.permute.xlu0 %297
    %301 = vrot.lane.b32.xlu0 %v155, 108
    %v302 = vpop.permute.xlu0 %301
    %303 = vrot.lane.b32.xlu0 %v158, 108
    %v304 = vpop.permute.xlu0 %303
    %307 = vrot.lane.b32.xlu0 %v155, 104
    %v308 = vpop.permute.xlu0 %307
    %309 = vrot.lane.b32.xlu0 %v158, 104
    %v310 = vpop.permute.xlu0 %309
    %313 = vrot.lane.b32.xlu0 %v155, 100
    %v314 = vpop.permute.xlu0 %313
    %315 = vrot.lane.b32.xlu0 %v158, 100
    %v316 = vpop.permute.xlu0 %315
    %v319 = vcombine.low %v155, %v284
    %v320 = vcombine.high %v155, %v284
    %v322 = vunpack.c.l.s4 1983009808
    %v323 = vunpack.c.0.s8 %v322
    %v324 = vlaneseq
    %v325 = vshrl.u32 %v324, 7
    %v326 = vsub.s32 %v323, %v325
    %v327 = vrot.slane %v319, %v326
    %v329 = vunpack.c.l.s4 1983009808
    %v330 = vunpack.c.0.s8 %v329
    %v331 = vlaneseq
    %v332 = vshrl.u32 %v331, 7
    %v333 = vsub.s32 %v330, %v332
    %v334 = vrot.slane %v320, %v333
    %v335 = vcombine.low %v278, %v290
    %v336 = vcombine.high %v278, %v290
    %v338 = vunpack.c.l.s4 1983009808
    %v339 = vunpack.c.0.s8 %v338
    %v340 = vlaneseq
    %v341 = vshrl.u32 %v340, 7
    %v342 = vsub.s32 %v339, %v341
    %v343 = vrot.slane %v335, %v342
    %v345 = vunpack.c.l.s4 1983009808
    %v346 = vunpack.c.0.s8 %v345
    %v347 = vlaneseq
    %v348 = vshrl.u32 %v347, 7
    %v349 = vsub.s32 %v346, %v348
    %v350 = vrot.slane %v336, %v349
    %v351 = vcombine.low %v296, %v308
    %v352 = vcombine.high %v296, %v308
    %v354 = vunpack.c.l.s4 1983009808
    %v355 = vunpack.c.0.s8 %v354
    %v356 = vlaneseq
    %v357 = vshrl.u32 %v356, 7
    %v358 = vsub.s32 %v355, %v357
    %v359 = vrot.slane %v351, %v358
    %v361 = vunpack.c.l.s4 1983009808
    %v362 = vunpack.c.0.s8 %v361
    %v363 = vlaneseq
    %v364 = vshrl.u32 %v363, 7
    %v365 = vsub.s32 %v362, %v364
    %v366 = vrot.slane %v352, %v365
    %v367 = vcombine.low %v302, %v314
    %v368 = vcombine.high %v302, %v314
    %v370 = vunpack.c.l.s4 1983009808
    %v371 = vunpack.c.0.s8 %v370
    %v372 = vlaneseq
    %v373 = vshrl.u32 %v372, 7
    %v374 = vsub.s32 %v371, %v373
    %v375 = vrot.slane %v367, %v374
    %v377 = vunpack.c.l.s4 1983009808
    %v378 = vunpack.c.0.s8 %v377
    %v379 = vlaneseq
    %v380 = vshrl.u32 %v379, 7
    %v381 = vsub.s32 %v378, %v380
    %v382 = vrot.slane %v368, %v381
    %v383 = vcombine.low %v327, %v343
    %v384 = vcombine.high %v327, %v343
    %v386 = vunpack.c.l.s4 1934713408
    %v387 = vunpack.c.0.s8 %v386
    %v388 = vlaneseq
    %v389 = vshrl.u32 %v388, 7
    %v390 = vsub.s32 %v387, %v389
    %v391 = vrot.slane %v383, %v390
    %v393 = vunpack.c.l.s4 1934713408
    %v394 = vunpack.c.0.s8 %v393
    %v395 = vlaneseq
    %v396 = vshrl.u32 %v395, 7
    %v397 = vsub.s32 %v394, %v396
    %v398 = vrot.slane %v384, %v397
    %v399 = vcombine.low %v334, %v350
    %v400 = vcombine.high %v334, %v350
    %v402 = vunpack.c.l.s4 1934713408
    %v403 = vunpack.c.0.s8 %v402
    %v404 = vlaneseq
    %v405 = vshrl.u32 %v404, 7
    %v406 = vsub.s32 %v403, %v405
    %v407 = vrot.slane %v399, %v406
    %v409 = vunpack.c.l.s4 1934713408
    %v410 = vunpack.c.0.s8 %v409
    %v411 = vlaneseq
    %v412 = vshrl.u32 %v411, 7
    %v413 = vsub.s32 %v410, %v412
    %v414 = vrot.slane %v400, %v413
    %v415 = vcombine.low %v359, %v375
    %v416 = vcombine.high %v359, %v375
    %v418 = vunpack.c.l.s4 1934713408
    %v419 = vunpack.c.0.s8 %v418
    %v420 = vlaneseq
    %v421 = vshrl.u32 %v420, 7
    %v422 = vsub.s32 %v419, %v421
    %v423 = vrot.slane %v415, %v422
    %v425 = vunpack.c.l.s4 1934713408
    %v426 = vunpack.c.0.s8 %v425
    %v427 = vlaneseq
    %v428 = vshrl.u32 %v427, 7
    %v429 = vsub.s32 %v426, %v428
    %v430 = vrot.slane %v416, %v429
    %v431 = vcombine.low %v366, %v382
    %v432 = vcombine.high %v366, %v382
    %v434 = vunpack.c.l.s4 1934713408
    %v435 = vunpack.c.0.s8 %v434
    %v436 = vlaneseq
    %v437 = vshrl.u32 %v436, 7
    %v438 = vsub.s32 %v435, %v437
    %v439 = vrot.slane %v431, %v438
    %v441 = vunpack.c.l.s4 1934713408
    %v442 = vunpack.c.0.s8 %v441
    %v443 = vlaneseq
    %v444 = vshrl.u32 %v443, 7
    %v445 = vsub.s32 %v442, %v444
    %v446 = vrot.slane %v432, %v445
    %v447 = vcombine.low %v391, %v423
    %v448 = vcombine.high %v391, %v423
    %v449 = vcombine.low %v398, %v430
    %v450 = vcombine.high %v398, %v430
    %v451 = vcombine.low %v407, %v439
    %v452 = vcombine.high %v407, %v439
    %v453 = vcombine.low %v414, %v446
    %v454 = vcombine.high %v414, %v446
    %v455 = vcombine.low %v158, %v286
    %v456 = vcombine.high %v158, %v286
    %v458 = vunpack.c.l.s4 1983009808
    %v459 = vunpack.c.0.s8 %v458
    %v460 = vlaneseq
    %v461 = vshrl.u32 %v460, 7
    %v462 = vsub.s32 %v459, %v461
    %v463 = vrot.slane %v455, %v462
    %v465 = vunpack.c.l.s4 1983009808
    %v466 = vunpack.c.0.s8 %v465
    %v467 = vlaneseq
    %v468 = vshrl.u32 %v467, 7
    %v469 = vsub.s32 %v466, %v468
    %v470 = vrot.slane %v456, %v469
    %v471 = vcombine.low %v280, %v292
    %v472 = vcombine.high %v280, %v292
    %v474 = vunpack.c.l.s4 1983009808
    %v475 = vunpack.c.0.s8 %v474
    %v476 = vlaneseq
    %v477 = vshrl.u32 %v476, 7
    %v478 = vsub.s32 %v475, %v477
    %v479 = vrot.slane %v471, %v478
    %v481 = vunpack.c.l.s4 1983009808
    %v482 = vunpack.c.0.s8 %v481
    %v483 = vlaneseq
    %v484 = vshrl.u32 %v483, 7
    %v485 = vsub.s32 %v482, %v484
    %v486 = vrot.slane %v472, %v485
    %v487 = vcombine.low %v298, %v310
    %v488 = vcombine.high %v298, %v310
    %v490 = vunpack.c.l.s4 1983009808
    %v491 = vunpack.c.0.s8 %v490
    %v492 = vlaneseq
    %v493 = vshrl.u32 %v492, 7
    %v494 = vsub.s32 %v491, %v493
    %v495 = vrot.slane %v487, %v494
    %v497 = vunpack.c.l.s4 1983009808
    %v498 = vunpack.c.0.s8 %v497
    %v499 = vlaneseq
    %v500 = vshrl.u32 %v499, 7
    %v501 = vsub.s32 %v498, %v500
    %v502 = vrot.slane %v488, %v501
    %v503 = vcombine.low %v304, %v316
    %v504 = vcombine.high %v304, %v316
    %v506 = vunpack.c.l.s4 1983009808
    %v507 = vunpack.c.0.s8 %v506
    %v508 = vlaneseq
    %v509 = vshrl.u32 %v508, 7
    %v510 = vsub.s32 %v507, %v509
    %v511 = vrot.slane %v503, %v510
    %v513 = vunpack.c.l.s4 1983009808
    %v514 = vunpack.c.0.s8 %v513
    %v515 = vlaneseq
    %v516 = vshrl.u32 %v515, 7
    %v517 = vsub.s32 %v514, %v516
    %v518 = vrot.slane %v504, %v517
    %v519 = vcombine.low %v463, %v479
    %v520 = vcombine.high %v463, %v479
    %v522 = vunpack.c.l.s4 1934713408
    %v523 = vunpack.c.0.s8 %v522
    %v524 = vlaneseq
    %v525 = vshrl.u32 %v524, 7
    %v526 = vsub.s32 %v523, %v525
    %v527 = vrot.slane %v519, %v526
    %v529 = vunpack.c.l.s4 1934713408
    %v530 = vunpack.c.0.s8 %v529
    %v531 = vlaneseq
    %v532 = vshrl.u32 %v531, 7
    %v533 = vsub.s32 %v530, %v532
    %v534 = vrot.slane %v520, %v533
    %v535 = vcombine.low %v470, %v486
    %v536 = vcombine.high %v470, %v486
    %v538 = vunpack.c.l.s4 1934713408
    %v539 = vunpack.c.0.s8 %v538
    %v540 = vlaneseq
    %v541 = vshrl.u32 %v540, 7
    %v542 = vsub.s32 %v539, %v541
    %v543 = vrot.slane %v535, %v542
    %v545 = vunpack.c.l.s4 1934713408
    %v546 = vunpack.c.0.s8 %v545
    %v547 = vlaneseq
    %v548 = vshrl.u32 %v547, 7
    %v549 = vsub.s32 %v546, %v548
    %v550 = vrot.slane %v536, %v549
    %v551 = vcombine.low %v495, %v511
    %v552 = vcombine.high %v495, %v511
    %v554 = vunpack.c.l.s4 1934713408
    %v555 = vunpack.c.0.s8 %v554
    %v556 = vlaneseq
    %v557 = vshrl.u32 %v556, 7
    %v558 = vsub.s32 %v555, %v557
    %v559 = vrot.slane %v551, %v558
    %v561 = vunpack.c.l.s4 1934713408
    %v562 = vunpack.c.0.s8 %v561
    %v563 = vlaneseq
    %v564 = vshrl.u32 %v563, 7
    %v565 = vsub.s32 %v562, %v564
    %v566 = vrot.slane %v552, %v565
    %v567 = vcombine.low %v502, %v518
    %v568 = vcombine.high %v502, %v518
    %v570 = vunpack.c.l.s4 1934713408
    %v571 = vunpack.c.0.s8 %v570
    %v572 = vlaneseq
    %v573 = vshrl.u32 %v572, 7
    %v574 = vsub.s32 %v571, %v573
    %v575 = vrot.slane %v567, %v574
    %v577 = vunpack.c.l.s4 1934713408
    %v578 = vunpack.c.0.s8 %v577
    %v579 = vlaneseq
    %v580 = vshrl.u32 %v579, 7
    %v581 = vsub.s32 %v578, %v580
    %v582 = vrot.slane %v568, %v581
    %v583 = vcombine.low %v527, %v559
    %v584 = vcombine.high %v527, %v559
    %v585 = vcombine.low %v534, %v566
    %v586 = vcombine.high %v534, %v566
    %v587 = vcombine.low %v543, %v575
    %v588 = vcombine.high %v543, %v575
    %v589 = vcombine.low %v550, %v582
    %v590 = vcombine.high %v550, %v582
    %v591 = vcombine.low %v447, %v449
    %v592 = vcombine.high %v447, %v449
    %v594 = vunpack.c.l.s4 1983009808
    %v595 = vunpack.c.0.s8 %v594
    %v596 = vlaneseq
    %v597 = vshrl.u32 %v596, 7
    %v598 = vsub.s32 %v595, %v597
    %v599 = vrot.slane %v591, %v598
    %v601 = vunpack.c.l.s4 1983009808
    %v602 = vunpack.c.0.s8 %v601
    %v603 = vlaneseq
    %v604 = vshrl.u32 %v603, 7
    %v605 = vsub.s32 %v602, %v604
    %v606 = vrot.slane %v592, %v605
    %v607 = vcombine.low %v448, %v450
    %v608 = vcombine.high %v448, %v450
    %v610 = vunpack.c.l.s4 1983009808
    %v611 = vunpack.c.0.s8 %v610
    %v612 = vlaneseq
    %v613 = vshrl.u32 %v612, 7
    %v614 = vsub.s32 %v611, %v613
    %v615 = vrot.slane %v607, %v614
    %v617 = vunpack.c.l.s4 1983009808
    %v618 = vunpack.c.0.s8 %v617
    %v619 = vlaneseq
    %v620 = vshrl.u32 %v619, 7
    %v621 = vsub.s32 %v618, %v620
    %v622 = vrot.slane %v608, %v621
    %v623 = vcombine.low %v451, %v453
    %v624 = vcombine.high %v451, %v453
    %v626 = vunpack.c.l.s4 1983009808
    %v627 = vunpack.c.0.s8 %v626
    %v628 = vlaneseq
    %v629 = vshrl.u32 %v628, 7
    %v630 = vsub.s32 %v627, %v629
    %v631 = vrot.slane %v623, %v630
    %v633 = vunpack.c.l.s4 1983009808
    %v634 = vunpack.c.0.s8 %v633
    %v635 = vlaneseq
    %v636 = vshrl.u32 %v635, 7
    %v637 = vsub.s32 %v634, %v636
    %v638 = vrot.slane %v624, %v637
    %v639 = vcombine.low %v452, %v454
    %v640 = vcombine.high %v452, %v454
    %v642 = vunpack.c.l.s4 1983009808
    %v643 = vunpack.c.0.s8 %v642
    %v644 = vlaneseq
    %v645 = vshrl.u32 %v644, 7
    %v646 = vsub.s32 %v643, %v645
    %v647 = vrot.slane %v639, %v646
    %v649 = vunpack.c.l.s4 1983009808
    %v650 = vunpack.c.0.s8 %v649
    %v651 = vlaneseq
    %v652 = vshrl.u32 %v651, 7
    %v653 = vsub.s32 %v650, %v652
    %v654 = vrot.slane %v640, %v653
    %v655 = vcombine.low %v599, %v615
    %v656 = vcombine.high %v599, %v615
    %v658 = vunpack.c.l.s4 1934713408
    %v659 = vunpack.c.0.s8 %v658
    %v660 = vlaneseq
    %v661 = vshrl.u32 %v660, 7
    %v662 = vsub.s32 %v659, %v661
    %v663 = vrot.slane %v655, %v662
    %v665 = vunpack.c.l.s4 1934713408
    %v666 = vunpack.c.0.s8 %v665
    %v667 = vlaneseq
    %v668 = vshrl.u32 %v667, 7
    %v669 = vsub.s32 %v666, %v668
    %v670 = vrot.slane %v656, %v669
    %v671 = vcombine.low %v606, %v622
    %v672 = vcombine.high %v606, %v622
    %v674 = vunpack.c.l.s4 1934713408
    %v675 = vunpack.c.0.s8 %v674
    %v676 = vlaneseq
    %v677 = vshrl.u32 %v676, 7
    %v678 = vsub.s32 %v675, %v677
    %v679 = vrot.slane %v671, %v678
    %v681 = vunpack.c.l.s4 1934713408
    %v682 = vunpack.c.0.s8 %v681
    %v683 = vlaneseq
    %v684 = vshrl.u32 %v683, 7
    %v685 = vsub.s32 %v682, %v684
    %v686 = vrot.slane %v672, %v685
    %v687 = vcombine.low %v631, %v647
    %v688 = vcombine.high %v631, %v647
    %v690 = vunpack.c.l.s4 1934713408
    %v691 = vunpack.c.0.s8 %v690
    %v692 = vlaneseq
    %v693 = vshrl.u32 %v692, 7
    %v694 = vsub.s32 %v691, %v693
    %v695 = vrot.slane %v687, %v694
    %v697 = vunpack.c.l.s4 1934713408
    %v698 = vunpack.c.0.s8 %v697
    %v699 = vlaneseq
    %v700 = vshrl.u32 %v699, 7
    %v701 = vsub.s32 %v698, %v700
    %v702 = vrot.slane %v688, %v701
    %v703 = vcombine.low %v638, %v654
    %v704 = vcombine.high %v638, %v654
    %v706 = vunpack.c.l.s4 1934713408
    %v707 = vunpack.c.0.s8 %v706
    %v708 = vlaneseq
    %v709 = vshrl.u32 %v708, 7
    %v710 = vsub.s32 %v707, %v709
    %v711 = vrot.slane %v703, %v710
    %v713 = vunpack.c.l.s4 1934713408
    %v714 = vunpack.c.0.s8 %v713
    %v715 = vlaneseq
    %v716 = vshrl.u32 %v715, 7
    %v717 = vsub.s32 %v714, %v716
    %v718 = vrot.slane %v704, %v717
    %v719 = vcombine.low %v663, %v695
    %v720 = vcombine.high %v663, %v695
    %v721 = vcombine.low %v670, %v702
    %v722 = vcombine.high %v670, %v702
    %v723 = vcombine.low %v679, %v711
    %v724 = vcombine.high %v679, %v711
    %v725 = vcombine.low %v686, %v718
    %v726 = vcombine.high %v686, %v718
    %v727 = vcombine.low %v583, %v585
    %v728 = vcombine.high %v583, %v585
    %v730 = vunpack.c.l.s4 1983009808
    %v731 = vunpack.c.0.s8 %v730
    %v732 = vlaneseq
    %v733 = vshrl.u32 %v732, 7
    %v734 = vsub.s32 %v731, %v733
    %v735 = vrot.slane %v727, %v734
    %v737 = vunpack.c.l.s4 1983009808
    %v738 = vunpack.c.0.s8 %v737
    %v739 = vlaneseq
    %v740 = vshrl.u32 %v739, 7
    %v741 = vsub.s32 %v738, %v740
    %v742 = vrot.slane %v728, %v741
    %v743 = vcombine.low %v584, %v586
    %v744 = vcombine.high %v584, %v586
    %v746 = vunpack.c.l.s4 1983009808
    %v747 = vunpack.c.0.s8 %v746
    %v748 = vlaneseq
    %v749 = vshrl.u32 %v748, 7
    %v750 = vsub.s32 %v747, %v749
    %v751 = vrot.slane %v743, %v750
    %v753 = vunpack.c.l.s4 1983009808
    %v754 = vunpack.c.0.s8 %v753
    %v755 = vlaneseq
    %v756 = vshrl.u32 %v755, 7
    %v757 = vsub.s32 %v754, %v756
    %v758 = vrot.slane %v744, %v757
    %v759 = vcombine.low %v587, %v589
    %v760 = vcombine.high %v587, %v589
    %v762 = vunpack.c.l.s4 1983009808
    %v763 = vunpack.c.0.s8 %v762
    %v764 = vlaneseq
    %v765 = vshrl.u32 %v764, 7
    %v766 = vsub.s32 %v763, %v765
    %v767 = vrot.slane %v759, %v766
    %v769 = vunpack.c.l.s4 1983009808
    %v770 = vunpack.c.0.s8 %v769
    %v771 = vlaneseq
    %v772 = vshrl.u32 %v771, 7
    %v773 = vsub.s32 %v770, %v772
    %v774 = vrot.slane %v760, %v773
    %v775 = vcombine.low %v588, %v590
    %v776 = vcombine.high %v588, %v590
    %v778 = vunpack.c.l.s4 1983009808
    %v779 = vunpack.c.0.s8 %v778
    %v780 = vlaneseq
    %v781 = vshrl.u32 %v780, 7
    %v782 = vsub.s32 %v779, %v781
    %v783 = vrot.slane %v775, %v782
    %v785 = vunpack.c.l.s4 1983009808
    %v786 = vunpack.c.0.s8 %v785
    %v787 = vlaneseq
    %v788 = vshrl.u32 %v787, 7
    %v789 = vsub.s32 %v786, %v788
    %v790 = vrot.slane %v776, %v789
    %v791 = vcombine.low %v735, %v751
    %v792 = vcombine.high %v735, %v751
    %v794 = vunpack.c.l.s4 1934713408
    %v795 = vunpack.c.0.s8 %v794
    %v796 = vlaneseq
    %v797 = vshrl.u32 %v796, 7
    %v798 = vsub.s32 %v795, %v797
    %v799 = vrot.slane %v791, %v798
    %v801 = vunpack.c.l.s4 1934713408
    %v802 = vunpack.c.0.s8 %v801
    %v803 = vlaneseq
    %v804 = vshrl.u32 %v803, 7
    %v805 = vsub.s32 %v802, %v804
    %v806 = vrot.slane %v792, %v805
    %v807 = vcombine.low %v742, %v758
    %v808 = vcombine.high %v742, %v758
    %v810 = vunpack.c.l.s4 1934713408
    %v811 = vunpack.c.0.s8 %v810
    %v812 = vlaneseq
    %v813 = vshrl.u32 %v812, 7
    %v814 = vsub.s32 %v811, %v813
    %v815 = vrot.slane %v807, %v814
    %v817 = vunpack.c.l.s4 1934713408
    %v818 = vunpack.c.0.s8 %v817
    %v819 = vlaneseq
    %v820 = vshrl.u32 %v819, 7
    %v821 = vsub.s32 %v818, %v820
    %v822 = vrot.slane %v808, %v821
    %v823 = vcombine.low %v767, %v783
    %v824 = vcombine.high %v767, %v783
    %v826 = vunpack.c.l.s4 1934713408
    %v827 = vunpack.c.0.s8 %v826
    %v828 = vlaneseq
    %v829 = vshrl.u32 %v828, 7
    %v830 = vsub.s32 %v827, %v829
    %v831 = vrot.slane %v823, %v830
    %v833 = vunpack.c.l.s4 1934713408
    %v834 = vunpack.c.0.s8 %v833
    %v835 = vlaneseq
    %v836 = vshrl.u32 %v835, 7
    %v837 = vsub.s32 %v834, %v836
    %v838 = vrot.slane %v824, %v837
    %v839 = vcombine.low %v774, %v790
    %v840 = vcombine.high %v774, %v790
    %v842 = vunpack.c.l.s4 1934713408
    %v843 = vunpack.c.0.s8 %v842
    %v844 = vlaneseq
    %v845 = vshrl.u32 %v844, 7
    %v846 = vsub.s32 %v843, %v845
    %v847 = vrot.slane %v839, %v846
    %v849 = vunpack.c.l.s4 1934713408
    %v850 = vunpack.c.0.s8 %v849
    %v851 = vlaneseq
    %v852 = vshrl.u32 %v851, 7
    %v853 = vsub.s32 %v850, %v852
    %v854 = vrot.slane %v840, %v853
    %v855 = vcombine.low %v799, %v831
    %v856 = vcombine.high %v799, %v831
    %v857 = vcombine.low %v806, %v838
    %v858 = vcombine.high %v806, %v838
    %v859 = vcombine.low %v815, %v847
    %v860 = vcombine.high %v815, %v847
    %v861 = vcombine.low %v822, %v854
    %v862 = vcombine.high %v822, %v854
    %v863 = vpack.c.bf16 %v719, %v719
    %v864 = vpack.c.bf16 %v720, %v720
    %v865 = vpack.c.bf16 %v721, %v721
    %v866 = vpack.c.bf16 %v722, %v722
    %v867 = vpack.c.bf16 %v723, %v723
    %v868 = vpack.c.bf16 %v724, %v724
    %v869 = vpack.c.bf16 %v725, %v725
    %v870 = vpack.c.bf16 %v726, %v726
    %v871 = vpack.c.bf16 %v855, %v855
    %v872 = vpack.c.bf16 %v856, %v856
    %v873 = vpack.c.bf16 %v857, %v857
    %v874 = vpack.c.bf16 %v858, %v858
    %v875 = vpack.c.bf16 %v859, %v859
    %v876 = vpack.c.bf16 %v860, %v860
    %v877 = vpack.c.bf16 %v861, %v861
    %v878 = vpack.c.bf16 %v862, %v862
    %881 = vrot.lane.b32.xlu0 %v212, 124
    %v882 = vpop.permute.xlu0 %881
    %883 = vrot.lane.b32.xlu0 %v215, 124
    %v884 = vpop.permute.xlu0 %883
    %887 = vrot.lane.b32.xlu0 %v212, 120
    %v888 = vpop.permute.xlu0 %887
    %889 = vrot.lane.b32.xlu0 %v215, 120
    %v890 = vpop.permute.xlu0 %889
    %893 = vrot.lane.b32.xlu0 %v212, 116
    %v894 = vpop.permute.xlu0 %893
    %895 = vrot.lane.b32.xlu0 %v215, 116
    %v896 = vpop.permute.xlu0 %895
    %899 = vrot.lane.b32.xlu0 %v212, 112
    %v900 = vpop.permute.xlu0 %899
    %901 = vrot.lane.b32.xlu0 %v215, 112
    %v902 = vpop.permute.xlu0 %901
    %905 = vrot.lane.b32.xlu0 %v212, 108
    %v906 = vpop.permute.xlu0 %905
    %907 = vrot.lane.b32.xlu0 %v215, 108
    %v908 = vpop.permute.xlu0 %907
    %911 = vrot.lane.b32.xlu0 %v212, 104
    %v912 = vpop.permute.xlu0 %911
    %913 = vrot.lane.b32.xlu0 %v215, 104
    %v914 = vpop.permute.xlu0 %913
    %917 = vrot.lane.b32.xlu0 %v212, 100
    %v918 = vpop.permute.xlu0 %917
    %919 = vrot.lane.b32.xlu0 %v215, 100
    %v920 = vpop.permute.xlu0 %919
    %v923 = vcombine.low %v212, %v888
    %v924 = vcombine.high %v212, %v888
    %v926 = vunpack.c.l.s4 1983009808
    %v927 = vunpack.c.0.s8 %v926
    %v928 = vlaneseq
    %v929 = vshrl.u32 %v928, 7
    %v930 = vsub.s32 %v927, %v929
    %v931 = vrot.slane %v923, %v930
    %v933 = vunpack.c.l.s4 1983009808
    %v934 = vunpack.c.0.s8 %v933
    %v935 = vlaneseq
    %v936 = vshrl.u32 %v935, 7
    %v937 = vsub.s32 %v934, %v936
    %v938 = vrot.slane %v924, %v937
    %v939 = vcombine.low %v882, %v894
    %v940 = vcombine.high %v882, %v894
    %v942 = vunpack.c.l.s4 1983009808
    %v943 = vunpack.c.0.s8 %v942
    %v944 = vlaneseq
    %v945 = vshrl.u32 %v944, 7
    %v946 = vsub.s32 %v943, %v945
    %v947 = vrot.slane %v939, %v946
    %v949 = vunpack.c.l.s4 1983009808
    %v950 = vunpack.c.0.s8 %v949
    %v951 = vlaneseq
    %v952 = vshrl.u32 %v951, 7
    %v953 = vsub.s32 %v950, %v952
    %v954 = vrot.slane %v940, %v953
    %v955 = vcombine.low %v900, %v912
    %v956 = vcombine.high %v900, %v912
    %v958 = vunpack.c.l.s4 1983009808
    %v959 = vunpack.c.0.s8 %v958
    %v960 = vlaneseq
    %v961 = vshrl.u32 %v960, 7
    %v962 = vsub.s32 %v959, %v961
    %v963 = vrot.slane %v955, %v962
    %v965 = vunpack.c.l.s4 1983009808
    %v966 = vunpack.c.0.s8 %v965
    %v967 = vlaneseq
    %v968 = vshrl.u32 %v967, 7
    %v969 = vsub.s32 %v966, %v968
    %v970 = vrot.slane %v956, %v969
    %v971 = vcombine.low %v906, %v918
    %v972 = vcombine.high %v906, %v918
    %v974 = vunpack.c.l.s4 1983009808
    %v975 = vunpack.c.0.s8 %v974
    %v976 = vlaneseq
    %v977 = vshrl.u32 %v976, 7
    %v978 = vsub.s32 %v975, %v977
    %v979 = vrot.slane %v971, %v978
    %v981 = vunpack.c.l.s4 1983009808
    %v982 = vunpack.c.0.s8 %v981
    %v983 = vlaneseq
    %v984 = vshrl.u32 %v983, 7
    %v985 = vsub.s32 %v982, %v984
    %v986 = vrot.slane %v972, %v985
    %v987 = vcombine.low %v931, %v947
    %v988 = vcombine.high %v931, %v947
    %v990 = vunpack.c.l.s4 1934713408
    %v991 = vunpack.c.0.s8 %v990
    %v992 = vlaneseq
    %v993 = vshrl.u32 %v992, 7
    %v994 = vsub.s32 %v991, %v993
    %v995 = vrot.slane %v987, %v994
    %v997 = vunpack.c.l.s4 1934713408
    %v998 = vunpack.c.0.s8 %v997
    %v999 = vlaneseq
    %v1000 = vshrl.u32 %v999, 7
    %v1001 = vsub.s32 %v998, %v1000
    %v1002 = vrot.slane %v988, %v1001
    %v1003 = vcombine.low %v938, %v954
    %v1004 = vcombine.high %v938, %v954
    %v1006 = vunpack.c.l.s4 1934713408
    %v1007 = vunpack.c.0.s8 %v1006
    %v1008 = vlaneseq
    %v1009 = vshrl.u32 %v1008, 7
    %v1010 = vsub.s32 %v1007, %v1009
    %v1011 = vrot.slane %v1003, %v1010
    %v1013 = vunpack.c.l.s4 1934713408
    %v1014 = vunpack.c.0.s8 %v1013
    %v1015 = vlaneseq
    %v1016 = vshrl.u32 %v1015, 7
    %v1017 = vsub.s32 %v1014, %v1016
    %v1018 = vrot.slane %v1004, %v1017
    %v1019 = vcombine.low %v963, %v979
    %v1020 = vcombine.high %v963, %v979
    %v1022 = vunpack.c.l.s4 1934713408
    %v1023 = vunpack.c.0.s8 %v1022
    %v1024 = vlaneseq
    %v1025 = vshrl.u32 %v1024, 7
    %v1026 = vsub.s32 %v1023, %v1025
    %v1027 = vrot.slane %v1019, %v1026
    %v1029 = vunpack.c.l.s4 1934713408
    %v1030 = vunpack.c.0.s8 %v1029
    %v1031 = vlaneseq
    %v1032 = vshrl.u32 %v1031, 7
    %v1033 = vsub.s32 %v1030, %v1032
    %v1034 = vrot.slane %v1020, %v1033
    %v1035 = vcombine.low %v970, %v986
    %v1036 = vcombine.high %v970, %v986
    %v1038 = vunpack.c.l.s4 1934713408
    %v1039 = vunpack.c.0.s8 %v1038
    %v1040 = vlaneseq
    %v1041 = vshrl.u32 %v1040, 7
    %v1042 = vsub.s32 %v1039, %v1041
    %v1043 = vrot.slane %v1035, %v1042
    %v1045 = vunpack.c.l.s4 1934713408
    %v1046 = vunpack.c.0.s8 %v1045
    %v1047 = vlaneseq
    %v1048 = vshrl.u32 %v1047, 7
    %v1049 = vsub.s32 %v1046, %v1048
    %v1050 = vrot.slane %v1036, %v1049
    %v1051 = vcombine.low %v995, %v1027
    %v1052 = vcombine.high %v995, %v1027
    %v1053 = vcombine.low %v1002, %v1034
    %v1054 = vcombine.high %v1002, %v1034
    %v1055 = vcombine.low %v1011, %v1043
    %v1056 = vcombine.high %v1011, %v1043
    %v1057 = vcombine.low %v1018, %v1050
    %v1058 = vcombine.high %v1018, %v1050
    %v1059 = vcombine.low %v215, %v890
    %v1060 = vcombine.high %v215, %v890
    %v1062 = vunpack.c.l.s4 1983009808
    %v1063 = vunpack.c.0.s8 %v1062
    %v1064 = vlaneseq
    %v1065 = vshrl.u32 %v1064, 7
    %v1066 = vsub.s32 %v1063, %v1065
    %v1067 = vrot.slane %v1059, %v1066
    %v1069 = vunpack.c.l.s4 1983009808
    %v1070 = vunpack.c.0.s8 %v1069
    %v1071 = vlaneseq
    %v1072 = vshrl.u32 %v1071, 7
    %v1073 = vsub.s32 %v1070, %v1072
    %v1074 = vrot.slane %v1060, %v1073
    %v1075 = vcombine.low %v884, %v896
    %v1076 = vcombine.high %v884, %v896
    %v1078 = vunpack.c.l.s4 1983009808
    %v1079 = vunpack.c.0.s8 %v1078
    %v1080 = vlaneseq
    %v1081 = vshrl.u32 %v1080, 7
    %v1082 = vsub.s32 %v1079, %v1081
    %v1083 = vrot.slane %v1075, %v1082
    %v1085 = vunpack.c.l.s4 1983009808
    %v1086 = vunpack.c.0.s8 %v1085
    %v1087 = vlaneseq
    %v1088 = vshrl.u32 %v1087, 7
    %v1089 = vsub.s32 %v1086, %v1088
    %v1090 = vrot.slane %v1076, %v1089
    %v1091 = vcombine.low %v902, %v914
    %v1092 = vcombine.high %v902, %v914
    %v1094 = vunpack.c.l.s4 1983009808
    %v1095 = vunpack.c.0.s8 %v1094
    %v1096 = vlaneseq
    %v1097 = vshrl.u32 %v1096, 7
    %v1098 = vsub.s32 %v1095, %v1097
    %v1099 = vrot.slane %v1091, %v1098
    %v1101 = vunpack.c.l.s4 1983009808
    %v1102 = vunpack.c.0.s8 %v1101
    %v1103 = vlaneseq
    %v1104 = vshrl.u32 %v1103, 7
    %v1105 = vsub.s32 %v1102, %v1104
    %v1106 = vrot.slane %v1092, %v1105
    %v1107 = vcombine.low %v908, %v920
    %v1108 = vcombine.high %v908, %v920
    %v1110 = vunpack.c.l.s4 1983009808
    %v1111 = vunpack.c.0.s8 %v1110
    %v1112 = vlaneseq
    %v1113 = vshrl.u32 %v1112, 7
    %v1114 = vsub.s32 %v1111, %v1113
    %v1115 = vrot.slane %v1107, %v1114
    %v1117 = vunpack.c.l.s4 1983009808
    %v1118 = vunpack.c.0.s8 %v1117
    %v1119 = vlaneseq
    %v1120 = vshrl.u32 %v1119, 7
    %v1121 = vsub.s32 %v1118, %v1120
    %v1122 = vrot.slane %v1108, %v1121
    %v1123 = vcombine.low %v1067, %v1083
    %v1124 = vcombine.high %v1067, %v1083
    %v1126 = vunpack.c.l.s4 1934713408
    %v1127 = vunpack.c.0.s8 %v1126
    %v1128 = vlaneseq
    %v1129 = vshrl.u32 %v1128, 7
    %v1130 = vsub.s32 %v1127, %v1129
    %v1131 = vrot.slane %v1123, %v1130
    %v1133 = vunpack.c.l.s4 1934713408
    %v1134 = vunpack.c.0.s8 %v1133
    %v1135 = vlaneseq
    %v1136 = vshrl.u32 %v1135, 7
    %v1137 = vsub.s32 %v1134, %v1136
    %v1138 = vrot.slane %v1124, %v1137
    %v1139 = vcombine.low %v1074, %v1090
    %v1140 = vcombine.high %v1074, %v1090
    %v1142 = vunpack.c.l.s4 1934713408
    %v1143 = vunpack.c.0.s8 %v1142
    %v1144 = vlaneseq
    %v1145 = vshrl.u32 %v1144, 7
    %v1146 = vsub.s32 %v1143, %v1145
    %v1147 = vrot.slane %v1139, %v1146
    %v1149 = vunpack.c.l.s4 1934713408
    %v1150 = vunpack.c.0.s8 %v1149
    %v1151 = vlaneseq
    %v1152 = vshrl.u32 %v1151, 7
    %v1153 = vsub.s32 %v1150, %v1152
    %v1154 = vrot.slane %v1140, %v1153
    %v1155 = vcombine.low %v1099, %v1115
    %v1156 = vcombine.high %v1099, %v1115
    %v1158 = vunpack.c.l.s4 1934713408
    %v1159 = vunpack.c.0.s8 %v1158
    %v1160 = vlaneseq
    %v1161 = vshrl.u32 %v1160, 7
    %v1162 = vsub.s32 %v1159, %v1161
    %v1163 = vrot.slane %v1155, %v1162
    %v1165 = vunpack.c.l.s4 1934713408
    %v1166 = vunpack.c.0.s8 %v1165
    %v1167 = vlaneseq
    %v1168 = vshrl.u32 %v1167, 7
    %v1169 = vsub.s32 %v1166, %v1168
    %v1170 = vrot.slane %v1156, %v1169
    %v1171 = vcombine.low %v1106, %v1122
    %v1172 = vcombine.high %v1106, %v1122
    %v1174 = vunpack.c.l.s4 1934713408
    %v1175 = vunpack.c.0.s8 %v1174
    %v1176 = vlaneseq
    %v1177 = vshrl.u32 %v1176, 7
    %v1178 = vsub.s32 %v1175, %v1177
    %v1179 = vrot.slane %v1171, %v1178
    %v1181 = vunpack.c.l.s4 1934713408
    %v1182 = vunpack.c.0.s8 %v1181
    %v1183 = vlaneseq
    %v1184 = vshrl.u32 %v1183, 7
    %v1185 = vsub.s32 %v1182, %v1184
    %v1186 = vrot.slane %v1172, %v1185
    %v1187 = vcombine.low %v1131, %v1163
    %v1188 = vcombine.high %v1131, %v1163
    %v1189 = vcombine.low %v1138, %v1170
    %v1190 = vcombine.high %v1138, %v1170
    %v1191 = vcombine.low %v1147, %v1179
    %v1192 = vcombine.high %v1147, %v1179
    %v1193 = vcombine.low %v1154, %v1186
    %v1194 = vcombine.high %v1154, %v1186
    %v1195 = vcombine.low %v1051, %v1053
    %v1196 = vcombine.high %v1051, %v1053
    %v1198 = vunpack.c.l.s4 1983009808
    %v1199 = vunpack.c.0.s8 %v1198
    %v1200 = vlaneseq
    %v1201 = vshrl.u32 %v1200, 7
    %v1202 = vsub.s32 %v1199, %v1201
    %v1203 = vrot.slane %v1195, %v1202
    %v1205 = vunpack.c.l.s4 1983009808
    %v1206 = vunpack.c.0.s8 %v1205
    %v1207 = vlaneseq
    %v1208 = vshrl.u32 %v1207, 7
    %v1209 = vsub.s32 %v1206, %v1208
    %v1210 = vrot.slane %v1196, %v1209
    %v1211 = vcombine.low %v1052, %v1054
    %v1212 = vcombine.high %v1052, %v1054
    %v1214 = vunpack.c.l.s4 1983009808
    %v1215 = vunpack.c.0.s8 %v1214
    %v1216 = vlaneseq
    %v1217 = vshrl.u32 %v1216, 7
    %v1218 = vsub.s32 %v1215, %v1217
    %v1219 = vrot.slane %v1211, %v1218
    %v1221 = vunpack.c.l.s4 1983009808
    %v1222 = vunpack.c.0.s8 %v1221
    %v1223 = vlaneseq
    %v1224 = vshrl.u32 %v1223, 7
    %v1225 = vsub.s32 %v1222, %v1224
    %v1226 = vrot.slane %v1212, %v1225
    %v1227 = vcombine.low %v1055, %v1057
    %v1228 = vcombine.high %v1055, %v1057
    %v1230 = vunpack.c.l.s4 1983009808
    %v1231 = vunpack.c.0.s8 %v1230
    %v1232 = vlaneseq
    %v1233 = vshrl.u32 %v1232, 7
    %v1234 = vsub.s32 %v1231, %v1233
    %v1235 = vrot.slane %v1227, %v1234
    %v1237 = vunpack.c.l.s4 1983009808
    %v1238 = vunpack.c.0.s8 %v1237
    %v1239 = vlaneseq
    %v1240 = vshrl.u32 %v1239, 7
    %v1241 = vsub.s32 %v1238, %v1240
    %v1242 = vrot.slane %v1228, %v1241
    %v1243 = vcombine.low %v1056, %v1058
    %v1244 = vcombine.high %v1056, %v1058
    %v1246 = vunpack.c.l.s4 1983009808
    %v1247 = vunpack.c.0.s8 %v1246
    %v1248 = vlaneseq
    %v1249 = vshrl.u32 %v1248, 7
    %v1250 = vsub.s32 %v1247, %v1249
    %v1251 = vrot.slane %v1243, %v1250
    %v1253 = vunpack.c.l.s4 1983009808
    %v1254 = vunpack.c.0.s8 %v1253
    %v1255 = vlaneseq
    %v1256 = vshrl.u32 %v1255, 7
    %v1257 = vsub.s32 %v1254, %v1256
    %v1258 = vrot.slane %v1244, %v1257
    %v1259 = vcombine.low %v1203, %v1219
    %v1260 = vcombine.high %v1203, %v1219
    %v1262 = vunpack.c.l.s4 1934713408
    %v1263 = vunpack.c.0.s8 %v1262
    %v1264 = vlaneseq
    %v1265 = vshrl.u32 %v1264, 7
    %v1266 = vsub.s32 %v1263, %v1265
    %v1267 = vrot.slane %v1259, %v1266
    %v1269 = vunpack.c.l.s4 1934713408
    %v1270 = vunpack.c.0.s8 %v1269
    %v1271 = vlaneseq
    %v1272 = vshrl.u32 %v1271, 7
    %v1273 = vsub.s32 %v1270, %v1272
    %v1274 = vrot.slane %v1260, %v1273
    %v1275 = vcombine.low %v1210, %v1226
    %v1276 = vcombine.high %v1210, %v1226
    %v1278 = vunpack.c.l.s4 1934713408
    %v1279 = vunpack.c.0.s8 %v1278
    %v1280 = vlaneseq
    %v1281 = vshrl.u32 %v1280, 7
    %v1282 = vsub.s32 %v1279, %v1281
    %v1283 = vrot.slane %v1275, %v1282
    %v1285 = vunpack.c.l.s4 1934713408
    %v1286 = vunpack.c.0.s8 %v1285
    %v1287 = vlaneseq
    %v1288 = vshrl.u32 %v1287, 7
    %v1289 = vsub.s32 %v1286, %v1288
    %v1290 = vrot.slane %v1276, %v1289
    %v1291 = vcombine.low %v1235, %v1251
    %v1292 = vcombine.high %v1235, %v1251
    %v1294 = vunpack.c.l.s4 1934713408
    %v1295 = vunpack.c.0.s8 %v1294
    %v1296 = vlaneseq
    %v1297 = vshrl.u32 %v1296, 7
    %v1298 = vsub.s32 %v1295, %v1297
    %v1299 = vrot.slane %v1291, %v1298
    %v1301 = vunpack.c.l.s4 1934713408
    %v1302 = vunpack.c.0.s8 %v1301
    %v1303 = vlaneseq
    %v1304 = vshrl.u32 %v1303, 7
    %v1305 = vsub.s32 %v1302, %v1304
    %v1306 = vrot.slane %v1292, %v1305
    %v1307 = vcombine.low %v1242, %v1258
    %v1308 = vcombine.high %v1242, %v1258
    %v1310 = vunpack.c.l.s4 1934713408
    %v1311 = vunpack.c.0.s8 %v1310
    %v1312 = vlaneseq
    %v1313 = vshrl.u32 %v1312, 7
    %v1314 = vsub.s32 %v1311, %v1313
    %v1315 = vrot.slane %v1307, %v1314
    %v1317 = vunpack.c.l.s4 1934713408
    %v1318 = vunpack.c.0.s8 %v1317
    %v1319 = vlaneseq
    %v1320 = vshrl.u32 %v1319, 7
    %v1321 = vsub.s32 %v1318, %v1320
    %v1322 = vrot.slane %v1308, %v1321
    %v1323 = vcombine.low %v1267, %v1299
    %v1324 = vcombine.high %v1267, %v1299
    %v1325 = vcombine.low %v1274, %v1306
    %v1326 = vcombine.high %v1274, %v1306
    %v1327 = vcombine.low %v1283, %v1315
    %v1328 = vcombine.high %v1283, %v1315
    %v1329 = vcombine.low %v1290, %v1322
    %v1330 = vcombine.high %v1290, %v1322
    %v1331 = vcombine.low %v1187, %v1189
    %v1332 = vcombine.high %v1187, %v1189
    %v1334 = vunpack.c.l.s4 1983009808
    %v1335 = vunpack.c.0.s8 %v1334
    %v1336 = vlaneseq
    %v1337 = vshrl.u32 %v1336, 7
    %v1338 = vsub.s32 %v1335, %v1337
    %v1339 = vrot.slane %v1331, %v1338
    %v1341 = vunpack.c.l.s4 1983009808
    %v1342 = vunpack.c.0.s8 %v1341
    %v1343 = vlaneseq
    %v1344 = vshrl.u32 %v1343, 7
    %v1345 = vsub.s32 %v1342, %v1344
    %v1346 = vrot.slane %v1332, %v1345
    %v1347 = vcombine.low %v1188, %v1190
    %v1348 = vcombine.high %v1188, %v1190
    %v1350 = vunpack.c.l.s4 1983009808
    %v1351 = vunpack.c.0.s8 %v1350
    %v1352 = vlaneseq
    %v1353 = vshrl.u32 %v1352, 7
    %v1354 = vsub.s32 %v1351, %v1353
    %v1355 = vrot.slane %v1347, %v1354
    %v1357 = vunpack.c.l.s4 1983009808
    %v1358 = vunpack.c.0.s8 %v1357
    %v1359 = vlaneseq
    %v1360 = vshrl.u32 %v1359, 7
    %v1361 = vsub.s32 %v1358, %v1360
    %v1362 = vrot.slane %v1348, %v1361
    %v1363 = vcombine.low %v1191, %v1193
    %v1364 = vcombine.high %v1191, %v1193
    %v1366 = vunpack.c.l.s4 1983009808
    %v1367 = vunpack.c.0.s8 %v1366
    %v1368 = vlaneseq
    %v1369 = vshrl.u32 %v1368, 7
    %v1370 = vsub.s32 %v1367, %v1369
    %v1371 = vrot.slane %v1363, %v1370
    %v1373 = vunpack.c.l.s4 1983009808
    %v1374 = vunpack.c.0.s8 %v1373
    %v1375 = vlaneseq
    %v1376 = vshrl.u32 %v1375, 7
    %v1377 = vsub.s32 %v1374, %v1376
    %v1378 = vrot.slane %v1364, %v1377
    %v1379 = vcombine.low %v1192, %v1194
    %v1380 = vcombine.high %v1192, %v1194
    %v1382 = vunpack.c.l.s4 1983009808
    %v1383 = vunpack.c.0.s8 %v1382
    %v1384 = vlaneseq
    %v1385 = vshrl.u32 %v1384, 7
    %v1386 = vsub.s32 %v1383, %v1385
    %v1387 = vrot.slane %v1379, %v1386
    %v1389 = vunpack.c.l.s4 1983009808
    %v1390 = vunpack.c.0.s8 %v1389
    %v1391 = vlaneseq
    %v1392 = vshrl.u32 %v1391, 7
    %v1393 = vsub.s32 %v1390, %v1392
    %v1394 = vrot.slane %v1380, %v1393
    %v1395 = vcombine.low %v1339, %v1355
    %v1396 = vcombine.high %v1339, %v1355
    %v1398 = vunpack.c.l.s4 1934713408
    %v1399 = vunpack.c.0.s8 %v1398
    %v1400 = vlaneseq
    %v1401 = vshrl.u32 %v1400, 7
    %v1402 = vsub.s32 %v1399, %v1401
    %v1403 = vrot.slane %v1395, %v1402
    %v1405 = vunpack.c.l.s4 1934713408
    %v1406 = vunpack.c.0.s8 %v1405
    %v1407 = vlaneseq
    %v1408 = vshrl.u32 %v1407, 7
    %v1409 = vsub.s32 %v1406, %v1408
    %v1410 = vrot.slane %v1396, %v1409
    %v1411 = vcombine.low %v1346, %v1362
    %v1412 = vcombine.high %v1346, %v1362
    %v1414 = vunpack.c.l.s4 1934713408
    %v1415 = vunpack.c.0.s8 %v1414
    %v1416 = vlaneseq
    %v1417 = vshrl.u32 %v1416, 7
    %v1418 = vsub.s32 %v1415, %v1417
    %v1419 = vrot.slane %v1411, %v1418
    %v1421 = vunpack.c.l.s4 1934713408
    %v1422 = vunpack.c.0.s8 %v1421
    %v1423 = vlaneseq
    %v1424 = vshrl.u32 %v1423, 7
    %v1425 = vsub.s32 %v1422, %v1424
    %v1426 = vrot.slane %v1412, %v1425
    %v1427 = vcombine.low %v1371, %v1387
    %v1428 = vcombine.high %v1371, %v1387
    %v1430 = vunpack.c.l.s4 1934713408
    %v1431 = vunpack.c.0.s8 %v1430
    %v1432 = vlaneseq
    %v1433 = vshrl.u32 %v1432, 7
    %v1434 = vsub.s32 %v1431, %v1433
    %v1435 = vrot.slane %v1427, %v1434
    %v1437 = vunpack.c.l.s4 1934713408
    %v1438 = vunpack.c.0.s8 %v1437
    %v1439 = vlaneseq
    %v1440 = vshrl.u32 %v1439, 7
    %v1441 = vsub.s32 %v1438, %v1440
    %v1442 = vrot.slane %v1428, %v1441
    %v1443 = vcombine.low %v1378, %v1394
    %v1444 = vcombine.high %v1378, %v1394
    %v1446 = vunpack.c.l.s4 1934713408
    %v1447 = vunpack.c.0.s8 %v1446
    %v1448 = vlaneseq
    %v1449 = vshrl.u32 %v1448, 7
    %v1450 = vsub.s32 %v1447, %v1449
    %v1451 = vrot.slane %v1443, %v1450
    %v1453 = vunpack.c.l.s4 1934713408
    %v1454 = vunpack.c.0.s8 %v1453
    %v1455 = vlaneseq
    %v1456 = vshrl.u32 %v1455, 7
    %v1457 = vsub.s32 %v1454, %v1456
    %v1458 = vrot.slane %v1444, %v1457
    %v1459 = vcombine.low %v1403, %v1435
    %v1460 = vcombine.high %v1403, %v1435
    %v1461 = vcombine.low %v1410, %v1442
    %v1462 = vcombine.high %v1410, %v1442
    %v1463 = vcombine.low %v1419, %v1451
    %v1464 = vcombine.high %v1419, %v1451
    %v1465 = vcombine.low %v1426, %v1458
    %v1466 = vcombine.high %v1426, %v1458
    %v1467 = vpack.c.bf16 %v1323, %v1323
    %v1468 = vpack.c.bf16 %v1324, %v1324
    %v1469 = vpack.c.bf16 %v1325, %v1325
    %v1470 = vpack.c.bf16 %v1326, %v1326
    %v1471 = vpack.c.bf16 %v1327, %v1327
    %v1472 = vpack.c.bf16 %v1328, %v1328
    %v1473 = vpack.c.bf16 %v1329, %v1329
    %v1474 = vpack.c.bf16 %v1330, %v1330
    %v1475 = vpack.c.bf16 %v1459, %v1459
    %v1476 = vpack.c.bf16 %v1460, %v1460
    %v1477 = vpack.c.bf16 %v1461, %v1461
    %v1478 = vpack.c.bf16 %v1462, %v1462
    %v1479 = vpack.c.bf16 %v1463, %v1463
    %v1480 = vpack.c.bf16 %v1464, %v1464
    %v1481 = vpack.c.bf16 %v1465, %v1465
    %v1482 = vpack.c.bf16 %v1466, %v1466
    %1485 = vrot.lane.b32.xlu0 %v269, 124
    %v1486 = vpop.permute.xlu0 %1485
    %1487 = vrot.lane.b32.xlu0 %v272, 124
    %v1488 = vpop.permute.xlu0 %1487
    %1491 = vrot.lane.b32.xlu0 %v269, 120
    %v1492 = vpop.permute.xlu0 %1491
    %1493 = vrot.lane.b32.xlu0 %v272, 120
    %v1494 = vpop.permute.xlu0 %1493
    %1497 = vrot.lane.b32.xlu0 %v269, 116
    %v1498 = vpop.permute.xlu0 %1497
    %1499 = vrot.lane.b32.xlu0 %v272, 116
    %v1500 = vpop.permute.xlu0 %1499
    %1503 = vrot.lane.b32.xlu0 %v269, 112
    %v1504 = vpop.permute.xlu0 %1503
    %1505 = vrot.lane.b32.xlu0 %v272, 112
    %v1506 = vpop.permute.xlu0 %1505
    %1509 = vrot.lane.b32.xlu0 %v269, 108
    %v1510 = vpop.permute.xlu0 %1509
    %1511 = vrot.lane.b32.xlu0 %v272, 108
    %v1512 = vpop.permute.xlu0 %1511
    %1515 = vrot.lane.b32.xlu0 %v269, 104
    %v1516 = vpop.permute.xlu0 %1515
    %1517 = vrot.lane.b32.xlu0 %v272, 104
    %v1518 = vpop.permute.xlu0 %1517
    %1521 = vrot.lane.b32.xlu0 %v269, 100
    %v1522 = vpop.permute.xlu0 %1521
    %1523 = vrot.lane.b32.xlu0 %v272, 100
    %v1524 = vpop.permute.xlu0 %1523
    %v1527 = vcombine.low %v269, %v1492
    %v1528 = vcombine.high %v269, %v1492
    %v1530 = vunpack.c.l.s4 1983009808
    %v1531 = vunpack.c.0.s8 %v1530
    %v1532 = vlaneseq
    %v1533 = vshrl.u32 %v1532, 7
    %v1534 = vsub.s32 %v1531, %v1533
    %v1535 = vrot.slane %v1527, %v1534
    %v1537 = vunpack.c.l.s4 1983009808
    %v1538 = vunpack.c.0.s8 %v1537
    %v1539 = vlaneseq
    %v1540 = vshrl.u32 %v1539, 7
    %v1541 = vsub.s32 %v1538, %v1540
    %v1542 = vrot.slane %v1528, %v1541
    %v1543 = vcombine.low %v1486, %v1498
    %v1544 = vcombine.high %v1486, %v1498
    %v1546 = vunpack.c.l.s4 1983009808
    %v1547 = vunpack.c.0.s8 %v1546
    %v1548 = vlaneseq
    %v1549 = vshrl.u32 %v1548, 7
    %v1550 = vsub.s32 %v1547, %v1549
    %v1551 = vrot.slane %v1543, %v1550
    %v1553 = vunpack.c.l.s4 1983009808
    %v1554 = vunpack.c.0.s8 %v1553
    %v1555 = vlaneseq
    %v1556 = vshrl.u32 %v1555, 7
    %v1557 = vsub.s32 %v1554, %v1556
    %v1558 = vrot.slane %v1544, %v1557
    %v1559 = vcombine.low %v1504, %v1516
    %v1560 = vcombine.high %v1504, %v1516
    %v1562 = vunpack.c.l.s4 1983009808
    %v1563 = vunpack.c.0.s8 %v1562
    %v1564 = vlaneseq
    %v1565 = vshrl.u32 %v1564, 7
    %v1566 = vsub.s32 %v1563, %v1565
    %v1567 = vrot.slane %v1559, %v1566
    %v1569 = vunpack.c.l.s4 1983009808
    %v1570 = vunpack.c.0.s8 %v1569
    %v1571 = vlaneseq
    %v1572 = vshrl.u32 %v1571, 7
    %v1573 = vsub.s32 %v1570, %v1572
    %v1574 = vrot.slane %v1560, %v1573
    %v1575 = vcombine.low %v1510, %v1522
    %v1576 = vcombine.high %v1510, %v1522
    %v1578 = vunpack.c.l.s4 1983009808
    %v1579 = vunpack.c.0.s8 %v1578
    %v1580 = vlaneseq
    %v1581 = vshrl.u32 %v1580, 7
    %v1582 = vsub.s32 %v1579, %v1581
    %v1583 = vrot.slane %v1575, %v1582
    %v1585 = vunpack.c.l.s4 1983009808
    %v1586 = vunpack.c.0.s8 %v1585
    %v1587 = vlaneseq
    %v1588 = vshrl.u32 %v1587, 7
    %v1589 = vsub.s32 %v1586, %v1588
    %v1590 = vrot.slane %v1576, %v1589
    %v1591 = vcombine.low %v1535, %v1551
    %v1592 = vcombine.high %v1535, %v1551
    %v1594 = vunpack.c.l.s4 1934713408
    %v1595 = vunpack.c.0.s8 %v1594
    %v1596 = vlaneseq
    %v1597 = vshrl.u32 %v1596, 7
    %v1598 = vsub.s32 %v1595, %v1597
    %v1599 = vrot.slane %v1591, %v1598
    %v1601 = vunpack.c.l.s4 1934713408
    %v1602 = vunpack.c.0.s8 %v1601
    %v1603 = vlaneseq
    %v1604 = vshrl.u32 %v1603, 7
    %v1605 = vsub.s32 %v1602, %v1604
    %v1606 = vrot.slane %v1592, %v1605
    %v1607 = vcombine.low %v1542, %v1558
    %v1608 = vcombine.high %v1542, %v1558
    %v1610 = vunpack.c.l.s4 1934713408
    %v1611 = vunpack.c.0.s8 %v1610
    %v1612 = vlaneseq
    %v1613 = vshrl.u32 %v1612, 7
    %v1614 = vsub.s32 %v1611, %v1613
    %v1615 = vrot.slane %v1607, %v1614
    %v1617 = vunpack.c.l.s4 1934713408
    %v1618 = vunpack.c.0.s8 %v1617
    %v1619 = vlaneseq
    %v1620 = vshrl.u32 %v1619, 7
    %v1621 = vsub.s32 %v1618, %v1620
    %v1622 = vrot.slane %v1608, %v1621
    %v1623 = vcombine.low %v1567, %v1583
    %v1624 = vcombine.high %v1567, %v1583
    %v1626 = vunpack.c.l.s4 1934713408
    %v1627 = vunpack.c.0.s8 %v1626
    %v1628 = vlaneseq
    %v1629 = vshrl.u32 %v1628, 7
    %v1630 = vsub.s32 %v1627, %v1629
    %v1631 = vrot.slane %v1623, %v1630
    %v1633 = vunpack.c.l.s4 1934713408
    %v1634 = vunpack.c.0.s8 %v1633
    %v1635 = vlaneseq
    %v1636 = vshrl.u32 %v1635, 7
    %v1637 = vsub.s32 %v1634, %v1636
    %v1638 = vrot.slane %v1624, %v1637
    %v1639 = vcombine.low %v1574, %v1590
    %v1640 = vcombine.high %v1574, %v1590
    %v1642 = vunpack.c.l.s4 1934713408
    %v1643 = vunpack.c.0.s8 %v1642
    %v1644 = vlaneseq
    %v1645 = vshrl.u32 %v1644, 7
    %v1646 = vsub.s32 %v1643, %v1645
    %v1647 = vrot.slane %v1639, %v1646
    %v1649 = vunpack.c.l.s4 1934713408
    %v1650 = vunpack.c.0.s8 %v1649
    %v1651 = vlaneseq
    %v1652 = vshrl.u32 %v1651, 7
    %v1653 = vsub.s32 %v1650, %v1652
    %v1654 = vrot.slane %v1640, %v1653
    %v1655 = vcombine.low %v1599, %v1631
    %v1656 = vcombine.high %v1599, %v1631
    %v1657 = vcombine.low %v1606, %v1638
    %v1658 = vcombine.high %v1606, %v1638
    %v1659 = vcombine.low %v1615, %v1647
    %v1660 = vcombine.high %v1615, %v1647
    %v1661 = vcombine.low %v1622, %v1654
    %v1662 = vcombine.high %v1622, %v1654
    %v1663 = vcombine.low %v272, %v1494
    %v1664 = vcombine.high %v272, %v1494
    %v1666 = vunpack.c.l.s4 1983009808
    %v1667 = vunpack.c.0.s8 %v1666
    %v1668 = vlaneseq
    %v1669 = vshrl.u32 %v1668, 7
    %v1670 = vsub.s32 %v1667, %v1669
    %v1671 = vrot.slane %v1663, %v1670
    %v1673 = vunpack.c.l.s4 1983009808
    %v1674 = vunpack.c.0.s8 %v1673
    %v1675 = vlaneseq
    %v1676 = vshrl.u32 %v1675, 7
    %v1677 = vsub.s32 %v1674, %v1676
    %v1678 = vrot.slane %v1664, %v1677
    %v1679 = vcombine.low %v1488, %v1500
    %v1680 = vcombine.high %v1488, %v1500
    %v1682 = vunpack.c.l.s4 1983009808
    %v1683 = vunpack.c.0.s8 %v1682
    %v1684 = vlaneseq
    %v1685 = vshrl.u32 %v1684, 7
    %v1686 = vsub.s32 %v1683, %v1685
    %v1687 = vrot.slane %v1679, %v1686
    %v1689 = vunpack.c.l.s4 1983009808
    %v1690 = vunpack.c.0.s8 %v1689
    %v1691 = vlaneseq
    %v1692 = vshrl.u32 %v1691, 7
    %v1693 = vsub.s32 %v1690, %v1692
    %v1694 = vrot.slane %v1680, %v1693
    %v1695 = vcombine.low %v1506, %v1518
    %v1696 = vcombine.high %v1506, %v1518
    %v1698 = vunpack.c.l.s4 1983009808
    %v1699 = vunpack.c.0.s8 %v1698
    %v1700 = vlaneseq
    %v1701 = vshrl.u32 %v1700, 7
    %v1702 = vsub.s32 %v1699, %v1701
    %v1703 = vrot.slane %v1695, %v1702
    %v1705 = vunpack.c.l.s4 1983009808
    %v1706 = vunpack.c.0.s8 %v1705
    %v1707 = vlaneseq
    %v1708 = vshrl.u32 %v1707, 7
    %v1709 = vsub.s32 %v1706, %v1708
    %v1710 = vrot.slane %v1696, %v1709
    %v1711 = vcombine.low %v1512, %v1524
    %v1712 = vcombine.high %v1512, %v1524
    %v1714 = vunpack.c.l.s4 1983009808
    %v1715 = vunpack.c.0.s8 %v1714
    %v1716 = vlaneseq
    %v1717 = vshrl.u32 %v1716, 7
    %v1718 = vsub.s32 %v1715, %v1717
    %v1719 = vrot.slane %v1711, %v1718
    %v1721 = vunpack.c.l.s4 1983009808
    %v1722 = vunpack.c.0.s8 %v1721
    %v1723 = vlaneseq
    %v1724 = vshrl.u32 %v1723, 7
    %v1725 = vsub.s32 %v1722, %v1724
    %v1726 = vrot.slane %v1712, %v1725
    %v1727 = vcombine.low %v1671, %v1687
    %v1728 = vcombine.high %v1671, %v1687
    %v1730 = vunpack.c.l.s4 1934713408
    %v1731 = vunpack.c.0.s8 %v1730
    %v1732 = vlaneseq
    %v1733 = vshrl.u32 %v1732, 7
    %v1734 = vsub.s32 %v1731, %v1733
    %v1735 = vrot.slane %v1727, %v1734
    %v1737 = vunpack.c.l.s4 1934713408
    %v1738 = vunpack.c.0.s8 %v1737
    %v1739 = vlaneseq
    %v1740 = vshrl.u32 %v1739, 7
    %v1741 = vsub.s32 %v1738, %v1740
    %v1742 = vrot.slane %v1728, %v1741
    %v1743 = vcombine.low %v1678, %v1694
    %v1744 = vcombine.high %v1678, %v1694
    %v1746 = vunpack.c.l.s4 1934713408
    %v1747 = vunpack.c.0.s8 %v1746
    %v1748 = vlaneseq
    %v1749 = vshrl.u32 %v1748, 7
    %v1750 = vsub.s32 %v1747, %v1749
    %v1751 = vrot.slane %v1743, %v1750
    %v1753 = vunpack.c.l.s4 1934713408
    %v1754 = vunpack.c.0.s8 %v1753
    %v1755 = vlaneseq
    %v1756 = vshrl.u32 %v1755, 7
    %v1757 = vsub.s32 %v1754, %v1756
    %v1758 = vrot.slane %v1744, %v1757
    %v1759 = vcombine.low %v1703, %v1719
    %v1760 = vcombine.high %v1703, %v1719
    %v1762 = vunpack.c.l.s4 1934713408
    %v1763 = vunpack.c.0.s8 %v1762
    %v1764 = vlaneseq
    %v1765 = vshrl.u32 %v1764, 7
    %v1766 = vsub.s32 %v1763, %v1765
    %v1767 = vrot.slane %v1759, %v1766
    %v1769 = vunpack.c.l.s4 1934713408
    %v1770 = vunpack.c.0.s8 %v1769
    %v1771 = vlaneseq
    %v1772 = vshrl.u32 %v1771, 7
    %v1773 = vsub.s32 %v1770, %v1772
    %v1774 = vrot.slane %v1760, %v1773
    %v1775 = vcombine.low %v1710, %v1726
    %v1776 = vcombine.high %v1710, %v1726
    %v1778 = vunpack.c.l.s4 1934713408
    %v1779 = vunpack.c.0.s8 %v1778
    %v1780 = vlaneseq
    %v1781 = vshrl.u32 %v1780, 7
    %v1782 = vsub.s32 %v1779, %v1781
    %v1783 = vrot.slane %v1775, %v1782
    %v1785 = vunpack.c.l.s4 1934713408
    %v1786 = vunpack.c.0.s8 %v1785
    %v1787 = vlaneseq
    %v1788 = vshrl.u32 %v1787, 7
    %v1789 = vsub.s32 %v1786, %v1788
    %v1790 = vrot.slane %v1776, %v1789
    %v1791 = vcombine.low %v1735, %v1767
    %v1792 = vcombine.high %v1735, %v1767
    %v1793 = vcombine.low %v1742, %v1774
    %v1794 = vcombine.high %v1742, %v1774
    %v1795 = vcombine.low %v1751, %v1783
    %v1796 = vcombine.high %v1751, %v1783
    %v1797 = vcombine.low %v1758, %v1790
    %v1798 = vcombine.high %v1758, %v1790
    %v1799 = vcombine.low %v1655, %v1657
    %v1800 = vcombine.high %v1655, %v1657
    %v1802 = vunpack.c.l.s4 1983009808
    %v1803 = vunpack.c.0.s8 %v1802
    %v1804 = vlaneseq
    %v1805 = vshrl.u32 %v1804, 7
    %v1806 = vsub.s32 %v1803, %v1805
    %v1807 = vrot.slane %v1799, %v1806
    %v1809 = vunpack.c.l.s4 1983009808
    %v1810 = vunpack.c.0.s8 %v1809
    %v1811 = vlaneseq
    %v1812 = vshrl.u32 %v1811, 7
    %v1813 = vsub.s32 %v1810, %v1812
    %v1814 = vrot.slane %v1800, %v1813
    %v1815 = vcombine.low %v1656, %v1658
    %v1816 = vcombine.high %v1656, %v1658
    %v1818 = vunpack.c.l.s4 1983009808
    %v1819 = vunpack.c.0.s8 %v1818
    %v1820 = vlaneseq
    %v1821 = vshrl.u32 %v1820, 7
    %v1822 = vsub.s32 %v1819, %v1821
    %v1823 = vrot.slane %v1815, %v1822
    %v1825 = vunpack.c.l.s4 1983009808
    %v1826 = vunpack.c.0.s8 %v1825
    %v1827 = vlaneseq
    %v1828 = vshrl.u32 %v1827, 7
    %v1829 = vsub.s32 %v1826, %v1828
    %v1830 = vrot.slane %v1816, %v1829
    %v1831 = vcombine.low %v1659, %v1661
    %v1832 = vcombine.high %v1659, %v1661
    %v1834 = vunpack.c.l.s4 1983009808
    %v1835 = vunpack.c.0.s8 %v1834
    %v1836 = vlaneseq
    %v1837 = vshrl.u32 %v1836, 7
    %v1838 = vsub.s32 %v1835, %v1837
    %v1839 = vrot.slane %v1831, %v1838
    %v1841 = vunpack.c.l.s4 1983009808
    %v1842 = vunpack.c.0.s8 %v1841
    %v1843 = vlaneseq
    %v1844 = vshrl.u32 %v1843, 7
    %v1845 = vsub.s32 %v1842, %v1844
    %v1846 = vrot.slane %v1832, %v1845
    %v1847 = vcombine.low %v1660, %v1662
    %v1848 = vcombine.high %v1660, %v1662
    %v1850 = vunpack.c.l.s4 1983009808
    %v1851 = vunpack.c.0.s8 %v1850
    %v1852 = vlaneseq
    %v1853 = vshrl.u32 %v1852, 7
    %v1854 = vsub.s32 %v1851, %v1853
    %v1855 = vrot.slane %v1847, %v1854
    %v1857 = vunpack.c.l.s4 1983009808
    %v1858 = vunpack.c.0.s8 %v1857
    %v1859 = vlaneseq
    %v1860 = vshrl.u32 %v1859, 7
    %v1861 = vsub.s32 %v1858, %v1860
    %v1862 = vrot.slane %v1848, %v1861
    %v1863 = vcombine.low %v1807, %v1823
    %v1864 = vcombine.high %v1807, %v1823
    %v1866 = vunpack.c.l.s4 1934713408
    %v1867 = vunpack.c.0.s8 %v1866
    %v1868 = vlaneseq
    %v1869 = vshrl.u32 %v1868, 7
    %v1870 = vsub.s32 %v1867, %v1869
    %v1871 = vrot.slane %v1863, %v1870
    %v1873 = vunpack.c.l.s4 1934713408
    %v1874 = vunpack.c.0.s8 %v1873
    %v1875 = vlaneseq
    %v1876 = vshrl.u32 %v1875, 7
    %v1877 = vsub.s32 %v1874, %v1876
    %v1878 = vrot.slane %v1864, %v1877
    %v1879 = vcombine.low %v1814, %v1830
    %v1880 = vcombine.high %v1814, %v1830
    %v1882 = vunpack.c.l.s4 1934713408
    %v1883 = vunpack.c.0.s8 %v1882
    %v1884 = vlaneseq
    %v1885 = vshrl.u32 %v1884, 7
    %v1886 = vsub.s32 %v1883, %v1885
    %v1887 = vrot.slane %v1879, %v1886
    %v1889 = vunpack.c.l.s4 1934713408
    %v1890 = vunpack.c.0.s8 %v1889
    %v1891 = vlaneseq
    %v1892 = vshrl.u32 %v1891, 7
    %v1893 = vsub.s32 %v1890, %v1892
    %v1894 = vrot.slane %v1880, %v1893
    %v1895 = vcombine.low %v1839, %v1855
    %v1896 = vcombine.high %v1839, %v1855
    %v1898 = vunpack.c.l.s4 1934713408
    %v1899 = vunpack.c.0.s8 %v1898
    %v1900 = vlaneseq
    %v1901 = vshrl.u32 %v1900, 7
    %v1902 = vsub.s32 %v1899, %v1901
    %v1903 = vrot.slane %v1895, %v1902
    %v1905 = vunpack.c.l.s4 1934713408
    %v1906 = vunpack.c.0.s8 %v1905
    %v1907 = vlaneseq
    %v1908 = vshrl.u32 %v1907, 7
    %v1909 = vsub.s32 %v1906, %v1908
    %v1910 = vrot.slane %v1896, %v1909
    %v1911 = vcombine.low %v1846, %v1862
    %v1912 = vcombine.high %v1846, %v1862
    %v1914 = vunpack.c.l.s4 1934713408
    %v1915 = vunpack.c.0.s8 %v1914
    %v1916 = vlaneseq
    %v1917 = vshrl.u32 %v1916, 7
    %v1918 = vsub.s32 %v1915, %v1917
    %v1919 = vrot.slane %v1911, %v1918
    %v1921 = vunpack.c.l.s4 1934713408
    %v1922 = vunpack.c.0.s8 %v1921
    %v1923 = vlaneseq
    %v1924 = vshrl.u32 %v1923, 7
    %v1925 = vsub.s32 %v1922, %v1924
    %v1926 = vrot.slane %v1912, %v1925
    %v1927 = vcombine.low %v1871, %v1903
    %v1928 = vcombine.high %v1871, %v1903
    %v1929 = vcombine.low %v1878, %v1910
    %v1930 = vcombine.high %v1878, %v1910
    %v1931 = vcombine.low %v1887, %v1919
    %v1932 = vcombine.high %v1887, %v1919
    %v1933 = vcombine.low %v1894, %v1926
    %v1934 = vcombine.high %v1894, %v1926
    %v1935 = vcombine.low %v1791, %v1793
    %v1936 = vcombine.high %v1791, %v1793
    %v1938 = vunpack.c.l.s4 1983009808
    %v1939 = vunpack.c.0.s8 %v1938
    %v1940 = vlaneseq
    %v1941 = vshrl.u32 %v1940, 7
    %v1942 = vsub.s32 %v1939, %v1941
    %v1943 = vrot.slane %v1935, %v1942
    %v1945 = vunpack.c.l.s4 1983009808
    %v1946 = vunpack.c.0.s8 %v1945
    %v1947 = vlaneseq
    %v1948 = vshrl.u32 %v1947, 7
    %v1949 = vsub.s32 %v1946, %v1948
    %v1950 = vrot.slane %v1936, %v1949
    %v1951 = vcombine.low %v1792, %v1794
    %v1952 = vcombine.high %v1792, %v1794
    %v1954 = vunpack.c.l.s4 1983009808
    %v1955 = vunpack.c.0.s8 %v1954
    %v1956 = vlaneseq
    %v1957 = vshrl.u32 %v1956, 7
    %v1958 = vsub.s32 %v1955, %v1957
    %v1959 = vrot.slane %v1951, %v1958
    %v1961 = vunpack.c.l.s4 1983009808
    %v1962 = vunpack.c.0.s8 %v1961
    %v1963 = vlaneseq
    %v1964 = vshrl.u32 %v1963, 7
    %v1965 = vsub.s32 %v1962, %v1964
    %v1966 = vrot.slane %v1952, %v1965
    %v1967 = vcombine.low %v1795, %v1797
    %v1968 = vcombine.high %v1795, %v1797
    %v1970 = vunpack.c.l.s4 1983009808
    %v1971 = vunpack.c.0.s8 %v1970
    %v1972 = vlaneseq
    %v1973 = vshrl.u32 %v1972, 7
    %v1974 = vsub.s32 %v1971, %v1973
    %v1975 = vrot.slane %v1967, %v1974
    %v1977 = vunpack.c.l.s4 1983009808
    %v1978 = vunpack.c.0.s8 %v1977
    %v1979 = vlaneseq
    %v1980 = vshrl.u32 %v1979, 7
    %v1981 = vsub.s32 %v1978, %v1980
    %v1982 = vrot.slane %v1968, %v1981
    %v1983 = vcombine.low %v1796, %v1798
    %v1984 = vcombine.high %v1796, %v1798
    %v1986 = vunpack.c.l.s4 1983009808
    %v1987 = vunpack.c.0.s8 %v1986
    %v1988 = vlaneseq
    %v1989 = vshrl.u32 %v1988, 7
    %v1990 = vsub.s32 %v1987, %v1989
    %v1991 = vrot.slane %v1983, %v1990
    %v1993 = vunpack.c.l.s4 1983009808
    %v1994 = vunpack.c.0.s8 %v1993
    %v1995 = vlaneseq
    %v1996 = vshrl.u32 %v1995, 7
    %v1997 = vsub.s32 %v1994, %v1996
    %v1998 = vrot.slane %v1984, %v1997
    %v1999 = vcombine.low %v1943, %v1959
    %v2000 = vcombine.high %v1943, %v1959
    %v2002 = vunpack.c.l.s4 1934713408
    %v2003 = vunpack.c.0.s8 %v2002
    %v2004 = vlaneseq
    %v2005 = vshrl.u32 %v2004, 7
    %v2006 = vsub.s32 %v2003, %v2005
    %v2007 = vrot.slane %v1999, %v2006
    %v2009 = vunpack.c.l.s4 1934713408
    %v2010 = vunpack.c.0.s8 %v2009
    %v2011 = vlaneseq
    %v2012 = vshrl.u32 %v2011, 7
    %v2013 = vsub.s32 %v2010, %v2012
    %v2014 = vrot.slane %v2000, %v2013
    %v2015 = vcombine.low %v1950, %v1966
    %v2016 = vcombine.high %v1950, %v1966
    %v2018 = vunpack.c.l.s4 1934713408
    %v2019 = vunpack.c.0.s8 %v2018
    %v2020 = vlaneseq
    %v2021 = vshrl.u32 %v2020, 7
    %v2022 = vsub.s32 %v2019, %v2021
    %v2023 = vrot.slane %v2015, %v2022
    %v2025 = vunpack.c.l.s4 1934713408
    %v2026 = vunpack.c.0.s8 %v2025
    %v2027 = vlaneseq
    %v2028 = vshrl.u32 %v2027, 7
    %v2029 = vsub.s32 %v2026, %v2028
    %v2030 = vrot.slane %v2016, %v2029
    %v2031 = vcombine.low %v1975, %v1991
    %v2032 = vcombine.high %v1975, %v1991
    %v2034 = vunpack.c.l.s4 1934713408
    %v2035 = vunpack.c.0.s8 %v2034
    %v2036 = vlaneseq
    %v2037 = vshrl.u32 %v2036, 7
    %v2038 = vsub.s32 %v2035, %v2037
    %v2039 = vrot.slane %v2031, %v2038
    %v2041 = vunpack.c.l.s4 1934713408
    %v2042 = vunpack.c.0.s8 %v2041
    %v2043 = vlaneseq
    %v2044 = vshrl.u32 %v2043, 7
    %v2045 = vsub.s32 %v2042, %v2044
    %v2046 = vrot.slane %v2032, %v2045
    %v2047 = vcombine.low %v1982, %v1998
    %v2048 = vcombine.high %v1982, %v1998
    %v2050 = vunpack.c.l.s4 1934713408
    %v2051 = vunpack.c.0.s8 %v2050
    %v2052 = vlaneseq
    %v2053 = vshrl.u32 %v2052, 7
    %v2054 = vsub.s32 %v2051, %v2053
    %v2055 = vrot.slane %v2047, %v2054
    %v2057 = vunpack.c.l.s4 1934713408
    %v2058 = vunpack.c.0.s8 %v2057
    %v2059 = vlaneseq
    %v2060 = vshrl.u32 %v2059, 7
    %v2061 = vsub.s32 %v2058, %v2060
    %v2062 = vrot.slane %v2048, %v2061
    %v2063 = vcombine.low %v2007, %v2039
    %v2064 = vcombine.high %v2007, %v2039
    %v2065 = vcombine.low %v2014, %v2046
    %v2066 = vcombine.high %v2014, %v2046
    %v2067 = vcombine.low %v2023, %v2055
    %v2068 = vcombine.high %v2023, %v2055
    %v2069 = vcombine.low %v2030, %v2062
    %v2070 = vcombine.high %v2030, %v2062
    %v2071 = vpack.c.bf16 %v1927, %v1927
    %v2072 = vpack.c.bf16 %v1928, %v1928
    %v2073 = vpack.c.bf16 %v1929, %v1929
    %v2074 = vpack.c.bf16 %v1930, %v1930
    %v2075 = vpack.c.bf16 %v1931, %v1931
    %v2076 = vpack.c.bf16 %v1932, %v1932
    %v2077 = vpack.c.bf16 %v1933, %v1933
    %v2078 = vpack.c.bf16 %v1934, %v1934
    %v2079 = vpack.c.bf16 %v2063, %v2063
    %v2080 = vpack.c.bf16 %v2064, %v2064
    %v2081 = vpack.c.bf16 %v2065, %v2065
    %v2082 = vpack.c.bf16 %v2066, %v2066
    %v2083 = vpack.c.bf16 %v2067, %v2067
    %v2084 = vpack.c.bf16 %v2068, %v2068
    %v2085 = vpack.c.bf16 %v2069, %v2069
    %v2086 = vpack.c.bf16 %v2070, %v2070
    %vm2087 = vcmask 31744
    %v2089 = vsel %vm2087, %v863, 0
    %v2092 = vsel %vm2087, %v1467, 0
    %2094 = vmatprep.subr.bf16.mxu0 0
    %2095 = vmatpush1.bf16.xpose.msra.mxu0 0
    %2096 = vmatprep.subr.bf16.mxu0 0
    %2097 = vmatpush1.bf16.xpose.msra.mxu0 0
    %2098 = vmatprep.subr.bf16.mxu0 0
    %2099 = vmatpush1.bf16.xpose.msra.mxu0 0
    %2100 = vmatprep.subr.bf16.mxu0 0
    %2101 = vmatpush1.bf16.xpose.msra.mxu0 0
    %2102 = vmatprep.subr.bf16.mxu0 0
    %2103 = vmatpush1.bf16.xpose.msra.mxu0 0
    %2104 = vmatprep.subr.bf16.mxu0 0
    %2105 = vmatpush1.bf16.xpose.msra.mxu0 0
    %2106 = vmatprep.subr.bf16.mxu0 0
    %2107 = vmatpush1.bf16.xpose.msra.mxu0 0
    %2108 = vmatprep.subr.bf16.mxu0 0
    %2109 = vmatpush1.bf16.xpose.msra.mxu0 %v2092
    %2110 = vmatprep.subr.bf16.mxu0 0
    %2111 = vmatpush2.bf16.xpose.msra.mxu0 0
    %2112 = vmatprep.subr.bf16.mxu0 0
    %2113 = vmatpush2.bf16.xpose.msra.mxu0 0
    %2114 = vmatprep.subr.bf16.mxu0 0
    %2115 = vmatpush2.bf16.xpose.msra.mxu0 0
    %2116 = vmatprep.subr.bf16.mxu0 0
    %2117 = vmatpush2.bf16.xpose.msra.mxu0 0
    %2118 = vmatprep.subr.bf16.mxu0 0
    %2119 = vmatpush2.bf16.xpose.msra.mxu0 0
    %2120 = vmatprep.subr.bf16.mxu0 0
    %2121 = vmatpush2.bf16.xpose.msra.mxu0 0
    %2122 = vmatprep.subr.bf16.mxu0 0
    %2123 = vmatpush2.bf16.xpose.msra.mxu0 0
    %2124 = vmatprep.subr.bf16.mxu0 0
    %2125 = vmatpush2.bf16.xpose.msra.mxu0 0
    %2126 = vmatprep.mubr.bf16.mxu0 0
    %2127 = vmatmul.mubr.bf16.gmra.mxu0 %v2089
    %v2128 = vpop.f32.mrf.mxu0
    %v2129 = vadd.f32 0.0, %v2128
    %v2130 = vpop.f32.mrf.mxu0
    %v2131 = vpop.f32.mrf.mxu0
    %v2132 = vpop.f32.mrf.mxu0
    %2133 = vdwg.mxu0
    %v2135 = vsel %vm2087, %v864, 0
    %v2138 = vsel %vm2087, %v1468, 0
    %2140 = vmatprep.subr.bf16.mxu0 0
    %2141 = vmatpush1.bf16.xpose.msra.mxu0 0
    %2142 = vmatprep.subr.bf16.mxu0 0
    %2143 = vmatpush1.bf16.xpose.msra.mxu0 0
    %2144 = vmatprep.subr.bf16.mxu0 0
    %2145 = vmatpush1.bf16.xpose.msra.mxu0 0
    %2146 = vmatprep.subr.bf16.mxu0 0
    %2147 = vmatpush1.bf16.xpose.msra.mxu0 0
    %2148 = vmatprep.subr.bf16.mxu0 0
    %2149 = vmatpush1.bf16.xpose.msra.mxu0 0
    %2150 = vmatprep.subr.bf16.mxu0 0
    %2151 = vmatpush1.bf16.xpose.msra.mxu0 0
    %2152 = vmatprep.subr.bf16.mxu0 0
    %2153 = vmatpush1.bf16.xpose.msra.mxu0 0
    %2154 = vmatprep.subr.bf16.mxu0 0
    %2155 = vmatpush1.bf16.xpose.msra.mxu0 %v2138
    %2156 = vmatprep.subr.bf16.mxu0 0
    %2157 = vmatpush2.bf16.xpose.msra.mxu0 0
    %2158 = vmatprep.subr.bf16.mxu0 0
    %2159 = vmatpush2.bf16.xpose.msra.mxu0 0
    %2160 = vmatprep.subr.bf16.mxu0 0
    %2161 = vmatpush2.bf16.xpose.msra.mxu0 0
    %2162 = vmatprep.subr.bf16.mxu0 0
    %2163 = vmatpush2.bf16.xpose.msra.mxu0 0
    %2164 = vmatprep.subr.bf16.mxu0 0
    %2165 = vmatpush2.bf16.xpose.msra.mxu0 0
    %2166 = vmatprep.subr.bf16.mxu0 0
    %2167 = vmatpush2.bf16.xpose.msra.mxu0 0
    %2168 = vmatprep.subr.bf16.mxu0 0
    %2169 = vmatpush2.bf16.xpose.msra.mxu0 0
    %2170 = vmatprep.subr.bf16.mxu0 0
    %2171 = vmatpush2.bf16.xpose.msra.mxu0 0
    %2172 = vmatprep.mubr.bf16.mxu0 0
    %2173 = vmatmul.mubr.bf16.gmra.mxu0 %v2135
    %v2174 = vpop.f32.mrf.mxu0
    %v2175 = vadd.f32 0.0, %v2174
    %v2176 = vpop.f32.mrf.mxu0
    %v2177 = vpop.f32.mrf.mxu0
    %v2178 = vpop.f32.mrf.mxu0
    %2179 = vdwg.mxu0
    %v2181 = vsel %vm2087, %v865, 0
    %v2184 = vsel %vm2087, %v1469, 0
    %2186 = vmatprep.subr.bf16.mxu0 0
    %2187 = vmatpush1.bf16.xpose.msra.mxu0 0
    %2188 = vmatprep.subr.bf16.mxu0 0
    %2189 = vmatpush1.bf16.xpose.msra.mxu0 0
    %2190 = vmatprep.subr.bf16.mxu0 0
    %2191 = vmatpush1.bf16.xpose.msra.mxu0 0
    %2192 = vmatprep.subr.bf16.mxu0 0
    %2193 = vmatpush1.bf16.xpose.msra.mxu0 0
    %2194 = vmatprep.subr.bf16.mxu0 0
    %2195 = vmatpush1.bf16.xpose.msra.mxu0 0
    %2196 = vmatprep.subr.bf16.mxu0 0
    %2197 = vmatpush1.bf16.xpose.msra.mxu0 0
    %2198 = vmatprep.subr.bf16.mxu0 0
    %2199 = vmatpush1.bf16.xpose.msra.mxu0 0
    %2200 = vmatprep.subr.bf16.mxu0 0
    %2201 = vmatpush1.bf16.xpose.msra.mxu0 %v2184
    %2202 = vmatprep.subr.bf16.mxu0 0
    %2203 = vmatpush2.bf16.xpose.msra.mxu0 0
    %2204 = vmatprep.subr.bf16.mxu0 0
    %2205 = vmatpush2.bf16.xpose.msra.mxu0 0
    %2206 = vmatprep.subr.bf16.mxu0 0
    %2207 = vmatpush2.bf16.xpose.msra.mxu0 0
    %2208 = vmatprep.subr.bf16.mxu0 0
    %2209 = vmatpush2.bf16.xpose.msra.mxu0 0
    %2210 = vmatprep.subr.bf16.mxu0 0
    %2211 = vmatpush2.bf16.xpose.msra.mxu0 0
    %2212 = vmatprep.subr.bf16.mxu0 0
    %2213 = vmatpush2.bf16.xpose.msra.mxu0 0
    %2214 = vmatprep.subr.bf16.mxu0 0
    %2215 = vmatpush2.bf16.xpose.msra.mxu0 0
    %2216 = vmatprep.subr.bf16.mxu0 0
    %2217 = vmatpush2.bf16.xpose.msra.mxu0 0
    %2218 = vmatprep.mubr.bf16.mxu0 0
    %2219 = vmatmul.mubr.bf16.gmra.mxu0 %v2181
    %v2220 = vpop.f32.mrf.mxu0
    %v2221 = vadd.f32 0.0, %v2220
    %v2222 = vpop.f32.mrf.mxu0
    %v2223 = vpop.f32.mrf.mxu0
    %v2224 = vpop.f32.mrf.mxu0
    %2225 = vdwg.mxu0
    %v2227 = vsel %vm2087, %v866, 0
    %v2230 = vsel %vm2087, %v1470, 0
    %2232 = vmatprep.subr.bf16.mxu0 0
    %2233 = vmatpush1.bf16.xpose.msra.mxu0 0
    %2234 = vmatprep.subr.bf16.mxu0 0
    %2235 = vmatpush1.bf16.xpose.msra.mxu0 0
    %2236 = vmatprep.subr.bf16.mxu0 0
    %2237 = vmatpush1.bf16.xpose.msra.mxu0 0
    %2238 = vmatprep.subr.bf16.mxu0 0
    %2239 = vmatpush1.bf16.xpose.msra.mxu0 0
    %2240 = vmatprep.subr.bf16.mxu0 0
    %2241 = vmatpush1.bf16.xpose.msra.mxu0 0
    %2242 = vmatprep.subr.bf16.mxu0 0
    %2243 = vmatpush1.bf16.xpose.msra.mxu0 0
    %2244 = vmatprep.subr.bf16.mxu0 0
    %2245 = vmatpush1.bf16.xpose.msra.mxu0 0
    %2246 = vmatprep.subr.bf16.mxu0 0
    %2247 = vmatpush1.bf16.xpose.msra.mxu0 %v2230
    %2248 = vmatprep.subr.bf16.mxu0 0
    %2249 = vmatpush2.bf16.xpose.msra.mxu0 0
    %2250 = vmatprep.subr.bf16.mxu0 0
    %2251 = vmatpush2.bf16.xpose.msra.mxu0 0
    %2252 = vmatprep.subr.bf16.mxu0 0
    %2253 = vmatpush2.bf16.xpose.msra.mxu0 0
    %2254 = vmatprep.subr.bf16.mxu0 0
    %2255 = vmatpush2.bf16.xpose.msra.mxu0 0
    %2256 = vmatprep.subr.bf16.mxu0 0
    %2257 = vmatpush2.bf16.xpose.msra.mxu0 0
    %2258 = vmatprep.subr.bf16.mxu0 0
    %2259 = vmatpush2.bf16.xpose.msra.mxu0 0
    %2260 = vmatprep.subr.bf16.mxu0 0
    %2261 = vmatpush2.bf16.xpose.msra.mxu0 0
    %2262 = vmatprep.subr.bf16.mxu0 0
    %2263 = vmatpush2.bf16.xpose.msra.mxu0 0
    %2264 = vmatprep.mubr.bf16.mxu0 0
    %2265 = vmatmul.mubr.bf16.gmra.mxu0 %v2227
    %v2266 = vpop.f32.mrf.mxu0
    %v2267 = vadd.f32 0.0, %v2266
    %v2268 = vpop.f32.mrf.mxu0
    %v2269 = vpop.f32.mrf.mxu0
    %v2270 = vpop.f32.mrf.mxu0
    %2271 = vdwg.mxu0
    %v2273 = vsel %vm2087, %v867, 0
    %v2276 = vsel %vm2087, %v1471, 0
    %2278 = vmatprep.subr.bf16.mxu0 0
    %2279 = vmatpush1.bf16.xpose.msra.mxu0 0
    %2280 = vmatprep.subr.bf16.mxu0 0
    %2281 = vmatpush1.bf16.xpose.msra.mxu0 0
    %2282 = vmatprep.subr.bf16.mxu0 0
    %2283 = vmatpush1.bf16.xpose.msra.mxu0 0
    %2284 = vmatprep.subr.bf16.mxu0 0
    %2285 = vmatpush1.bf16.xpose.msra.mxu0 0
    %2286 = vmatprep.subr.bf16.mxu0 0
    %2287 = vmatpush1.bf16.xpose.msra.mxu0 0
    %2288 = vmatprep.subr.bf16.mxu0 0
    %2289 = vmatpush1.bf16.xpose.msra.mxu0 0
    %2290 = vmatprep.subr.bf16.mxu0 0
    %2291 = vmatpush1.bf16.xpose.msra.mxu0 0
    %2292 = vmatprep.subr.bf16.mxu0 0
    %2293 = vmatpush1.bf16.xpose.msra.mxu0 %v2276
    %2294 = vmatprep.subr.bf16.mxu0 0
    %2295 = vmatpush2.bf16.xpose.msra.mxu0 0
    %2296 = vmatprep.subr.bf16.mxu0 0
    %2297 = vmatpush2.bf16.xpose.msra.mxu0 0
    %2298 = vmatprep.subr.bf16.mxu0 0
    %2299 = vmatpush2.bf16.xpose.msra.mxu0 0
    %2300 = vmatprep.subr.bf16.mxu0 0
    %2301 = vmatpush2.bf16.xpose.msra.mxu0 0
    %2302 = vmatprep.subr.bf16.mxu0 0
    %2303 = vmatpush2.bf16.xpose.msra.mxu0 0
    %2304 = vmatprep.subr.bf16.mxu0 0
    %2305 = vmatpush2.bf16.xpose.msra.mxu0 0
    %2306 = vmatprep.subr.bf16.mxu0 0
    %2307 = vmatpush2.bf16.xpose.msra.mxu0 0
    %2308 = vmatprep.subr.bf16.mxu0 0
    %2309 = vmatpush2.bf16.xpose.msra.mxu0 0
    %2310 = vmatprep.mubr.bf16.mxu0 0
    %2311 = vmatmul.mubr.bf16.gmra.mxu0 %v2273
    %v2312 = vpop.f32.mrf.mxu0
    %v2313 = vadd.f32 0.0, %v2312
    %v2314 = vpop.f32.mrf.mxu0
    %v2315 = vpop.f32.mrf.mxu0
    %v2316 = vpop.f32.mrf.mxu0
    %2317 = vdwg.mxu0
    %v2319 = vsel %vm2087, %v868, 0
    %v2322 = vsel %vm2087, %v1472, 0
    %2324 = vmatprep.subr.bf16.mxu0 0
    %2325 = vmatpush1.bf16.xpose.msra.mxu0 0
    %2326 = vmatprep.subr.bf16.mxu0 0
    %2327 = vmatpush1.bf16.xpose.msra.mxu0 0
    %2328 = vmatprep.subr.bf16.mxu0 0
    %2329 = vmatpush1.bf16.xpose.msra.mxu0 0
    %2330 = vmatprep.subr.bf16.mxu0 0
    %2331 = vmatpush1.bf16.xpose.msra.mxu0 0
    %2332 = vmatprep.subr.bf16.mxu0 0
    %2333 = vmatpush1.bf16.xpose.msra.mxu0 0
    %2334 = vmatprep.subr.bf16.mxu0 0
    %2335 = vmatpush1.bf16.xpose.msra.mxu0 0
    %2336 = vmatprep.subr.bf16.mxu0 0
    %2337 = vmatpush1.bf16.xpose.msra.mxu0 0
    %2338 = vmatprep.subr.bf16.mxu0 0
    %2339 = vmatpush1.bf16.xpose.msra.mxu0 %v2322
    %2340 = vmatprep.subr.bf16.mxu0 0
    %2341 = vmatpush2.bf16.xpose.msra.mxu0 0
    %2342 = vmatprep.subr.bf16.mxu0 0
    %2343 = vmatpush2.bf16.xpose.msra.mxu0 0
    %2344 = vmatprep.subr.bf16.mxu0 0
    %2345 = vmatpush2.bf16.xpose.msra.mxu0 0
    %2346 = vmatprep.subr.bf16.mxu0 0
    %2347 = vmatpush2.bf16.xpose.msra.mxu0 0
    %2348 = vmatprep.subr.bf16.mxu0 0
    %2349 = vmatpush2.bf16.xpose.msra.mxu0 0
    %2350 = vmatprep.subr.bf16.mxu0 0
    %2351 = vmatpush2.bf16.xpose.msra.mxu0 0
    %2352 = vmatprep.subr.bf16.mxu0 0
    %2353 = vmatpush2.bf16.xpose.msra.mxu0 0
    %2354 = vmatprep.subr.bf16.mxu0 0
    %2355 = vmatpush2.bf16.xpose.msra.mxu0 0
    %2356 = vmatprep.mubr.bf16.mxu0 0
    %2357 = vmatmul.mubr.bf16.gmra.mxu0 %v2319
    %v2358 = vpop.f32.mrf.mxu0
    %v2359 = vadd.f32 0.0, %v2358
    %v2360 = vpop.f32.mrf.mxu0
    %v2361 = vpop.f32.mrf.mxu0
    %v2362 = vpop.f32.mrf.mxu0
    %2363 = vdwg.mxu0
    %v2365 = vsel %vm2087, %v869, 0
    %v2368 = vsel %vm2087, %v1473, 0
    %2370 = vmatprep.subr.bf16.mxu0 0
    %2371 = vmatpush1.bf16.xpose.msra.mxu0 0
    %2372 = vmatprep.subr.bf16.mxu0 0
    %2373 = vmatpush1.bf16.xpose.msra.mxu0 0
    %2374 = vmatprep.subr.bf16.mxu0 0
    %2375 = vmatpush1.bf16.xpose.msra.mxu0 0
    %2376 = vmatprep.subr.bf16.mxu0 0
    %2377 = vmatpush1.bf16.xpose.msra.mxu0 0
    %2378 = vmatprep.subr.bf16.mxu0 0
    %2379 = vmatpush1.bf16.xpose.msra.mxu0 0
    %2380 = vmatprep.subr.bf16.mxu0 0
    %2381 = vmatpush1.bf16.xpose.msra.mxu0 0
    %2382 = vmatprep.subr.bf16.mxu0 0
    %2383 = vmatpush1.bf16.xpose.msra.mxu0 0
    %2384 = vmatprep.subr.bf16.mxu0 0
    %2385 = vmatpush1.bf16.xpose.msra.mxu0 %v2368
    %2386 = vmatprep.subr.bf16.mxu0 0
    %2387 = vmatpush2.bf16.xpose.msra.mxu0 0
    %2388 = vmatprep.subr.bf16.mxu0 0
    %2389 = vmatpush2.bf16.xpose.msra.mxu0 0
    %2390 = vmatprep.subr.bf16.mxu0 0
    %2391 = vmatpush2.bf16.xpose.msra.mxu0 0
    %2392 = vmatprep.subr.bf16.mxu0 0
    %2393 = vmatpush2.bf16.xpose.msra.mxu0 0
    %2394 = vmatprep.subr.bf16.mxu0 0
    %2395 = vmatpush2.bf16.xpose.msra.mxu0 0
    %2396 = vmatprep.subr.bf16.mxu0 0
    %2397 = vmatpush2.bf16.xpose.msra.mxu0 0
    %2398 = vmatprep.subr.bf16.mxu0 0
    %2399 = vmatpush2.bf16.xpose.msra.mxu0 0
    %2400 = vmatprep.subr.bf16.mxu0 0
    %2401 = vmatpush2.bf16.xpose.msra.mxu0 0
    %2402 = vmatprep.mubr.bf16.mxu0 0
    %2403 = vmatmul.mubr.bf16.gmra.mxu0 %v2365
    %v2404 = vpop.f32.mrf.mxu0
    %v2405 = vadd.f32 0.0, %v2404
    %v2406 = vpop.f32.mrf.mxu0
    %v2407 = vpop.f32.mrf.mxu0
    %v2408 = vpop.f32.mrf.mxu0
    %2409 = vdwg.mxu0
    %v2411 = vsel %vm2087, %v870, 0
    %v2414 = vsel %vm2087, %v1474, 0
    %2416 = vmatprep.subr.bf16.mxu0 0
    %2417 = vmatpush1.bf16.xpose.msra.mxu0 0
    %2418 = vmatprep.subr.bf16.mxu0 0
    %2419 = vmatpush1.bf16.xpose.msra.mxu0 0
    %2420 = vmatprep.subr.bf16.mxu0 0
    %2421 = vmatpush1.bf16.xpose.msra.mxu0 0
    %2422 = vmatprep.subr.bf16.mxu0 0
    %2423 = vmatpush1.bf16.xpose.msra.mxu0 0
    %2424 = vmatprep.subr.bf16.mxu0 0
    %2425 = vmatpush1.bf16.xpose.msra.mxu0 0
    %2426 = vmatprep.subr.bf16.mxu0 0
    %2427 = vmatpush1.bf16.xpose.msra.mxu0 0
    %2428 = vmatprep.subr.bf16.mxu0 0
    %2429 = vmatpush1.bf16.xpose.msra.mxu0 0
    %2430 = vmatprep.subr.bf16.mxu0 0
    %2431 = vmatpush1.bf16.xpose.msra.mxu0 %v2414
    %2432 = vmatprep.subr.bf16.mxu0 0
    %2433 = vmatpush2.bf16.xpose.msra.mxu0 0
    %2434 = vmatprep.subr.bf16.mxu0 0
    %2435 = vmatpush2.bf16.xpose.msra.mxu0 0
    %2436 = vmatprep.subr.bf16.mxu0 0
    %2437 = vmatpush2.bf16.xpose.msra.mxu0 0
    %2438 = vmatprep.subr.bf16.mxu0 0
    %2439 = vmatpush2.bf16.xpose.msra.mxu0 0
    %2440 = vmatprep.subr.bf16.mxu0 0
    %2441 = vmatpush2.bf16.xpose.msra.mxu0 0
    %2442 = vmatprep.subr.bf16.mxu0 0
    %2443 = vmatpush2.bf16.xpose.msra.mxu0 0
    %2444 = vmatprep.subr.bf16.mxu0 0
    %2445 = vmatpush2.bf16.xpose.msra.mxu0 0
    %2446 = vmatprep.subr.bf16.mxu0 0
    %2447 = vmatpush2.bf16.xpose.msra.mxu0 0
    %2448 = vmatprep.mubr.bf16.mxu0 0
    %2449 = vmatmul.mubr.bf16.gmra.mxu0 %v2411
    %v2450 = vpop.f32.mrf.mxu0
    %v2451 = vadd.f32 0.0, %v2450
    %v2452 = vpop.f32.mrf.mxu0
    %v2453 = vpop.f32.mrf.mxu0
    %v2454 = vpop.f32.mrf.mxu0
    %2455 = vdwg.mxu0
    %v2457 = vsel %vm2087, %v871, 0
    %v2460 = vsel %vm2087, %v1475, 0
    %2462 = vmatprep.subr.bf16.mxu0 0
    %2463 = vmatpush1.bf16.xpose.msra.mxu0 0
    %2464 = vmatprep.subr.bf16.mxu0 0
    %2465 = vmatpush1.bf16.xpose.msra.mxu0 0
    %2466 = vmatprep.subr.bf16.mxu0 0
    %2467 = vmatpush1.bf16.xpose.msra.mxu0 0
    %2468 = vmatprep.subr.bf16.mxu0 0
    %2469 = vmatpush1.bf16.xpose.msra.mxu0 0
    %2470 = vmatprep.subr.bf16.mxu0 0
    %2471 = vmatpush1.bf16.xpose.msra.mxu0 0
    %2472 = vmatprep.subr.bf16.mxu0 0
    %2473 = vmatpush1.bf16.xpose.msra.mxu0 0
    %2474 = vmatprep.subr.bf16.mxu0 0
    %2475 = vmatpush1.bf16.xpose.msra.mxu0 0
    %2476 = vmatprep.subr.bf16.mxu0 0
    %2477 = vmatpush1.bf16.xpose.msra.mxu0 %v2460
    %2478 = vmatprep.subr.bf16.mxu0 0
    %2479 = vmatpush2.bf16.xpose.msra.mxu0 0
    %2480 = vmatprep.subr.bf16.mxu0 0
    %2481 = vmatpush2.bf16.xpose.msra.mxu0 0
    %2482 = vmatprep.subr.bf16.mxu0 0
    %2483 = vmatpush2.bf16.xpose.msra.mxu0 0
    %2484 = vmatprep.subr.bf16.mxu0 0
    %2485 = vmatpush2.bf16.xpose.msra.mxu0 0
    %2486 = vmatprep.subr.bf16.mxu0 0
    %2487 = vmatpush2.bf16.xpose.msra.mxu0 0
    %2488 = vmatprep.subr.bf16.mxu0 0
    %2489 = vmatpush2.bf16.xpose.msra.mxu0 0
    %2490 = vmatprep.subr.bf16.mxu0 0
    %2491 = vmatpush2.bf16.xpose.msra.mxu0 0
    %2492 = vmatprep.subr.bf16.mxu0 0
    %2493 = vmatpush2.bf16.xpose.msra.mxu0 0
    %2494 = vmatprep.mubr.bf16.mxu0 0
    %2495 = vmatmul.mubr.bf16.gmra.mxu0 %v2457
    %v2496 = vpop.f32.mrf.mxu0
    %v2497 = vadd.f32 0.0, %v2496
    %v2498 = vpop.f32.mrf.mxu0
    %v2499 = vpop.f32.mrf.mxu0
    %v2500 = vpop.f32.mrf.mxu0
    %2501 = vdwg.mxu0
    %v2503 = vsel %vm2087, %v872, 0
    %v2506 = vsel %vm2087, %v1476, 0
    %2508 = vmatprep.subr.bf16.mxu0 0
    %2509 = vmatpush1.bf16.xpose.msra.mxu0 0
    %2510 = vmatprep.subr.bf16.mxu0 0
    %2511 = vmatpush1.bf16.xpose.msra.mxu0 0
    %2512 = vmatprep.subr.bf16.mxu0 0
    %2513 = vmatpush1.bf16.xpose.msra.mxu0 0
    %2514 = vmatprep.subr.bf16.mxu0 0
    %2515 = vmatpush1.bf16.xpose.msra.mxu0 0
    %2516 = vmatprep.subr.bf16.mxu0 0
    %2517 = vmatpush1.bf16.xpose.msra.mxu0 0
    %2518 = vmatprep.subr.bf16.mxu0 0
    %2519 = vmatpush1.bf16.xpose.msra.mxu0 0
    %2520 = vmatprep.subr.bf16.mxu0 0
    %2521 = vmatpush1.bf16.xpose.msra.mxu0 0
    %2522 = vmatprep.subr.bf16.mxu0 0
    %2523 = vmatpush1.bf16.xpose.msra.mxu0 %v2506
    %2524 = vmatprep.subr.bf16.mxu0 0
    %2525 = vmatpush2.bf16.xpose.msra.mxu0 0
    %2526 = vmatprep.subr.bf16.mxu0 0
    %2527 = vmatpush2.bf16.xpose.msra.mxu0 0
    %2528 = vmatprep.subr.bf16.mxu0 0
    %2529 = vmatpush2.bf16.xpose.msra.mxu0 0
    %2530 = vmatprep.subr.bf16.mxu0 0
    %2531 = vmatpush2.bf16.xpose.msra.mxu0 0
    %2532 = vmatprep.subr.bf16.mxu0 0
    %2533 = vmatpush2.bf16.xpose.msra.mxu0 0
    %2534 = vmatprep.subr.bf16.mxu0 0
    %2535 = vmatpush2.bf16.xpose.msra.mxu0 0
    %2536 = vmatprep.subr.bf16.mxu0 0
    %2537 = vmatpush2.bf16.xpose.msra.mxu0 0
    %2538 = vmatprep.subr.bf16.mxu0 0
    %2539 = vmatpush2.bf16.xpose.msra.mxu0 0
    %2540 = vmatprep.mubr.bf16.mxu0 0
    %2541 = vmatmul.mubr.bf16.gmra.mxu0 %v2503
    %v2542 = vpop.f32.mrf.mxu0
    %v2543 = vadd.f32 0.0, %v2542
    %v2544 = vpop.f32.mrf.mxu0
    %v2545 = vpop.f32.mrf.mxu0
    %v2546 = vpop.f32.mrf.mxu0
    %2547 = vdwg.mxu0
    %v2549 = vsel %vm2087, %v873, 0
    %v2552 = vsel %vm2087, %v1477, 0
    %2554 = vmatprep.subr.bf16.mxu0 0
    %2555 = vmatpush1.bf16.xpose.msra.mxu0 0
    %2556 = vmatprep.subr.bf16.mxu0 0
    %2557 = vmatpush1.bf16.xpose.msra.mxu0 0
    %2558 = vmatprep.subr.bf16.mxu0 0
    %2559 = vmatpush1.bf16.xpose.msra.mxu0 0
    %2560 = vmatprep.subr.bf16.mxu0 0
    %2561 = vmatpush1.bf16.xpose.msra.mxu0 0
    %2562 = vmatprep.subr.bf16.mxu0 0
    %2563 = vmatpush1.bf16.xpose.msra.mxu0 0
    %2564 = vmatprep.subr.bf16.mxu0 0
    %2565 = vmatpush1.bf16.xpose.msra.mxu0 0
    %2566 = vmatprep.subr.bf16.mxu0 0
    %2567 = vmatpush1.bf16.xpose.msra.mxu0 0
    %2568 = vmatprep.subr.bf16.mxu0 0
    %2569 = vmatpush1.bf16.xpose.msra.mxu0 %v2552
    %2570 = vmatprep.subr.bf16.mxu0 0
    %2571 = vmatpush2.bf16.xpose.msra.mxu0 0
    %2572 = vmatprep.subr.bf16.mxu0 0
    %2573 = vmatpush2.bf16.xpose.msra.mxu0 0
    %2574 = vmatprep.subr.bf16.mxu0 0
    %2575 = vmatpush2.bf16.xpose.msra.mxu0 0
    %2576 = vmatprep.subr.bf16.mxu0 0
    %2577 = vmatpush2.bf16.xpose.msra.mxu0 0
    %2578 = vmatprep.subr.bf16.mxu0 0
    %2579 = vmatpush2.bf16.xpose.msra.mxu0 0
    %2580 = vmatprep.subr.bf16.mxu0 0
    %2581 = vmatpush2.bf16.xpose.msra.mxu0 0
    %2582 = vmatprep.subr.bf16.mxu0 0
    %2583 = vmatpush2.bf16.xpose.msra.mxu0 0
    %2584 = vmatprep.subr.bf16.mxu0 0
    %2585 = vmatpush2.bf16.xpose.msra.mxu0 0
    %2586 = vmatprep.mubr.bf16.mxu0 0
    %2587 = vmatmul.mubr.bf16.gmra.mxu0 %v2549
    %v2588 = vpop.f32.mrf.mxu0
    %v2589 = vadd.f32 0.0, %v2588
    %v2590 = vpop.f32.mrf.mxu0
    %v2591 = vpop.f32.mrf.mxu0
    %v2592 = vpop.f32.mrf.mxu0
    %2593 = vdwg.mxu0
    %v2595 = vsel %vm2087, %v874, 0
    %v2598 = vsel %vm2087, %v1478, 0
    %2600 = vmatprep.subr.bf16.mxu0 0
    %2601 = vmatpush1.bf16.xpose.msra.mxu0 0
    %2602 = vmatprep.subr.bf16.mxu0 0
    %2603 = vmatpush1.bf16.xpose.msra.mxu0 0
    %2604 = vmatprep.subr.bf16.mxu0 0
    %2605 = vmatpush1.bf16.xpose.msra.mxu0 0
    %2606 = vmatprep.subr.bf16.mxu0 0
    %2607 = vmatpush1.bf16.xpose.msra.mxu0 0
    %2608 = vmatprep.subr.bf16.mxu0 0
    %2609 = vmatpush1.bf16.xpose.msra.mxu0 0
    %2610 = vmatprep.subr.bf16.mxu0 0
    %2611 = vmatpush1.bf16.xpose.msra.mxu0 0
    %2612 = vmatprep.subr.bf16.mxu0 0
    %2613 = vmatpush1.bf16.xpose.msra.mxu0 0
    %2614 = vmatprep.subr.bf16.mxu0 0
    %2615 = vmatpush1.bf16.xpose.msra.mxu0 %v2598
    %2616 = vmatprep.subr.bf16.mxu0 0
    %2617 = vmatpush2.bf16.xpose.msra.mxu0 0
    %2618 = vmatprep.subr.bf16.mxu0 0
    %2619 = vmatpush2.bf16.xpose.msra.mxu0 0
    %2620 = vmatprep.subr.bf16.mxu0 0
    %2621 = vmatpush2.bf16.xpose.msra.mxu0 0
    %2622 = vmatprep.subr.bf16.mxu0 0
    %2623 = vmatpush2.bf16.xpose.msra.mxu0 0
    %2624 = vmatprep.subr.bf16.mxu0 0
    %2625 = vmatpush2.bf16.xpose.msra.mxu0 0
    %2626 = vmatprep.subr.bf16.mxu0 0
    %2627 = vmatpush2.bf16.xpose.msra.mxu0 0
    %2628 = vmatprep.subr.bf16.mxu0 0
    %2629 = vmatpush2.bf16.xpose.msra.mxu0 0
    %2630 = vmatprep.subr.bf16.mxu0 0
    %2631 = vmatpush2.bf16.xpose.msra.mxu0 0
    %2632 = vmatprep.mubr.bf16.mxu0 0
    %2633 = vmatmul.mubr.bf16.gmra.mxu0 %v2595
    %v2634 = vpop.f32.mrf.mxu0
    %v2635 = vadd.f32 0.0, %v2634
    %v2636 = vpop.f32.mrf.mxu0
    %v2637 = vpop.f32.mrf.mxu0
    %v2638 = vpop.f32.mrf.mxu0
    %2639 = vdwg.mxu0
    %v2641 = vsel %vm2087, %v875, 0
    %v2644 = vsel %vm2087, %v1479, 0
    %2646 = vmatprep.subr.bf16.mxu0 0
    %2647 = vmatpush1.bf16.xpose.msra.mxu0 0
    %2648 = vmatprep.subr.bf16.mxu0 0
    %2649 = vmatpush1.bf16.xpose.msra.mxu0 0
    %2650 = vmatprep.subr.bf16.mxu0 0
    %2651 = vmatpush1.bf16.xpose.msra.mxu0 0
    %2652 = vmatprep.subr.bf16.mxu0 0
    %2653 = vmatpush1.bf16.xpose.msra.mxu0 0
    %2654 = vmatprep.subr.bf16.mxu0 0
    %2655 = vmatpush1.bf16.xpose.msra.mxu0 0
    %2656 = vmatprep.subr.bf16.mxu0 0
    %2657 = vmatpush1.bf16.xpose.msra.mxu0 0
    %2658 = vmatprep.subr.bf16.mxu0 0
    %2659 = vmatpush1.bf16.xpose.msra.mxu0 0
    %2660 = vmatprep.subr.bf16.mxu0 0
    %2661 = vmatpush1.bf16.xpose.msra.mxu0 %v2644
    %2662 = vmatprep.subr.bf16.mxu0 0
    %2663 = vmatpush2.bf16.xpose.msra.mxu0 0
    %2664 = vmatprep.subr.bf16.mxu0 0
    %2665 = vmatpush2.bf16.xpose.msra.mxu0 0
    %2666 = vmatprep.subr.bf16.mxu0 0
    %2667 = vmatpush2.bf16.xpose.msra.mxu0 0
    %2668 = vmatprep.subr.bf16.mxu0 0
    %2669 = vmatpush2.bf16.xpose.msra.mxu0 0
    %2670 = vmatprep.subr.bf16.mxu0 0
    %2671 = vmatpush2.bf16.xpose.msra.mxu0 0
    %2672 = vmatprep.subr.bf16.mxu0 0
    %2673 = vmatpush2.bf16.xpose.msra.mxu0 0
    %2674 = vmatprep.subr.bf16.mxu0 0
    %2675 = vmatpush2.bf16.xpose.msra.mxu0 0
    %2676 = vmatprep.subr.bf16.mxu0 0
    %2677 = vmatpush2.bf16.xpose.msra.mxu0 0
    %2678 = vmatprep.mubr.bf16.mxu0 0
    %2679 = vmatmul.mubr.bf16.gmra.mxu0 %v2641
    %v2680 = vpop.f32.mrf.mxu0
    %v2681 = vadd.f32 0.0, %v2680
    %v2682 = vpop.f32.mrf.mxu0
    %v2683 = vpop.f32.mrf.mxu0
    %v2684 = vpop.f32.mrf.mxu0
    %2685 = vdwg.mxu0
    %v2687 = vsel %vm2087, %v876, 0
    %v2690 = vsel %vm2087, %v1480, 0
    %2692 = vmatprep.subr.bf16.mxu0 0
    %2693 = vmatpush1.bf16.xpose.msra.mxu0 0
    %2694 = vmatprep.subr.bf16.mxu0 0
    %2695 = vmatpush1.bf16.xpose.msra.mxu0 0
    %2696 = vmatprep.subr.bf16.mxu0 0
    %2697 = vmatpush1.bf16.xpose.msra.mxu0 0
    %2698 = vmatprep.subr.bf16.mxu0 0
    %2699 = vmatpush1.bf16.xpose.msra.mxu0 0
    %2700 = vmatprep.subr.bf16.mxu0 0
    %2701 = vmatpush1.bf16.xpose.msra.mxu0 0
    %2702 = vmatprep.subr.bf16.mxu0 0
    %2703 = vmatpush1.bf16.xpose.msra.mxu0 0
    %2704 = vmatprep.subr.bf16.mxu0 0
    %2705 = vmatpush1.bf16.xpose.msra.mxu0 0
    %2706 = vmatprep.subr.bf16.mxu0 0
    %2707 = vmatpush1.bf16.xpose.msra.mxu0 %v2690
    %2708 = vmatprep.subr.bf16.mxu0 0
    %2709 = vmatpush2.bf16.xpose.msra.mxu0 0
    %2710 = vmatprep.subr.bf16.mxu0 0
    %2711 = vmatpush2.bf16.xpose.msra.mxu0 0
    %2712 = vmatprep.subr.bf16.mxu0 0
    %2713 = vmatpush2.bf16.xpose.msra.mxu0 0
    %2714 = vmatprep.subr.bf16.mxu0 0
    %2715 = vmatpush2.bf16.xpose.msra.mxu0 0
    %2716 = vmatprep.subr.bf16.mxu0 0
    %2717 = vmatpush2.bf16.xpose.msra.mxu0 0
    %2718 = vmatprep.subr.bf16.mxu0 0
    %2719 = vmatpush2.bf16.xpose.msra.mxu0 0
    %2720 = vmatprep.subr.bf16.mxu0 0
    %2721 = vmatpush2.bf16.xpose.msra.mxu0 0
    %2722 = vmatprep.subr.bf16.mxu0 0
    %2723 = vmatpush2.bf16.xpose.msra.mxu0 0
    %2724 = vmatprep.mubr.bf16.mxu0 0
    %2725 = vmatmul.mubr.bf16.gmra.mxu0 %v2687
    %v2726 = vpop.f32.mrf.mxu0
    %v2727 = vadd.f32 0.0, %v2726
    %v2728 = vpop.f32.mrf.mxu0
    %v2729 = vpop.f32.mrf.mxu0
    %v2730 = vpop.f32.mrf.mxu0
    %2731 = vdwg.mxu0
    %v2733 = vsel %vm2087, %v877, 0
    %v2736 = vsel %vm2087, %v1481, 0
    %2738 = vmatprep.subr.bf16.mxu0 0
    %2739 = vmatpush1.bf16.xpose.msra.mxu0 0
    %2740 = vmatprep.subr.bf16.mxu0 0
    %2741 = vmatpush1.bf16.xpose.msra.mxu0 0
    %2742 = vmatprep.subr.bf16.mxu0 0
    %2743 = vmatpush1.bf16.xpose.msra.mxu0 0
    %2744 = vmatprep.subr.bf16.mxu0 0
    %2745 = vmatpush1.bf16.xpose.msra.mxu0 0
    %2746 = vmatprep.subr.bf16.mxu0 0
    %2747 = vmatpush1.bf16.xpose.msra.mxu0 0
    %2748 = vmatprep.subr.bf16.mxu0 0
    %2749 = vmatpush1.bf16.xpose.msra.mxu0 0
    %2750 = vmatprep.subr.bf16.mxu0 0
    %2751 = vmatpush1.bf16.xpose.msra.mxu0 0
    %2752 = vmatprep.subr.bf16.mxu0 0
    %2753 = vmatpush1.bf16.xpose.msra.mxu0 %v2736
    %2754 = vmatprep.subr.bf16.mxu0 0
    %2755 = vmatpush2.bf16.xpose.msra.mxu0 0
    %2756 = vmatprep.subr.bf16.mxu0 0
    %2757 = vmatpush2.bf16.xpose.msra.mxu0 0
    %2758 = vmatprep.subr.bf16.mxu0 0
    %2759 = vmatpush2.bf16.xpose.msra.mxu0 0
    %2760 = vmatprep.subr.bf16.mxu0 0
    %2761 = vmatpush2.bf16.xpose.msra.mxu0 0
    %2762 = vmatprep.subr.bf16.mxu0 0
    %2763 = vmatpush2.bf16.xpose.msra.mxu0 0
    %2764 = vmatprep.subr.bf16.mxu0 0
    %2765 = vmatpush2.bf16.xpose.msra.mxu0 0
    %2766 = vmatprep.subr.bf16.mxu0 0
    %2767 = vmatpush2.bf16.xpose.msra.mxu0 0
    %2768 = vmatprep.subr.bf16.mxu0 0
    %2769 = vmatpush2.bf16.xpose.msra.mxu0 0
    %2770 = vmatprep.mubr.bf16.mxu0 0
    %2771 = vmatmul.mubr.bf16.gmra.mxu0 %v2733
    %v2772 = vpop.f32.mrf.mxu0
    %v2773 = vadd.f32 0.0, %v2772
    %v2774 = vpop.f32.mrf.mxu0
    %v2775 = vpop.f32.mrf.mxu0
    %v2776 = vpop.f32.mrf.mxu0
    %2777 = vdwg.mxu0
    %v2779 = vsel %vm2087, %v878, 0
    %v2782 = vsel %vm2087, %v1482, 0
    %2784 = vmatprep.subr.bf16.mxu0 0
    %2785 = vmatpush1.bf16.xpose.msra.mxu0 0
    %2786 = vmatprep.subr.bf16.mxu0 0
    %2787 = vmatpush1.bf16.xpose.msra.mxu0 0
    %2788 = vmatprep.subr.bf16.mxu0 0
    %2789 = vmatpush1.bf16.xpose.msra.mxu0 0
    %2790 = vmatprep.subr.bf16.mxu0 0
    %2791 = vmatpush1.bf16.xpose.msra.mxu0 0
    %2792 = vmatprep.subr.bf16.mxu0 0
    %2793 = vmatpush1.bf16.xpose.msra.mxu0 0
    %2794 = vmatprep.subr.bf16.mxu0 0
    %2795 = vmatpush1.bf16.xpose.msra.mxu0 0
    %2796 = vmatprep.subr.bf16.mxu0 0
    %2797 = vmatpush1.bf16.xpose.msra.mxu0 0
    %2798 = vmatprep.subr.bf16.mxu0 0
    %2799 = vmatpush1.bf16.xpose.msra.mxu0 %v2782
    %2800 = vmatprep.subr.bf16.mxu0 0
    %2801 = vmatpush2.bf16.xpose.msra.mxu0 0
    %2802 = vmatprep.subr.bf16.mxu0 0
    %2803 = vmatpush2.bf16.xpose.msra.mxu0 0
    %2804 = vmatprep.subr.bf16.mxu0 0
    %2805 = vmatpush2.bf16.xpose.msra.mxu0 0
    %2806 = vmatprep.subr.bf16.mxu0 0
    %2807 = vmatpush2.bf16.xpose.msra.mxu0 0
    %2808 = vmatprep.subr.bf16.mxu0 0
    %2809 = vmatpush2.bf16.xpose.msra.mxu0 0
    %2810 = vmatprep.subr.bf16.mxu0 0
    %2811 = vmatpush2.bf16.xpose.msra.mxu0 0
    %2812 = vmatprep.subr.bf16.mxu0 0
    %2813 = vmatpush2.bf16.xpose.msra.mxu0 0
    %2814 = vmatprep.subr.bf16.mxu0 0
    %2815 = vmatpush2.bf16.xpose.msra.mxu0 0
    %2816 = vmatprep.mubr.bf16.mxu0 0
    %2817 = vmatmul.mubr.bf16.gmra.mxu0 %v2779
    %v2818 = vpop.f32.mrf.mxu0
    %v2819 = vadd.f32 0.0, %v2818
    %v2820 = vpop.f32.mrf.mxu0
    %v2821 = vpop.f32.mrf.mxu0
    %v2822 = vpop.f32.mrf.mxu0
    %2823 = vdwg.mxu0
    %vm2824 = vcmask 64512
    %v2825 = vsel %vm2824, %v2129, -inf
    %2826 = vmax.xlane.f32.xlu0 %v2825
    %v2827 = vpop.xlane.xlu0 %2826
    %v2828 = vsel %vm2824, %v2175, -inf
    %2829 = vmax.xlane.f32.xlu0 %v2828
    %v2830 = vpop.xlane.xlu0 %2829
    %v2831 = vsel %vm2824, %v2221, -inf
    %2832 = vmax.xlane.f32.xlu0 %v2831
    %v2833 = vpop.xlane.xlu0 %2832
    %v2834 = vsel %vm2824, %v2267, -inf
    %2835 = vmax.xlane.f32.xlu0 %v2834
    %v2836 = vpop.xlane.xlu0 %2835
    %v2837 = vsel %vm2824, %v2313, -inf
    %2838 = vmax.xlane.f32.xlu0 %v2837
    %v2839 = vpop.xlane.xlu0 %2838
    %v2840 = vsel %vm2824, %v2359, -inf
    %2841 = vmax.xlane.f32.xlu0 %v2840
    %v2842 = vpop.xlane.xlu0 %2841
    %v2843 = vsel %vm2824, %v2405, -inf
    %2844 = vmax.xlane.f32.xlu0 %v2843
    %v2845 = vpop.xlane.xlu0 %2844
    %v2846 = vsel %vm2824, %v2451, -inf
    %2847 = vmax.xlane.f32.xlu0 %v2846
    %v2848 = vpop.xlane.xlu0 %2847
    %v2849 = vsel %vm2824, %v2497, -inf
    %2850 = vmax.xlane.f32.xlu0 %v2849
    %v2851 = vpop.xlane.xlu0 %2850
    %v2852 = vsel %vm2824, %v2543, -inf
    %2853 = vmax.xlane.f32.xlu0 %v2852
    %v2854 = vpop.xlane.xlu0 %2853
    %v2855 = vsel %vm2824, %v2589, -inf
    %2856 = vmax.xlane.f32.xlu0 %v2855
    %v2857 = vpop.xlane.xlu0 %2856
    %v2858 = vsel %vm2824, %v2635, -inf
    %2859 = vmax.xlane.f32.xlu0 %v2858
    %v2860 = vpop.xlane.xlu0 %2859
    %v2861 = vsel %vm2824, %v2681, -inf
    %2862 = vmax.xlane.f32.xlu0 %v2861
    %v2863 = vpop.xlane.xlu0 %2862
    %v2864 = vsel %vm2824, %v2727, -inf
    %2865 = vmax.xlane.f32.xlu0 %v2864
    %v2866 = vpop.xlane.xlu0 %2865
    %v2867 = vsel %vm2824, %v2773, -inf
    %2868 = vmax.xlane.f32.xlu0 %v2867
    %v2869 = vpop.xlane.xlu0 %2868
    %v2870 = vsel %vm2824, %v2819, -inf
    %2871 = vmax.xlane.f32.xlu0 %v2870
    %v2872 = vpop.xlane.xlu0 %2871
    %v2873 = vsub.f32 %v2129, %v2827
    %v2874 = vsub.f32 %v2175, %v2830
    %v2875 = vsub.f32 %v2221, %v2833
    %v2876 = vsub.f32 %v2267, %v2836
    %v2877 = vsub.f32 %v2313, %v2839
    %v2878 = vsub.f32 %v2359, %v2842
    %v2879 = vsub.f32 %v2405, %v2845
    %v2880 = vsub.f32 %v2451, %v2848
    %v2881 = vsub.f32 %v2497, %v2851
    %v2882 = vsub.f32 %v2543, %v2854
    %v2883 = vsub.f32 %v2589, %v2857
    %v2884 = vsub.f32 %v2635, %v2860
    %v2885 = vsub.f32 %v2681, %v2863
    %v2886 = vsub.f32 %v2727, %v2866
    %v2887 = vsub.f32 %v2773, %v2869
    %v2888 = vsub.f32 %v2819, %v2872
    %v2889 = vmul.f32 %v2873, 1.442695
    %v2890 = vpow.pop %v2889
    %v2891 = vmul.f32 %v2874, 1.442695
    %v2892 = vpow.pop %v2891
    %v2893 = vmul.f32 %v2875, 1.442695
    %v2894 = vpow.pop %v2893
    %v2895 = vmul.f32 %v2876, 1.442695
    %v2896 = vpow.pop %v2895
    %v2897 = vmul.f32 %v2877, 1.442695
    %v2898 = vpow.pop %v2897
    %v2899 = vmul.f32 %v2878, 1.442695
    %v2900 = vpow.pop %v2899
    %v2901 = vmul.f32 %v2879, 1.442695
    %v2902 = vpow.pop %v2901
    %v2903 = vmul.f32 %v2880, 1.442695
    %v2904 = vpow.pop %v2903
    %v2905 = vmul.f32 %v2881, 1.442695
    %v2906 = vpow.pop %v2905
    %v2907 = vmul.f32 %v2882, 1.442695
    %v2908 = vpow.pop %v2907
    %v2909 = vmul.f32 %v2883, 1.442695
    %v2910 = vpow.pop %v2909
    %v2911 = vmul.f32 %v2884, 1.442695
    %v2912 = vpow.pop %v2911
    %v2913 = vmul.f32 %v2885, 1.442695
    %v2914 = vpow.pop %v2913
    %v2915 = vmul.f32 %v2886, 1.442695
    %v2916 = vpow.pop %v2915
    %v2917 = vmul.f32 %v2887, 1.442695
    %v2918 = vpow.pop %v2917
    %v2919 = vmul.f32 %v2888, 1.442695
    %v2920 = vpow.pop %v2919
    %v2921 = vsel %vm2824, %v2890, 0.0
    %2922 = vadd.xlane.f32.xlu0 %v2921
    %v2923 = vpop.xlane.xlu0 %2922
    %v2924 = vsel %vm2824, %v2892, 0.0
    %2925 = vadd.xlane.f32.xlu0 %v2924
    %v2926 = vpop.xlane.xlu0 %2925
    %v2927 = vsel %vm2824, %v2894, 0.0
    %2928 = vadd.xlane.f32.xlu0 %v2927
    %v2929 = vpop.xlane.xlu0 %2928
    %v2930 = vsel %vm2824, %v2896, 0.0
    %2931 = vadd.xlane.f32.xlu0 %v2930
    %v2932 = vpop.xlane.xlu0 %2931
    %v2933 = vsel %vm2824, %v2898, 0.0
    %2934 = vadd.xlane.f32.xlu0 %v2933
    %v2935 = vpop.xlane.xlu0 %2934
    %v2936 = vsel %vm2824, %v2900, 0.0
    %2937 = vadd.xlane.f32.xlu0 %v2936
    %v2938 = vpop.xlane.xlu0 %2937
    %v2939 = vsel %vm2824, %v2902, 0.0
    %2940 = vadd.xlane.f32.xlu0 %v2939
    %v2941 = vpop.xlane.xlu0 %2940
    %v2942 = vsel %vm2824, %v2904, 0.0
    %2943 = vadd.xlane.f32.xlu0 %v2942
    %v2944 = vpop.xlane.xlu0 %2943
    %v2945 = vsel %vm2824, %v2906, 0.0
    %2946 = vadd.xlane.f32.xlu0 %v2945
    %v2947 = vpop.xlane.xlu0 %2946
    %v2948 = vsel %vm2824, %v2908, 0.0
    %2949 = vadd.xlane.f32.xlu0 %v2948
    %v2950 = vpop.xlane.xlu0 %2949
    %v2951 = vsel %vm2824, %v2910, 0.0
    %2952 = vadd.xlane.f32.xlu0 %v2951
    %v2953 = vpop.xlane.xlu0 %2952
    %v2954 = vsel %vm2824, %v2912, 0.0
    %2955 = vadd.xlane.f32.xlu0 %v2954
    %v2956 = vpop.xlane.xlu0 %2955
    %v2957 = vsel %vm2824, %v2914, 0.0
    %2958 = vadd.xlane.f32.xlu0 %v2957
    %v2959 = vpop.xlane.xlu0 %2958
    %v2960 = vsel %vm2824, %v2916, 0.0
    %2961 = vadd.xlane.f32.xlu0 %v2960
    %v2962 = vpop.xlane.xlu0 %2961
    %v2963 = vsel %vm2824, %v2918, 0.0
    %2964 = vadd.xlane.f32.xlu0 %v2963
    %v2965 = vpop.xlane.xlu0 %2964
    %v2966 = vsel %vm2824, %v2920, 0.0
    %2967 = vadd.xlane.f32.xlu0 %v2966
    %v2968 = vpop.xlane.xlu0 %2967
    %v2969 = vrcp.pop %v2923
    %v2970 = vrcp.pop %v2926
    %v2971 = vrcp.pop %v2929
    %v2972 = vrcp.pop %v2932
    %v2973 = vrcp.pop %v2935
    %v2974 = vrcp.pop %v2938
    %v2975 = vrcp.pop %v2941
    %v2976 = vrcp.pop %v2944
    %v2977 = vrcp.pop %v2947
    %v2978 = vrcp.pop %v2950
    %v2979 = vrcp.pop %v2953
    %v2980 = vrcp.pop %v2956
    %v2981 = vrcp.pop %v2959
    %v2982 = vrcp.pop %v2962
    %v2983 = vrcp.pop %v2965
    %v2984 = vrcp.pop %v2968
    %v2985 = vmul.f32 %v2890, %v2969
    %v2986 = vmul.f32 %v2892, %v2970
    %v2987 = vmul.f32 %v2894, %v2971
    %v2988 = vmul.f32 %v2896, %v2972
    %v2989 = vmul.f32 %v2898, %v2973
    %v2990 = vmul.f32 %v2900, %v2974
    %v2991 = vmul.f32 %v2902, %v2975
    %v2992 = vmul.f32 %v2904, %v2976
    %v2993 = vmul.f32 %v2906, %v2977
    %v2994 = vmul.f32 %v2908, %v2978
    %v2995 = vmul.f32 %v2910, %v2979
    %v2996 = vmul.f32 %v2912, %v2980
    %v2997 = vmul.f32 %v2914, %v2981
    %v2998 = vmul.f32 %v2916, %v2982
    %v2999 = vmul.f32 %v2918, %v2983
    %v3000 = vmul.f32 %v2920, %v2984
    %v3001 = vpack.c.bf16 %v2985, %v2985
    %v3002 = vpack.c.bf16 %v2986, %v2986
    %v3003 = vpack.c.bf16 %v2987, %v2987
    %v3004 = vpack.c.bf16 %v2988, %v2988
    %v3005 = vpack.c.bf16 %v2989, %v2989
    %v3006 = vpack.c.bf16 %v2990, %v2990
    %v3007 = vpack.c.bf16 %v2991, %v2991
    %v3008 = vpack.c.bf16 %v2992, %v2992
    %v3009 = vpack.c.bf16 %v2993, %v2993
    %v3010 = vpack.c.bf16 %v2994, %v2994
    %v3011 = vpack.c.bf16 %v2995, %v2995
    %v3012 = vpack.c.bf16 %v2996, %v2996
    %v3013 = vpack.c.bf16 %v2997, %v2997
    %v3014 = vpack.c.bf16 %v2998, %v2998
    %v3015 = vpack.c.bf16 %v2999, %v2999
    %v3016 = vpack.c.bf16 %v3000, %v3000
    %v3018 = vsel %vm2824, %v3001, 0
    %vm3020 = vcmask 1043456
    %v3022 = vsel %vm3020, %v2071, 0
    %3024 = vmatprep.subr.bf16.mxu0 0
    %3025 = vmatpush1.bf16.msra.mxu0 0
    %3026 = vmatprep.subr.bf16.mxu0 0
    %3027 = vmatpush1.bf16.msra.mxu0 0
    %3028 = vmatprep.subr.bf16.mxu0 0
    %3029 = vmatpush1.bf16.msra.mxu0 0
    %3030 = vmatprep.subr.bf16.mxu0 0
    %3031 = vmatpush1.bf16.msra.mxu0 0
    %3032 = vmatprep.subr.bf16.mxu0 0
    %3033 = vmatpush1.bf16.msra.mxu0 0
    %3034 = vmatprep.subr.bf16.mxu0 0
    %3035 = vmatpush1.bf16.msra.mxu0 0
    %3036 = vmatprep.subr.bf16.mxu0 0
    %3037 = vmatpush1.bf16.msra.mxu0 0
    %3038 = vmatprep.subr.bf16.mxu0 0
    %3039 = vmatpush1.bf16.msra.mxu0 %v3022
    %3040 = vmatprep.subr.bf16.mxu0 0
    %3041 = vmatpush2.bf16.msra.mxu0 0
    %3042 = vmatprep.subr.bf16.mxu0 0
    %3043 = vmatpush2.bf16.msra.mxu0 0
    %3044 = vmatprep.subr.bf16.mxu0 0
    %3045 = vmatpush2.bf16.msra.mxu0 0
    %3046 = vmatprep.subr.bf16.mxu0 0
    %3047 = vmatpush2.bf16.msra.mxu0 0
    %3048 = vmatprep.subr.bf16.mxu0 0
    %3049 = vmatpush2.bf16.msra.mxu0 0
    %3050 = vmatprep.subr.bf16.mxu0 0
    %3051 = vmatpush2.bf16.msra.mxu0 0
    %3052 = vmatprep.subr.bf16.mxu0 0
    %3053 = vmatpush2.bf16.msra.mxu0 0
    %3054 = vmatprep.subr.bf16.mxu0 0
    %3055 = vmatpush2.bf16.msra.mxu0 0
    %3056 = vmatprep.mubr.bf16.mxu0 0
    %3057 = vmatmul.mubr.bf16.gmra.mxu0 %v3018
    %v3058 = vpop.f32.mrf.mxu0
    %v3059 = vadd.f32 0.0, %v3058
    %v3060 = vpop.f32.mrf.mxu0
    %v3061 = vpop.f32.mrf.mxu0
    %v3062 = vpop.f32.mrf.mxu0
    %3063 = vdwg.mxu0
    %v3065 = vsel %vm2824, %v3002, 0
    %v3068 = vsel %vm3020, %v2072, 0
    %3070 = vmatprep.subr.bf16.mxu0 0
    %3071 = vmatpush1.bf16.msra.mxu0 0
    %3072 = vmatprep.subr.bf16.mxu0 0
    %3073 = vmatpush1.bf16.msra.mxu0 0
    %3074 = vmatprep.subr.bf16.mxu0 0
    %3075 = vmatpush1.bf16.msra.mxu0 0
    %3076 = vmatprep.subr.bf16.mxu0 0
    %3077 = vmatpush1.bf16.msra.mxu0 0
    %3078 = vmatprep.subr.bf16.mxu0 0
    %3079 = vmatpush1.bf16.msra.mxu0 0
    %3080 = vmatprep.subr.bf16.mxu0 0
    %3081 = vmatpush1.bf16.msra.mxu0 0
    %3082 = vmatprep.subr.bf16.mxu0 0
    %3083 = vmatpush1.bf16.msra.mxu0 0
    %3084 = vmatprep.subr.bf16.mxu0 0
    %3085 = vmatpush1.bf16.msra.mxu0 %v3068
    %3086 = vmatprep.subr.bf16.mxu0 0
    %3087 = vmatpush2.bf16.msra.mxu0 0
    %3088 = vmatprep.subr.bf16.mxu0 0
    %3089 = vmatpush2.bf16.msra.mxu0 0
    %3090 = vmatprep.subr.bf16.mxu0 0
    %3091 = vmatpush2.bf16.msra.mxu0 0
    %3092 = vmatprep.subr.bf16.mxu0 0
    %3093 = vmatpush2.bf16.msra.mxu0 0
    %3094 = vmatprep.subr.bf16.mxu0 0
    %3095 = vmatpush2.bf16.msra.mxu0 0
    %3096 = vmatprep.subr.bf16.mxu0 0
    %3097 = vmatpush2.bf16.msra.mxu0 0
    %3098 = vmatprep.subr.bf16.mxu0 0
    %3099 = vmatpush2.bf16.msra.mxu0 0
    %3100 = vmatprep.subr.bf16.mxu0 0
    %3101 = vmatpush2.bf16.msra.mxu0 0
    %3102 = vmatprep.mubr.bf16.mxu0 0
    %3103 = vmatmul.mubr.bf16.gmra.mxu0 %v3065
    %v3104 = vpop.f32.mrf.mxu0
    %v3105 = vadd.f32 0.0, %v3104
    %v3106 = vpop.f32.mrf.mxu0
    %v3107 = vpop.f32.mrf.mxu0
    %v3108 = vpop.f32.mrf.mxu0
    %3109 = vdwg.mxu0
    %v3111 = vsel %vm2824, %v3003, 0
    %v3114 = vsel %vm3020, %v2073, 0
    %3116 = vmatprep.subr.bf16.mxu0 0
    %3117 = vmatpush1.bf16.msra.mxu0 0
    %3118 = vmatprep.subr.bf16.mxu0 0
    %3119 = vmatpush1.bf16.msra.mxu0 0
    %3120 = vmatprep.subr.bf16.mxu0 0
    %3121 = vmatpush1.bf16.msra.mxu0 0
    %3122 = vmatprep.subr.bf16.mxu0 0
    %3123 = vmatpush1.bf16.msra.mxu0 0
    %3124 = vmatprep.subr.bf16.mxu0 0
    %3125 = vmatpush1.bf16.msra.mxu0 0
    %3126 = vmatprep.subr.bf16.mxu0 0
    %3127 = vmatpush1.bf16.msra.mxu0 0
    %3128 = vmatprep.subr.bf16.mxu0 0
    %3129 = vmatpush1.bf16.msra.mxu0 0
    %3130 = vmatprep.subr.bf16.mxu0 0
    %3131 = vmatpush1.bf16.msra.mxu0 %v3114
    %3132 = vmatprep.subr.bf16.mxu0 0
    %3133 = vmatpush2.bf16.msra.mxu0 0
    %3134 = vmatprep.subr.bf16.mxu0 0
    %3135 = vmatpush2.bf16.msra.mxu0 0
    %3136 = vmatprep.subr.bf16.mxu0 0
    %3137 = vmatpush2.bf16.msra.mxu0 0
    %3138 = vmatprep.subr.bf16.mxu0 0
    %3139 = vmatpush2.bf16.msra.mxu0 0
    %3140 = vmatprep.subr.bf16.mxu0 0
    %3141 = vmatpush2.bf16.msra.mxu0 0
    %3142 = vmatprep.subr.bf16.mxu0 0
    %3143 = vmatpush2.bf16.msra.mxu0 0
    %3144 = vmatprep.subr.bf16.mxu0 0
    %3145 = vmatpush2.bf16.msra.mxu0 0
    %3146 = vmatprep.subr.bf16.mxu0 0
    %3147 = vmatpush2.bf16.msra.mxu0 0
    %3148 = vmatprep.mubr.bf16.mxu0 0
    %3149 = vmatmul.mubr.bf16.gmra.mxu0 %v3111
    %v3150 = vpop.f32.mrf.mxu0
    %v3151 = vadd.f32 0.0, %v3150
    %v3152 = vpop.f32.mrf.mxu0
    %v3153 = vpop.f32.mrf.mxu0
    %v3154 = vpop.f32.mrf.mxu0
    %3155 = vdwg.mxu0
    %v3157 = vsel %vm2824, %v3004, 0
    %v3160 = vsel %vm3020, %v2074, 0
    %3162 = vmatprep.subr.bf16.mxu0 0
    %3163 = vmatpush1.bf16.msra.mxu0 0
    %3164 = vmatprep.subr.bf16.mxu0 0
    %3165 = vmatpush1.bf16.msra.mxu0 0
    %3166 = vmatprep.subr.bf16.mxu0 0
    %3167 = vmatpush1.bf16.msra.mxu0 0
    %3168 = vmatprep.subr.bf16.mxu0 0
    %3169 = vmatpush1.bf16.msra.mxu0 0
    %3170 = vmatprep.subr.bf16.mxu0 0
    %3171 = vmatpush1.bf16.msra.mxu0 0
    %3172 = vmatprep.subr.bf16.mxu0 0
    %3173 = vmatpush1.bf16.msra.mxu0 0
    %3174 = vmatprep.subr.bf16.mxu0 0
    %3175 = vmatpush1.bf16.msra.mxu0 0
    %3176 = vmatprep.subr.bf16.mxu0 0
    %3177 = vmatpush1.bf16.msra.mxu0 %v3160
    %3178 = vmatprep.subr.bf16.mxu0 0
    %3179 = vmatpush2.bf16.msra.mxu0 0
    %3180 = vmatprep.subr.bf16.mxu0 0
    %3181 = vmatpush2.bf16.msra.mxu0 0
    %3182 = vmatprep.subr.bf16.mxu0 0
    %3183 = vmatpush2.bf16.msra.mxu0 0
    %3184 = vmatprep.subr.bf16.mxu0 0
    %3185 = vmatpush2.bf16.msra.mxu0 0
    %3186 = vmatprep.subr.bf16.mxu0 0
    %3187 = vmatpush2.bf16.msra.mxu0 0
    %3188 = vmatprep.subr.bf16.mxu0 0
    %3189 = vmatpush2.bf16.msra.mxu0 0
    %3190 = vmatprep.subr.bf16.mxu0 0
    %3191 = vmatpush2.bf16.msra.mxu0 0
    %3192 = vmatprep.subr.bf16.mxu0 0
    %3193 = vmatpush2.bf16.msra.mxu0 0
    %3194 = vmatprep.mubr.bf16.mxu0 0
    %3195 = vmatmul.mubr.bf16.gmra.mxu0 %v3157
    %v3196 = vpop.f32.mrf.mxu0
    %v3197 = vadd.f32 0.0, %v3196
    %v3198 = vpop.f32.mrf.mxu0
    %v3199 = vpop.f32.mrf.mxu0
    %v3200 = vpop.f32.mrf.mxu0
    %3201 = vdwg.mxu0
    %v3203 = vsel %vm2824, %v3005, 0
    %v3206 = vsel %vm3020, %v2075, 0
    %3208 = vmatprep.subr.bf16.mxu0 0
    %3209 = vmatpush1.bf16.msra.mxu0 0
    %3210 = vmatprep.subr.bf16.mxu0 0
    %3211 = vmatpush1.bf16.msra.mxu0 0
    %3212 = vmatprep.subr.bf16.mxu0 0
    %3213 = vmatpush1.bf16.msra.mxu0 0
    %3214 = vmatprep.subr.bf16.mxu0 0
    %3215 = vmatpush1.bf16.msra.mxu0 0
    %3216 = vmatprep.subr.bf16.mxu0 0
    %3217 = vmatpush1.bf16.msra.mxu0 0
    %3218 = vmatprep.subr.bf16.mxu0 0
    %3219 = vmatpush1.bf16.msra.mxu0 0
    %3220 = vmatprep.subr.bf16.mxu0 0
    %3221 = vmatpush1.bf16.msra.mxu0 0
    %3222 = vmatprep.subr.bf16.mxu0 0
    %3223 = vmatpush1.bf16.msra.mxu0 %v3206
    %3224 = vmatprep.subr.bf16.mxu0 0
    %3225 = vmatpush2.bf16.msra.mxu0 0
    %3226 = vmatprep.subr.bf16.mxu0 0
    %3227 = vmatpush2.bf16.msra.mxu0 0
    %3228 = vmatprep.subr.bf16.mxu0 0
    %3229 = vmatpush2.bf16.msra.mxu0 0
    %3230 = vmatprep.subr.bf16.mxu0 0
    %3231 = vmatpush2.bf16.msra.mxu0 0
    %3232 = vmatprep.subr.bf16.mxu0 0
    %3233 = vmatpush2.bf16.msra.mxu0 0
    %3234 = vmatprep.subr.bf16.mxu0 0
    %3235 = vmatpush2.bf16.msra.mxu0 0
    %3236 = vmatprep.subr.bf16.mxu0 0
    %3237 = vmatpush2.bf16.msra.mxu0 0
    %3238 = vmatprep.subr.bf16.mxu0 0
    %3239 = vmatpush2.bf16.msra.mxu0 0
    %3240 = vmatprep.mubr.bf16.mxu0 0
    %3241 = vmatmul.mubr.bf16.gmra.mxu0 %v3203
    %v3242 = vpop.f32.mrf.mxu0
    %v3243 = vadd.f32 0.0, %v3242
    %v3244 = vpop.f32.mrf.mxu0
    %v3245 = vpop.f32.mrf.mxu0
    %v3246 = vpop.f32.mrf.mxu0
    %3247 = vdwg.mxu0
    %v3249 = vsel %vm2824, %v3006, 0
    %v3252 = vsel %vm3020, %v2076, 0
    %3254 = vmatprep.subr.bf16.mxu0 0
    %3255 = vmatpush1.bf16.msra.mxu0 0
    %3256 = vmatprep.subr.bf16.mxu0 0
    %3257 = vmatpush1.bf16.msra.mxu0 0
    %3258 = vmatprep.subr.bf16.mxu0 0
    %3259 = vmatpush1.bf16.msra.mxu0 0
    %3260 = vmatprep.subr.bf16.mxu0 0
    %3261 = vmatpush1.bf16.msra.mxu0 0
    %3262 = vmatprep.subr.bf16.mxu0 0
    %3263 = vmatpush1.bf16.msra.mxu0 0
    %3264 = vmatprep.subr.bf16.mxu0 0
    %3265 = vmatpush1.bf16.msra.mxu0 0
    %3266 = vmatprep.subr.bf16.mxu0 0
    %3267 = vmatpush1.bf16.msra.mxu0 0
    %3268 = vmatprep.subr.bf16.mxu0 0
    %3269 = vmatpush1.bf16.msra.mxu0 %v3252
    %3270 = vmatprep.subr.bf16.mxu0 0
    %3271 = vmatpush2.bf16.msra.mxu0 0
    %3272 = vmatprep.subr.bf16.mxu0 0
    %3273 = vmatpush2.bf16.msra.mxu0 0
    %3274 = vmatprep.subr.bf16.mxu0 0
    %3275 = vmatpush2.bf16.msra.mxu0 0
    %3276 = vmatprep.subr.bf16.mxu0 0
    %3277 = vmatpush2.bf16.msra.mxu0 0
    %3278 = vmatprep.subr.bf16.mxu0 0
    %3279 = vmatpush2.bf16.msra.mxu0 0
    %3280 = vmatprep.subr.bf16.mxu0 0
    %3281 = vmatpush2.bf16.msra.mxu0 0
    %3282 = vmatprep.subr.bf16.mxu0 0
    %3283 = vmatpush2.bf16.msra.mxu0 0
    %3284 = vmatprep.subr.bf16.mxu0 0
    %3285 = vmatpush2.bf16.msra.mxu0 0
    %3286 = vmatprep.mubr.bf16.mxu0 0
    %3287 = vmatmul.mubr.bf16.gmra.mxu0 %v3249
    %v3288 = vpop.f32.mrf.mxu0
    %v3289 = vadd.f32 0.0, %v3288
    %v3290 = vpop.f32.mrf.mxu0
    %v3291 = vpop.f32.mrf.mxu0
    %v3292 = vpop.f32.mrf.mxu0
    %3293 = vdwg.mxu0
    %v3295 = vsel %vm2824, %v3007, 0
    %v3298 = vsel %vm3020, %v2077, 0
    %3300 = vmatprep.subr.bf16.mxu0 0
    %3301 = vmatpush1.bf16.msra.mxu0 0
    %3302 = vmatprep.subr.bf16.mxu0 0
    %3303 = vmatpush1.bf16.msra.mxu0 0
    %3304 = vmatprep.subr.bf16.mxu0 0
    %3305 = vmatpush1.bf16.msra.mxu0 0
    %3306 = vmatprep.subr.bf16.mxu0 0
    %3307 = vmatpush1.bf16.msra.mxu0 0
    %3308 = vmatprep.subr.bf16.mxu0 0
    %3309 = vmatpush1.bf16.msra.mxu0 0
    %3310 = vmatprep.subr.bf16.mxu0 0
    %3311 = vmatpush1.bf16.msra.mxu0 0
    %3312 = vmatprep.subr.bf16.mxu0 0
    %3313 = vmatpush1.bf16.msra.mxu0 0
    %3314 = vmatprep.subr.bf16.mxu0 0
    %3315 = vmatpush1.bf16.msra.mxu0 %v3298
    %3316 = vmatprep.subr.bf16.mxu0 0
    %3317 = vmatpush2.bf16.msra.mxu0 0
    %3318 = vmatprep.subr.bf16.mxu0 0
    %3319 = vmatpush2.bf16.msra.mxu0 0
    %3320 = vmatprep.subr.bf16.mxu0 0
    %3321 = vmatpush2.bf16.msra.mxu0 0
    %3322 = vmatprep.subr.bf16.mxu0 0
    %3323 = vmatpush2.bf16.msra.mxu0 0
    %3324 = vmatprep.subr.bf16.mxu0 0
    %3325 = vmatpush2.bf16.msra.mxu0 0
    %3326 = vmatprep.subr.bf16.mxu0 0
    %3327 = vmatpush2.bf16.msra.mxu0 0
    %3328 = vmatprep.subr.bf16.mxu0 0
    %3329 = vmatpush2.bf16.msra.mxu0 0
    %3330 = vmatprep.subr.bf16.mxu0 0
    %3331 = vmatpush2.bf16.msra.mxu0 0
    %3332 = vmatprep.mubr.bf16.mxu0 0
    %3333 = vmatmul.mubr.bf16.gmra.mxu0 %v3295
    %v3334 = vpop.f32.mrf.mxu0
    %v3335 = vadd.f32 0.0, %v3334
    %v3336 = vpop.f32.mrf.mxu0
    %v3337 = vpop.f32.mrf.mxu0
    %v3338 = vpop.f32.mrf.mxu0
    %3339 = vdwg.mxu0
    %v3341 = vsel %vm2824, %v3008, 0
    %v3344 = vsel %vm3020, %v2078, 0
    %3346 = vmatprep.subr.bf16.mxu0 0
    %3347 = vmatpush1.bf16.msra.mxu0 0
    %3348 = vmatprep.subr.bf16.mxu0 0
    %3349 = vmatpush1.bf16.msra.mxu0 0
    %3350 = vmatprep.subr.bf16.mxu0 0
    %3351 = vmatpush1.bf16.msra.mxu0 0
    %3352 = vmatprep.subr.bf16.mxu0 0
    %3353 = vmatpush1.bf16.msra.mxu0 0
    %3354 = vmatprep.subr.bf16.mxu0 0
    %3355 = vmatpush1.bf16.msra.mxu0 0
    %3356 = vmatprep.subr.bf16.mxu0 0
    %3357 = vmatpush1.bf16.msra.mxu0 0
    %3358 = vmatprep.subr.bf16.mxu0 0
    %3359 = vmatpush1.bf16.msra.mxu0 0
    %3360 = vmatprep.subr.bf16.mxu0 0
    %3361 = vmatpush1.bf16.msra.mxu0 %v3344
    %3362 = vmatprep.subr.bf16.mxu0 0
    %3363 = vmatpush2.bf16.msra.mxu0 0
    %3364 = vmatprep.subr.bf16.mxu0 0
    %3365 = vmatpush2.bf16.msra.mxu0 0
    %3366 = vmatprep.subr.bf16.mxu0 0
    %3367 = vmatpush2.bf16.msra.mxu0 0
    %3368 = vmatprep.subr.bf16.mxu0 0
    %3369 = vmatpush2.bf16.msra.mxu0 0
    %3370 = vmatprep.subr.bf16.mxu0 0
    %3371 = vmatpush2.bf16.msra.mxu0 0
    %3372 = vmatprep.subr.bf16.mxu0 0
    %3373 = vmatpush2.bf16.msra.mxu0 0
    %3374 = vmatprep.subr.bf16.mxu0 0
    %3375 = vmatpush2.bf16.msra.mxu0 0
    %3376 = vmatprep.subr.bf16.mxu0 0
    %3377 = vmatpush2.bf16.msra.mxu0 0
    %3378 = vmatprep.mubr.bf16.mxu0 0
    %3379 = vmatmul.mubr.bf16.gmra.mxu0 %v3341
    %v3380 = vpop.f32.mrf.mxu0
    %v3381 = vadd.f32 0.0, %v3380
    %v3382 = vpop.f32.mrf.mxu0
    %v3383 = vpop.f32.mrf.mxu0
    %v3384 = vpop.f32.mrf.mxu0
    %3385 = vdwg.mxu0
    %v3387 = vsel %vm2824, %v3009, 0
    %v3390 = vsel %vm3020, %v2079, 0
    %3392 = vmatprep.subr.bf16.mxu0 0
    %3393 = vmatpush1.bf16.msra.mxu0 0
    %3394 = vmatprep.subr.bf16.mxu0 0
    %3395 = vmatpush1.bf16.msra.mxu0 0
    %3396 = vmatprep.subr.bf16.mxu0 0
    %3397 = vmatpush1.bf16.msra.mxu0 0
    %3398 = vmatprep.subr.bf16.mxu0 0
    %3399 = vmatpush1.bf16.msra.mxu0 0
    %3400 = vmatprep.subr.bf16.mxu0 0
    %3401 = vmatpush1.bf16.msra.mxu0 0
    %3402 = vmatprep.subr.bf16.mxu0 0
    %3403 = vmatpush1.bf16.msra.mxu0 0
    %3404 = vmatprep.subr.bf16.mxu0 0
    %3405 = vmatpush1.bf16.msra.mxu0 0
    %3406 = vmatprep.subr.bf16.mxu0 0
    %3407 = vmatpush1.bf16.msra.mxu0 %v3390
    %3408 = vmatprep.subr.bf16.mxu0 0
    %3409 = vmatpush2.bf16.msra.mxu0 0
    %3410 = vmatprep.subr.bf16.mxu0 0
    %3411 = vmatpush2.bf16.msra.mxu0 0
    %3412 = vmatprep.subr.bf16.mxu0 0
    %3413 = vmatpush2.bf16.msra.mxu0 0
    %3414 = vmatprep.subr.bf16.mxu0 0
    %3415 = vmatpush2.bf16.msra.mxu0 0
    %3416 = vmatprep.subr.bf16.mxu0 0
    %3417 = vmatpush2.bf16.msra.mxu0 0
    %3418 = vmatprep.subr.bf16.mxu0 0
    %3419 = vmatpush2.bf16.msra.mxu0 0
    %3420 = vmatprep.subr.bf16.mxu0 0
    %3421 = vmatpush2.bf16.msra.mxu0 0
    %3422 = vmatprep.subr.bf16.mxu0 0
    %3423 = vmatpush2.bf16.msra.mxu0 0
    %3424 = vmatprep.mubr.bf16.mxu0 0
    %3425 = vmatmul.mubr.bf16.gmra.mxu0 %v3387
    %v3426 = vpop.f32.mrf.mxu0
    %v3427 = vadd.f32 0.0, %v3426
    %v3428 = vpop.f32.mrf.mxu0
    %v3429 = vpop.f32.mrf.mxu0
    %v3430 = vpop.f32.mrf.mxu0
    %3431 = vdwg.mxu0
    %v3433 = vsel %vm2824, %v3010, 0
    %v3436 = vsel %vm3020, %v2080, 0
    %3438 = vmatprep.subr.bf16.mxu0 0
    %3439 = vmatpush1.bf16.msra.mxu0 0
    %3440 = vmatprep.subr.bf16.mxu0 0
    %3441 = vmatpush1.bf16.msra.mxu0 0
    %3442 = vmatprep.subr.bf16.mxu0 0
    %3443 = vmatpush1.bf16.msra.mxu0 0
    %3444 = vmatprep.subr.bf16.mxu0 0
    %3445 = vmatpush1.bf16.msra.mxu0 0
    %3446 = vmatprep.subr.bf16.mxu0 0
    %3447 = vmatpush1.bf16.msra.mxu0 0
    %3448 = vmatprep.subr.bf16.mxu0 0
    %3449 = vmatpush1.bf16.msra.mxu0 0
    %3450 = vmatprep.subr.bf16.mxu0 0
    %3451 = vmatpush1.bf16.msra.mxu0 0
    %3452 = vmatprep.subr.bf16.mxu0 0
    %3453 = vmatpush1.bf16.msra.mxu0 %v3436
    %3454 = vmatprep.subr.bf16.mxu0 0
    %3455 = vmatpush2.bf16.msra.mxu0 0
    %3456 = vmatprep.subr.bf16.mxu0 0
    %3457 = vmatpush2.bf16.msra.mxu0 0
    %3458 = vmatprep.subr.bf16.mxu0 0
    %3459 = vmatpush2.bf16.msra.mxu0 0
    %3460 = vmatprep.subr.bf16.mxu0 0
    %3461 = vmatpush2.bf16.msra.mxu0 0
    %3462 = vmatprep.subr.bf16.mxu0 0
    %3463 = vmatpush2.bf16.msra.mxu0 0
    %3464 = vmatprep.subr.bf16.mxu0 0
    %3465 = vmatpush2.bf16.msra.mxu0 0
    %3466 = vmatprep.subr.bf16.mxu0 0
    %3467 = vmatpush2.bf16.msra.mxu0 0
    %3468 = vmatprep.subr.bf16.mxu0 0
    %3469 = vmatpush2.bf16.msra.mxu0 0
    %3470 = vmatprep.mubr.bf16.mxu0 0
    %3471 = vmatmul.mubr.bf16.gmra.mxu0 %v3433
    %v3472 = vpop.f32.mrf.mxu0
    %v3473 = vadd.f32 0.0, %v3472
    %v3474 = vpop.f32.mrf.mxu0
    %v3475 = vpop.f32.mrf.mxu0
    %v3476 = vpop.f32.mrf.mxu0
    %3477 = vdwg.mxu0
    %v3479 = vsel %vm2824, %v3011, 0
    %v3482 = vsel %vm3020, %v2081, 0
    %3484 = vmatprep.subr.bf16.mxu0 0
    %3485 = vmatpush1.bf16.msra.mxu0 0
    %3486 = vmatprep.subr.bf16.mxu0 0
    %3487 = vmatpush1.bf16.msra.mxu0 0
    %3488 = vmatprep.subr.bf16.mxu0 0
    %3489 = vmatpush1.bf16.msra.mxu0 0
    %3490 = vmatprep.subr.bf16.mxu0 0
    %3491 = vmatpush1.bf16.msra.mxu0 0
    %3492 = vmatprep.subr.bf16.mxu0 0
    %3493 = vmatpush1.bf16.msra.mxu0 0
    %3494 = vmatprep.subr.bf16.mxu0 0
    %3495 = vmatpush1.bf16.msra.mxu0 0
    %3496 = vmatprep.subr.bf16.mxu0 0
    %3497 = vmatpush1.bf16.msra.mxu0 0
    %3498 = vmatprep.subr.bf16.mxu0 0
    %3499 = vmatpush1.bf16.msra.mxu0 %v3482
    %3500 = vmatprep.subr.bf16.mxu0 0
    %3501 = vmatpush2.bf16.msra.mxu0 0
    %3502 = vmatprep.subr.bf16.mxu0 0
    %3503 = vmatpush2.bf16.msra.mxu0 0
    %3504 = vmatprep.subr.bf16.mxu0 0
    %3505 = vmatpush2.bf16.msra.mxu0 0
    %3506 = vmatprep.subr.bf16.mxu0 0
    %3507 = vmatpush2.bf16.msra.mxu0 0
    %3508 = vmatprep.subr.bf16.mxu0 0
    %3509 = vmatpush2.bf16.msra.mxu0 0
    %3510 = vmatprep.subr.bf16.mxu0 0
    %3511 = vmatpush2.bf16.msra.mxu0 0
    %3512 = vmatprep.subr.bf16.mxu0 0
    %3513 = vmatpush2.bf16.msra.mxu0 0
    %3514 = vmatprep.subr.bf16.mxu0 0
    %3515 = vmatpush2.bf16.msra.mxu0 0
    %3516 = vmatprep.mubr.bf16.mxu0 0
    %3517 = vmatmul.mubr.bf16.gmra.mxu0 %v3479
    %v3518 = vpop.f32.mrf.mxu0
    %v3519 = vadd.f32 0.0, %v3518
    %v3520 = vpop.f32.mrf.mxu0
    %v3521 = vpop.f32.mrf.mxu0
    %v3522 = vpop.f32.mrf.mxu0
    %3523 = vdwg.mxu0
    %v3525 = vsel %vm2824, %v3012, 0
    %v3528 = vsel %vm3020, %v2082, 0
    %3530 = vmatprep.subr.bf16.mxu0 0
    %3531 = vmatpush1.bf16.msra.mxu0 0
    %3532 = vmatprep.subr.bf16.mxu0 0
    %3533 = vmatpush1.bf16.msra.mxu0 0
    %3534 = vmatprep.subr.bf16.mxu0 0
    %3535 = vmatpush1.bf16.msra.mxu0 0
    %3536 = vmatprep.subr.bf16.mxu0 0
    %3537 = vmatpush1.bf16.msra.mxu0 0
    %3538 = vmatprep.subr.bf16.mxu0 0
    %3539 = vmatpush1.bf16.msra.mxu0 0
    %3540 = vmatprep.subr.bf16.mxu0 0
    %3541 = vmatpush1.bf16.msra.mxu0 0
    %3542 = vmatprep.subr.bf16.mxu0 0
    %3543 = vmatpush1.bf16.msra.mxu0 0
    %3544 = vmatprep.subr.bf16.mxu0 0
    %3545 = vmatpush1.bf16.msra.mxu0 %v3528
    %3546 = vmatprep.subr.bf16.mxu0 0
    %3547 = vmatpush2.bf16.msra.mxu0 0
    %3548 = vmatprep.subr.bf16.mxu0 0
    %3549 = vmatpush2.bf16.msra.mxu0 0
    %3550 = vmatprep.subr.bf16.mxu0 0
    %3551 = vmatpush2.bf16.msra.mxu0 0
    %3552 = vmatprep.subr.bf16.mxu0 0
    %3553 = vmatpush2.bf16.msra.mxu0 0
    %3554 = vmatprep.subr.bf16.mxu0 0
    %3555 = vmatpush2.bf16.msra.mxu0 0
    %3556 = vmatprep.subr.bf16.mxu0 0
    %3557 = vmatpush2.bf16.msra.mxu0 0
    %3558 = vmatprep.subr.bf16.mxu0 0
    %3559 = vmatpush2.bf16.msra.mxu0 0
    %3560 = vmatprep.subr.bf16.mxu0 0
    %3561 = vmatpush2.bf16.msra.mxu0 0
    %3562 = vmatprep.mubr.bf16.mxu0 0
    %3563 = vmatmul.mubr.bf16.gmra.mxu0 %v3525
    %v3564 = vpop.f32.mrf.mxu0
    %v3565 = vadd.f32 0.0, %v3564
    %v3566 = vpop.f32.mrf.mxu0
    %v3567 = vpop.f32.mrf.mxu0
    %v3568 = vpop.f32.mrf.mxu0
    %3569 = vdwg.mxu0
    %v3571 = vsel %vm2824, %v3013, 0
    %v3574 = vsel %vm3020, %v2083, 0
    %3576 = vmatprep.subr.bf16.mxu0 0
    %3577 = vmatpush1.bf16.msra.mxu0 0
    %3578 = vmatprep.subr.bf16.mxu0 0
    %3579 = vmatpush1.bf16.msra.mxu0 0
    %3580 = vmatprep.subr.bf16.mxu0 0
    %3581 = vmatpush1.bf16.msra.mxu0 0
    %3582 = vmatprep.subr.bf16.mxu0 0
    %3583 = vmatpush1.bf16.msra.mxu0 0
    %3584 = vmatprep.subr.bf16.mxu0 0
    %3585 = vmatpush1.bf16.msra.mxu0 0
    %3586 = vmatprep.subr.bf16.mxu0 0
    %3587 = vmatpush1.bf16.msra.mxu0 0
    %3588 = vmatprep.subr.bf16.mxu0 0
    %3589 = vmatpush1.bf16.msra.mxu0 0
    %3590 = vmatprep.subr.bf16.mxu0 0
    %3591 = vmatpush1.bf16.msra.mxu0 %v3574
    %3592 = vmatprep.subr.bf16.mxu0 0
    %3593 = vmatpush2.bf16.msra.mxu0 0
    %3594 = vmatprep.subr.bf16.mxu0 0
    %3595 = vmatpush2.bf16.msra.mxu0 0
    %3596 = vmatprep.subr.bf16.mxu0 0
    %3597 = vmatpush2.bf16.msra.mxu0 0
    %3598 = vmatprep.subr.bf16.mxu0 0
    %3599 = vmatpush2.bf16.msra.mxu0 0
    %3600 = vmatprep.subr.bf16.mxu0 0
    %3601 = vmatpush2.bf16.msra.mxu0 0
    %3602 = vmatprep.subr.bf16.mxu0 0
    %3603 = vmatpush2.bf16.msra.mxu0 0
    %3604 = vmatprep.subr.bf16.mxu0 0
    %3605 = vmatpush2.bf16.msra.mxu0 0
    %3606 = vmatprep.subr.bf16.mxu0 0
    %3607 = vmatpush2.bf16.msra.mxu0 0
    %3608 = vmatprep.mubr.bf16.mxu0 0
    %3609 = vmatmul.mubr.bf16.gmra.mxu0 %v3571
    %v3610 = vpop.f32.mrf.mxu0
    %v3611 = vadd.f32 0.0, %v3610
    %v3612 = vpop.f32.mrf.mxu0
    %v3613 = vpop.f32.mrf.mxu0
    %v3614 = vpop.f32.mrf.mxu0
    %3615 = vdwg.mxu0
    %v3617 = vsel %vm2824, %v3014, 0
    %v3620 = vsel %vm3020, %v2084, 0
    %3622 = vmatprep.subr.bf16.mxu0 0
    %3623 = vmatpush1.bf16.msra.mxu0 0
    %3624 = vmatprep.subr.bf16.mxu0 0
    %3625 = vmatpush1.bf16.msra.mxu0 0
    %3626 = vmatprep.subr.bf16.mxu0 0
    %3627 = vmatpush1.bf16.msra.mxu0 0
    %3628 = vmatprep.subr.bf16.mxu0 0
    %3629 = vmatpush1.bf16.msra.mxu0 0
    %3630 = vmatprep.subr.bf16.mxu0 0
    %3631 = vmatpush1.bf16.msra.mxu0 0
    %3632 = vmatprep.subr.bf16.mxu0 0
    %3633 = vmatpush1.bf16.msra.mxu0 0
    %3634 = vmatprep.subr.bf16.mxu0 0
    %3635 = vmatpush1.bf16.msra.mxu0 0
    %3636 = vmatprep.subr.bf16.mxu0 0
    %3637 = vmatpush1.bf16.msra.mxu0 %v3620
    %3638 = vmatprep.subr.bf16.mxu0 0
    %3639 = vmatpush2.bf16.msra.mxu0 0
    %3640 = vmatprep.subr.bf16.mxu0 0
    %3641 = vmatpush2.bf16.msra.mxu0 0
    %3642 = vmatprep.subr.bf16.mxu0 0
    %3643 = vmatpush2.bf16.msra.mxu0 0
    %3644 = vmatprep.subr.bf16.mxu0 0
    %3645 = vmatpush2.bf16.msra.mxu0 0
    %3646 = vmatprep.subr.bf16.mxu0 0
    %3647 = vmatpush2.bf16.msra.mxu0 0
    %3648 = vmatprep.subr.bf16.mxu0 0
    %3649 = vmatpush2.bf16.msra.mxu0 0
    %3650 = vmatprep.subr.bf16.mxu0 0
    %3651 = vmatpush2.bf16.msra.mxu0 0
    %3652 = vmatprep.subr.bf16.mxu0 0
    %3653 = vmatpush2.bf16.msra.mxu0 0
    %3654 = vmatprep.mubr.bf16.mxu0 0
    %3655 = vmatmul.mubr.bf16.gmra.mxu0 %v3617
    %v3656 = vpop.f32.mrf.mxu0
    %v3657 = vadd.f32 0.0, %v3656
    %v3658 = vpop.f32.mrf.mxu0
    %v3659 = vpop.f32.mrf.mxu0
    %v3660 = vpop.f32.mrf.mxu0
    %3661 = vdwg.mxu0
    %v3663 = vsel %vm2824, %v3015, 0
    %v3666 = vsel %vm3020, %v2085, 0
    %3668 = vmatprep.subr.bf16.mxu0 0
    %3669 = vmatpush1.bf16.msra.mxu0 0
    %3670 = vmatprep.subr.bf16.mxu0 0
    %3671 = vmatpush1.bf16.msra.mxu0 0
    %3672 = vmatprep.subr.bf16.mxu0 0
    %3673 = vmatpush1.bf16.msra.mxu0 0
    %3674 = vmatprep.subr.bf16.mxu0 0
    %3675 = vmatpush1.bf16.msra.mxu0 0
    %3676 = vmatprep.subr.bf16.mxu0 0
    %3677 = vmatpush1.bf16.msra.mxu0 0
    %3678 = vmatprep.subr.bf16.mxu0 0
    %3679 = vmatpush1.bf16.msra.mxu0 0
    %3680 = vmatprep.subr.bf16.mxu0 0
    %3681 = vmatpush1.bf16.msra.mxu0 0
    %3682 = vmatprep.subr.bf16.mxu0 0
    %3683 = vmatpush1.bf16.msra.mxu0 %v3666
    %3684 = vmatprep.subr.bf16.mxu0 0
    %3685 = vmatpush2.bf16.msra.mxu0 0
    %3686 = vmatprep.subr.bf16.mxu0 0
    %3687 = vmatpush2.bf16.msra.mxu0 0
    %3688 = vmatprep.subr.bf16.mxu0 0
    %3689 = vmatpush2.bf16.msra.mxu0 0
    %3690 = vmatprep.subr.bf16.mxu0 0
    %3691 = vmatpush2.bf16.msra.mxu0 0
    %3692 = vmatprep.subr.bf16.mxu0 0
    %3693 = vmatpush2.bf16.msra.mxu0 0
    %3694 = vmatprep.subr.bf16.mxu0 0
    %3695 = vmatpush2.bf16.msra.mxu0 0
    %3696 = vmatprep.subr.bf16.mxu0 0
    %3697 = vmatpush2.bf16.msra.mxu0 0
    %3698 = vmatprep.subr.bf16.mxu0 0
    %3699 = vmatpush2.bf16.msra.mxu0 0
    %3700 = vmatprep.mubr.bf16.mxu0 0
    %3701 = vmatmul.mubr.bf16.gmra.mxu0 %v3663
    %v3702 = vpop.f32.mrf.mxu0
    %v3703 = vadd.f32 0.0, %v3702
    %v3704 = vpop.f32.mrf.mxu0
    %v3705 = vpop.f32.mrf.mxu0
    %v3706 = vpop.f32.mrf.mxu0
    %3707 = vdwg.mxu0
    %v3709 = vsel %vm2824, %v3016, 0
    %v3712 = vsel %vm3020, %v2086, 0
    %3714 = vmatprep.subr.bf16.mxu0 0
    %3715 = vmatpush1.bf16.msra.mxu0 0
    %3716 = vmatprep.subr.bf16.mxu0 0
    %3717 = vmatpush1.bf16.msra.mxu0 0
    %3718 = vmatprep.subr.bf16.mxu0 0
    %3719 = vmatpush1.bf16.msra.mxu0 0
    %3720 = vmatprep.subr.bf16.mxu0 0
    %3721 = vmatpush1.bf16.msra.mxu0 0
    %3722 = vmatprep.subr.bf16.mxu0 0
    %3723 = vmatpush1.bf16.msra.mxu0 0
    %3724 = vmatprep.subr.bf16.mxu0 0
    %3725 = vmatpush1.bf16.msra.mxu0 0
    %3726 = vmatprep.subr.bf16.mxu0 0
    %3727 = vmatpush1.bf16.msra.mxu0 0
    %3728 = vmatprep.subr.bf16.mxu0 0
    %3729 = vmatpush1.bf16.msra.mxu0 %v3712
    %3730 = vmatprep.subr.bf16.mxu0 0
    %3731 = vmatpush2.bf16.msra.mxu0 0
    %3732 = vmatprep.subr.bf16.mxu0 0
    %3733 = vmatpush2.bf16.msra.mxu0 0
    %3734 = vmatprep.subr.bf16.mxu0 0
    %3735 = vmatpush2.bf16.msra.mxu0 0
    %3736 = vmatprep.subr.bf16.mxu0 0
    %3737 = vmatpush2.bf16.msra.mxu0 0
    %3738 = vmatprep.subr.bf16.mxu0 0
    %3739 = vmatpush2.bf16.msra.mxu0 0
    %3740 = vmatprep.subr.bf16.mxu0 0
    %3741 = vmatpush2.bf16.msra.mxu0 0
    %3742 = vmatprep.subr.bf16.mxu0 0
    %3743 = vmatpush2.bf16.msra.mxu0 0
    %3744 = vmatprep.subr.bf16.mxu0 0
    %3745 = vmatpush2.bf16.msra.mxu0 0
    %3746 = vmatprep.mubr.bf16.mxu0 0
    %3747 = vmatmul.mubr.bf16.gmra.mxu0 %v3709
    %v3748 = vpop.f32.mrf.mxu0
    %v3749 = vadd.f32 0.0, %v3748
    %v3750 = vpop.f32.mrf.mxu0
    %v3751 = vpop.f32.mrf.mxu0
    %v3752 = vpop.f32.mrf.mxu0
    %3753 = vdwg.mxu0
    %v3754 = vcombine.low %v3059, %v3151
    %v3755 = vcombine.high %v3059, %v3151
    %v3757 = vunpack.c.l.s4 1983009808
    %v3758 = vunpack.c.0.s8 %v3757
    %v3759 = vlaneseq
    %v3760 = vshrl.u32 %v3759, 7
    %v3761 = vsub.s32 %v3758, %v3760
    %v3762 = vrot.slane %v3754, %v3761
    %v3764 = vunpack.c.l.s4 1983009808
    %v3765 = vunpack.c.0.s8 %v3764
    %v3766 = vlaneseq
    %v3767 = vshrl.u32 %v3766, 7
    %v3768 = vsub.s32 %v3765, %v3767
    %v3769 = vrot.slane %v3755, %v3768
    %v3770 = vcombine.low %v3105, %v3197
    %v3771 = vcombine.high %v3105, %v3197
    %v3773 = vunpack.c.l.s4 1983009808
    %v3774 = vunpack.c.0.s8 %v3773
    %v3775 = vlaneseq
    %v3776 = vshrl.u32 %v3775, 7
    %v3777 = vsub.s32 %v3774, %v3776
    %v3778 = vrot.slane %v3770, %v3777
    %v3780 = vunpack.c.l.s4 1983009808
    %v3781 = vunpack.c.0.s8 %v3780
    %v3782 = vlaneseq
    %v3783 = vshrl.u32 %v3782, 7
    %v3784 = vsub.s32 %v3781, %v3783
    %v3785 = vrot.slane %v3771, %v3784
    %v3786 = vcombine.low %v3243, %v3335
    %v3787 = vcombine.high %v3243, %v3335
    %v3789 = vunpack.c.l.s4 1983009808
    %v3790 = vunpack.c.0.s8 %v3789
    %v3791 = vlaneseq
    %v3792 = vshrl.u32 %v3791, 7
    %v3793 = vsub.s32 %v3790, %v3792
    %v3794 = vrot.slane %v3786, %v3793
    %v3796 = vunpack.c.l.s4 1983009808
    %v3797 = vunpack.c.0.s8 %v3796
    %v3798 = vlaneseq
    %v3799 = vshrl.u32 %v3798, 7
    %v3800 = vsub.s32 %v3797, %v3799
    %v3801 = vrot.slane %v3787, %v3800
    %v3802 = vcombine.low %v3289, %v3381
    %v3803 = vcombine.high %v3289, %v3381
    %v3805 = vunpack.c.l.s4 1983009808
    %v3806 = vunpack.c.0.s8 %v3805
    %v3807 = vlaneseq
    %v3808 = vshrl.u32 %v3807, 7
    %v3809 = vsub.s32 %v3806, %v3808
    %v3810 = vrot.slane %v3802, %v3809
    %v3812 = vunpack.c.l.s4 1983009808
    %v3813 = vunpack.c.0.s8 %v3812
    %v3814 = vlaneseq
    %v3815 = vshrl.u32 %v3814, 7
    %v3816 = vsub.s32 %v3813, %v3815
    %v3817 = vrot.slane %v3803, %v3816
    %v3818 = vcombine.low %v3762, %v3778
    %v3819 = vcombine.high %v3762, %v3778
    %v3821 = vunpack.c.l.s4 1934713408
    %v3822 = vunpack.c.0.s8 %v3821
    %v3823 = vlaneseq
    %v3824 = vshrl.u32 %v3823, 7
    %v3825 = vsub.s32 %v3822, %v3824
    %v3826 = vrot.slane %v3818, %v3825
    %v3828 = vunpack.c.l.s4 1934713408
    %v3829 = vunpack.c.0.s8 %v3828
    %v3830 = vlaneseq
    %v3831 = vshrl.u32 %v3830, 7
    %v3832 = vsub.s32 %v3829, %v3831
    %v3833 = vrot.slane %v3819, %v3832
    %v3834 = vcombine.low %v3769, %v3785
    %v3835 = vcombine.high %v3769, %v3785
    %v3837 = vunpack.c.l.s4 1934713408
    %v3838 = vunpack.c.0.s8 %v3837
    %v3839 = vlaneseq
    %v3840 = vshrl.u32 %v3839, 7
    %v3841 = vsub.s32 %v3838, %v3840
    %v3842 = vrot.slane %v3834, %v3841
    %v3844 = vunpack.c.l.s4 1934713408
    %v3845 = vunpack.c.0.s8 %v3844
    %v3846 = vlaneseq
    %v3847 = vshrl.u32 %v3846, 7
    %v3848 = vsub.s32 %v3845, %v3847
    %v3849 = vrot.slane %v3835, %v3848
    %v3850 = vcombine.low %v3794, %v3810
    %v3851 = vcombine.high %v3794, %v3810
    %v3853 = vunpack.c.l.s4 1934713408
    %v3854 = vunpack.c.0.s8 %v3853
    %v3855 = vlaneseq
    %v3856 = vshrl.u32 %v3855, 7
    %v3857 = vsub.s32 %v3854, %v3856
    %v3858 = vrot.slane %v3850, %v3857
    %v3860 = vunpack.c.l.s4 1934713408
    %v3861 = vunpack.c.0.s8 %v3860
    %v3862 = vlaneseq
    %v3863 = vshrl.u32 %v3862, 7
    %v3864 = vsub.s32 %v3861, %v3863
    %v3865 = vrot.slane %v3851, %v3864
    %v3866 = vcombine.low %v3801, %v3817
    %v3867 = vcombine.high %v3801, %v3817
    %v3869 = vunpack.c.l.s4 1934713408
    %v3870 = vunpack.c.0.s8 %v3869
    %v3871 = vlaneseq
    %v3872 = vshrl.u32 %v3871, 7
    %v3873 = vsub.s32 %v3870, %v3872
    %v3874 = vrot.slane %v3866, %v3873
    %v3876 = vunpack.c.l.s4 1934713408
    %v3877 = vunpack.c.0.s8 %v3876
    %v3878 = vlaneseq
    %v3879 = vshrl.u32 %v3878, 7
    %v3880 = vsub.s32 %v3877, %v3879
    %v3881 = vrot.slane %v3867, %v3880
    %v3882 = vcombine.low %v3826, %v3858
    %v3883 = vcombine.high %v3826, %v3858
    %v3884 = vcombine.low %v3833, %v3865
    %v3885 = vcombine.high %v3833, %v3865
    %v3886 = vcombine.low %v3842, %v3874
    %v3887 = vcombine.high %v3842, %v3874
    %v3888 = vcombine.low %v3849, %v3881
    %v3889 = vcombine.high %v3849, %v3881
    %v3890 = vcombine.low %v3427, %v3519
    %v3891 = vcombine.high %v3427, %v3519
    %v3893 = vunpack.c.l.s4 1983009808
    %v3894 = vunpack.c.0.s8 %v3893
    %v3895 = vlaneseq
    %v3896 = vshrl.u32 %v3895, 7
    %v3897 = vsub.s32 %v3894, %v3896
    %v3898 = vrot.slane %v3890, %v3897
    %v3900 = vunpack.c.l.s4 1983009808
    %v3901 = vunpack.c.0.s8 %v3900
    %v3902 = vlaneseq
    %v3903 = vshrl.u32 %v3902, 7
    %v3904 = vsub.s32 %v3901, %v3903
    %v3905 = vrot.slane %v3891, %v3904
    %v3906 = vcombine.low %v3473, %v3565
    %v3907 = vcombine.high %v3473, %v3565
    %v3909 = vunpack.c.l.s4 1983009808
    %v3910 = vunpack.c.0.s8 %v3909
    %v3911 = vlaneseq
    %v3912 = vshrl.u32 %v3911, 7
    %v3913 = vsub.s32 %v3910, %v3912
    %v3914 = vrot.slane %v3906, %v3913
    %v3916 = vunpack.c.l.s4 1983009808
    %v3917 = vunpack.c.0.s8 %v3916
    %v3918 = vlaneseq
    %v3919 = vshrl.u32 %v3918, 7
    %v3920 = vsub.s32 %v3917, %v3919
    %v3921 = vrot.slane %v3907, %v3920
    %v3922 = vcombine.low %v3611, %v3703
    %v3923 = vcombine.high %v3611, %v3703
    %v3925 = vunpack.c.l.s4 1983009808
    %v3926 = vunpack.c.0.s8 %v3925
    %v3927 = vlaneseq
    %v3928 = vshrl.u32 %v3927, 7
    %v3929 = vsub.s32 %v3926, %v3928
    %v3930 = vrot.slane %v3922, %v3929
    %v3932 = vunpack.c.l.s4 1983009808
    %v3933 = vunpack.c.0.s8 %v3932
    %v3934 = vlaneseq
    %v3935 = vshrl.u32 %v3934, 7
    %v3936 = vsub.s32 %v3933, %v3935
    %v3937 = vrot.slane %v3923, %v3936
    %v3938 = vcombine.low %v3657, %v3749
    %v3939 = vcombine.high %v3657, %v3749
    %v3941 = vunpack.c.l.s4 1983009808
    %v3942 = vunpack.c.0.s8 %v3941
    %v3943 = vlaneseq
    %v3944 = vshrl.u32 %v3943, 7
    %v3945 = vsub.s32 %v3942, %v3944
    %v3946 = vrot.slane %v3938, %v3945
    %v3948 = vunpack.c.l.s4 1983009808
    %v3949 = vunpack.c.0.s8 %v3948
    %v3950 = vlaneseq
    %v3951 = vshrl.u32 %v3950, 7
    %v3952 = vsub.s32 %v3949, %v3951
    %v3953 = vrot.slane %v3939, %v3952
    %v3954 = vcombine.low %v3898, %v3914
    %v3955 = vcombine.high %v3898, %v3914
    %v3957 = vunpack.c.l.s4 1934713408
    %v3958 = vunpack.c.0.s8 %v3957
    %v3959 = vlaneseq
    %v3960 = vshrl.u32 %v3959, 7
    %v3961 = vsub.s32 %v3958, %v3960
    %v3962 = vrot.slane %v3954, %v3961
    %v3964 = vunpack.c.l.s4 1934713408
    %v3965 = vunpack.c.0.s8 %v3964
    %v3966 = vlaneseq
    %v3967 = vshrl.u32 %v3966, 7
    %v3968 = vsub.s32 %v3965, %v3967
    %v3969 = vrot.slane %v3955, %v3968
    %v3970 = vcombine.low %v3905, %v3921
    %v3971 = vcombine.high %v3905, %v3921
    %v3973 = vunpack.c.l.s4 1934713408
    %v3974 = vunpack.c.0.s8 %v3973
    %v3975 = vlaneseq
    %v3976 = vshrl.u32 %v3975, 7
    %v3977 = vsub.s32 %v3974, %v3976
    %v3978 = vrot.slane %v3970, %v3977
    %v3980 = vunpack.c.l.s4 1934713408
    %v3981 = vunpack.c.0.s8 %v3980
    %v3982 = vlaneseq
    %v3983 = vshrl.u32 %v3982, 7
    %v3984 = vsub.s32 %v3981, %v3983
    %v3985 = vrot.slane %v3971, %v3984
    %v3986 = vcombine.low %v3930, %v3946
    %v3987 = vcombine.high %v3930, %v3946
    %v3989 = vunpack.c.l.s4 1934713408
    %v3990 = vunpack.c.0.s8 %v3989
    %v3991 = vlaneseq
    %v3992 = vshrl.u32 %v3991, 7
    %v3993 = vsub.s32 %v3990, %v3992
    %v3994 = vrot.slane %v3986, %v3993
    %v3996 = vunpack.c.l.s4 1934713408
    %v3997 = vunpack.c.0.s8 %v3996
    %v3998 = vlaneseq
    %v3999 = vshrl.u32 %v3998, 7
    %v4000 = vsub.s32 %v3997, %v3999
    %v4001 = vrot.slane %v3987, %v4000
    %v4002 = vcombine.low %v3937, %v3953
    %v4003 = vcombine.high %v3937, %v3953
    %v4005 = vunpack.c.l.s4 1934713408
    %v4006 = vunpack.c.0.s8 %v4005
    %v4007 = vlaneseq
    %v4008 = vshrl.u32 %v4007, 7
    %v4009 = vsub.s32 %v4006, %v4008
    %v4010 = vrot.slane %v4002, %v4009
    %v4012 = vunpack.c.l.s4 1934713408
    %v4013 = vunpack.c.0.s8 %v4012
    %v4014 = vlaneseq
    %v4015 = vshrl.u32 %v4014, 7
    %v4016 = vsub.s32 %v4013, %v4015
    %v4017 = vrot.slane %v4003, %v4016
    %v4018 = vcombine.low %v3962, %v3994
    %v4019 = vcombine.high %v3962, %v3994
    %v4020 = vcombine.low %v3969, %v4001
    %v4021 = vcombine.high %v3969, %v4001
    %v4022 = vcombine.low %v3978, %v4010
    %v4023 = vcombine.high %v3978, %v4010
    %v4024 = vcombine.low %v3985, %v4017
    %v4025 = vcombine.high %v3985, %v4017
    %v4026 = vcombine.low %v3882, %v3884
    %v4027 = vcombine.high %v3882, %v3884
    %v4029 = vunpack.c.l.s4 1983009808
    %v4030 = vunpack.c.0.s8 %v4029
    %v4031 = vlaneseq
    %v4032 = vshrl.u32 %v4031, 7
    %v4033 = vsub.s32 %v4030, %v4032
    %v4034 = vrot.slane %v4026, %v4033
    %v4036 = vunpack.c.l.s4 1983009808
    %v4037 = vunpack.c.0.s8 %v4036
    %v4038 = vlaneseq
    %v4039 = vshrl.u32 %v4038, 7
    %v4040 = vsub.s32 %v4037, %v4039
    %v4041 = vrot.slane %v4027, %v4040
    %v4042 = vcombine.low %v3883, %v3885
    %v4043 = vcombine.high %v3883, %v3885
    %v4045 = vunpack.c.l.s4 1983009808
    %v4046 = vunpack.c.0.s8 %v4045
    %v4047 = vlaneseq
    %v4048 = vshrl.u32 %v4047, 7
    %v4049 = vsub.s32 %v4046, %v4048
    %v4050 = vrot.slane %v4042, %v4049
    %v4052 = vunpack.c.l.s4 1983009808
    %v4053 = vunpack.c.0.s8 %v4052
    %v4054 = vlaneseq
    %v4055 = vshrl.u32 %v4054, 7
    %v4056 = vsub.s32 %v4053, %v4055
    %v4057 = vrot.slane %v4043, %v4056
    %v4058 = vcombine.low %v3886, %v3888
    %v4059 = vcombine.high %v3886, %v3888
    %v4061 = vunpack.c.l.s4 1983009808
    %v4062 = vunpack.c.0.s8 %v4061
    %v4063 = vlaneseq
    %v4064 = vshrl.u32 %v4063, 7
    %v4065 = vsub.s32 %v4062, %v4064
    %v4066 = vrot.slane %v4058, %v4065
    %v4068 = vunpack.c.l.s4 1983009808
    %v4069 = vunpack.c.0.s8 %v4068
    %v4070 = vlaneseq
    %v4071 = vshrl.u32 %v4070, 7
    %v4072 = vsub.s32 %v4069, %v4071
    %v4073 = vrot.slane %v4059, %v4072
    %v4074 = vcombine.low %v3887, %v3889
    %v4075 = vcombine.high %v3887, %v3889
    %v4077 = vunpack.c.l.s4 1983009808
    %v4078 = vunpack.c.0.s8 %v4077
    %v4079 = vlaneseq
    %v4080 = vshrl.u32 %v4079, 7
    %v4081 = vsub.s32 %v4078, %v4080
    %v4082 = vrot.slane %v4074, %v4081
    %v4084 = vunpack.c.l.s4 1983009808
    %v4085 = vunpack.c.0.s8 %v4084
    %v4086 = vlaneseq
    %v4087 = vshrl.u32 %v4086, 7
    %v4088 = vsub.s32 %v4085, %v4087
    %v4089 = vrot.slane %v4075, %v4088
    %v4090 = vcombine.low %v4034, %v4050
    %v4091 = vcombine.high %v4034, %v4050
    %v4093 = vunpack.c.l.s4 1934713408
    %v4094 = vunpack.c.0.s8 %v4093
    %v4095 = vlaneseq
    %v4096 = vshrl.u32 %v4095, 7
    %v4097 = vsub.s32 %v4094, %v4096
    %v4098 = vrot.slane %v4090, %v4097
    %v4100 = vunpack.c.l.s4 1934713408
    %v4101 = vunpack.c.0.s8 %v4100
    %v4102 = vlaneseq
    %v4103 = vshrl.u32 %v4102, 7
    %v4104 = vsub.s32 %v4101, %v4103
    %v4105 = vrot.slane %v4091, %v4104
    %v4106 = vcombine.low %v4041, %v4057
    %v4107 = vcombine.high %v4041, %v4057
    %v4109 = vunpack.c.l.s4 1934713408
    %v4110 = vunpack.c.0.s8 %v4109
    %v4111 = vlaneseq
    %v4112 = vshrl.u32 %v4111, 7
    %v4113 = vsub.s32 %v4110, %v4112
    %v4114 = vrot.slane %v4106, %v4113
    %v4116 = vunpack.c.l.s4 1934713408
    %v4117 = vunpack.c.0.s8 %v4116
    %v4118 = vlaneseq
    %v4119 = vshrl.u32 %v4118, 7
    %v4120 = vsub.s32 %v4117, %v4119
    %v4121 = vrot.slane %v4107, %v4120
    %v4122 = vcombine.low %v4066, %v4082
    %v4123 = vcombine.high %v4066, %v4082
    %v4125 = vunpack.c.l.s4 1934713408
    %v4126 = vunpack.c.0.s8 %v4125
    %v4127 = vlaneseq
    %v4128 = vshrl.u32 %v4127, 7
    %v4129 = vsub.s32 %v4126, %v4128
    %v4130 = vrot.slane %v4122, %v4129
    %v4132 = vunpack.c.l.s4 1934713408
    %v4133 = vunpack.c.0.s8 %v4132
    %v4134 = vlaneseq
    %v4135 = vshrl.u32 %v4134, 7
    %v4136 = vsub.s32 %v4133, %v4135
    %v4137 = vrot.slane %v4123, %v4136
    %v4138 = vcombine.low %v4073, %v4089
    %v4139 = vcombine.high %v4073, %v4089
    %v4141 = vunpack.c.l.s4 1934713408
    %v4142 = vunpack.c.0.s8 %v4141
    %v4143 = vlaneseq
    %v4144 = vshrl.u32 %v4143, 7
    %v4145 = vsub.s32 %v4142, %v4144
    %v4146 = vrot.slane %v4138, %v4145
    %v4148 = vunpack.c.l.s4 1934713408
    %v4149 = vunpack.c.0.s8 %v4148
    %v4150 = vlaneseq
    %v4151 = vshrl.u32 %v4150, 7
    %v4152 = vsub.s32 %v4149, %v4151
    %v4153 = vrot.slane %v4139, %v4152
    %v4154 = vcombine.low %v4098, %v4130
    %v4155 = vcombine.high %v4098, %v4130
    %v4156 = vcombine.low %v4105, %v4137
    %v4157 = vcombine.high %v4105, %v4137
    %v4158 = vcombine.low %v4114, %v4146
    %v4159 = vcombine.high %v4114, %v4146
    %v4160 = vcombine.low %v4121, %v4153
    %v4161 = vcombine.high %v4121, %v4153
    %v4162 = vcombine.low %v4018, %v4020
    %v4163 = vcombine.high %v4018, %v4020
    %v4165 = vunpack.c.l.s4 1983009808
    %v4166 = vunpack.c.0.s8 %v4165
    %v4167 = vlaneseq
    %v4168 = vshrl.u32 %v4167, 7
    %v4169 = vsub.s32 %v4166, %v4168
    %v4170 = vrot.slane %v4162, %v4169
    %v4172 = vunpack.c.l.s4 1983009808
    %v4173 = vunpack.c.0.s8 %v4172
    %v4174 = vlaneseq
    %v4175 = vshrl.u32 %v4174, 7
    %v4176 = vsub.s32 %v4173, %v4175
    %v4177 = vrot.slane %v4163, %v4176
    %v4178 = vcombine.low %v4019, %v4021
    %v4179 = vcombine.high %v4019, %v4021
    %v4181 = vunpack.c.l.s4 1983009808
    %v4182 = vunpack.c.0.s8 %v4181
    %v4183 = vlaneseq
    %v4184 = vshrl.u32 %v4183, 7
    %v4185 = vsub.s32 %v4182, %v4184
    %v4186 = vrot.slane %v4178, %v4185
    %v4188 = vunpack.c.l.s4 1983009808
    %v4189 = vunpack.c.0.s8 %v4188
    %v4190 = vlaneseq
    %v4191 = vshrl.u32 %v4190, 7
    %v4192 = vsub.s32 %v4189, %v4191
    %v4193 = vrot.slane %v4179, %v4192
    %v4194 = vcombine.low %v4022, %v4024
    %v4195 = vcombine.high %v4022, %v4024
    %v4197 = vunpack.c.l.s4 1983009808
    %v4198 = vunpack.c.0.s8 %v4197
    %v4199 = vlaneseq
    %v4200 = vshrl.u32 %v4199, 7
    %v4201 = vsub.s32 %v4198, %v4200
    %v4202 = vrot.slane %v4194, %v4201
    %v4204 = vunpack.c.l.s4 1983009808
    %v4205 = vunpack.c.0.s8 %v4204
    %v4206 = vlaneseq
    %v4207 = vshrl.u32 %v4206, 7
    %v4208 = vsub.s32 %v4205, %v4207
    %v4209 = vrot.slane %v4195, %v4208
    %v4210 = vcombine.low %v4023, %v4025
    %v4211 = vcombine.high %v4023, %v4025
    %v4213 = vunpack.c.l.s4 1983009808
    %v4214 = vunpack.c.0.s8 %v4213
    %v4215 = vlaneseq
    %v4216 = vshrl.u32 %v4215, 7
    %v4217 = vsub.s32 %v4214, %v4216
    %v4218 = vrot.slane %v4210, %v4217
    %v4220 = vunpack.c.l.s4 1983009808
    %v4221 = vunpack.c.0.s8 %v4220
    %v4222 = vlaneseq
    %v4223 = vshrl.u32 %v4222, 7
    %v4224 = vsub.s32 %v4221, %v4223
    %v4225 = vrot.slane %v4211, %v4224
    %v4226 = vcombine.low %v4170, %v4186
    %v4227 = vcombine.high %v4170, %v4186
    %v4229 = vunpack.c.l.s4 1934713408
    %v4230 = vunpack.c.0.s8 %v4229
    %v4231 = vlaneseq
    %v4232 = vshrl.u32 %v4231, 7
    %v4233 = vsub.s32 %v4230, %v4232
    %v4234 = vrot.slane %v4226, %v4233
    %v4236 = vunpack.c.l.s4 1934713408
    %v4237 = vunpack.c.0.s8 %v4236
    %v4238 = vlaneseq
    %v4239 = vshrl.u32 %v4238, 7
    %v4240 = vsub.s32 %v4237, %v4239
    %v4241 = vrot.slane %v4227, %v4240
    %v4242 = vcombine.low %v4177, %v4193
    %v4243 = vcombine.high %v4177, %v4193
    %v4245 = vunpack.c.l.s4 1934713408
    %v4246 = vunpack.c.0.s8 %v4245
    %v4247 = vlaneseq
    %v4248 = vshrl.u32 %v4247, 7
    %v4249 = vsub.s32 %v4246, %v4248
    %v4250 = vrot.slane %v4242, %v4249
    %v4252 = vunpack.c.l.s4 1934713408
    %v4253 = vunpack.c.0.s8 %v4252
    %v4254 = vlaneseq
    %v4255 = vshrl.u32 %v4254, 7
    %v4256 = vsub.s32 %v4253, %v4255
    %v4257 = vrot.slane %v4243, %v4256
    %v4258 = vcombine.low %v4202, %v4218
    %v4259 = vcombine.high %v4202, %v4218
    %v4261 = vunpack.c.l.s4 1934713408
    %v4262 = vunpack.c.0.s8 %v4261
    %v4263 = vlaneseq
    %v4264 = vshrl.u32 %v4263, 7
    %v4265 = vsub.s32 %v4262, %v4264
    %v4266 = vrot.slane %v4258, %v4265
    %v4268 = vunpack.c.l.s4 1934713408
    %v4269 = vunpack.c.0.s8 %v4268
    %v4270 = vlaneseq
    %v4271 = vshrl.u32 %v4270, 7
    %v4272 = vsub.s32 %v4269, %v4271
    %v4273 = vrot.slane %v4259, %v4272
    %v4274 = vcombine.low %v4209, %v4225
    %v4275 = vcombine.high %v4209, %v4225
    %v4277 = vunpack.c.l.s4 1934713408
    %v4278 = vunpack.c.0.s8 %v4277
    %v4279 = vlaneseq
    %v4280 = vshrl.u32 %v4279, 7
    %v4281 = vsub.s32 %v4278, %v4280
    %v4282 = vrot.slane %v4274, %v4281
    %v4284 = vunpack.c.l.s4 1934713408
    %v4285 = vunpack.c.0.s8 %v4284
    %v4286 = vlaneseq
    %v4287 = vshrl.u32 %v4286, 7
    %v4288 = vsub.s32 %v4285, %v4287
    %v4289 = vrot.slane %v4275, %v4288
    %v4290 = vcombine.low %v4234, %v4266
    %v4291 = vcombine.high %v4234, %v4266
    %v4292 = vcombine.low %v4241, %v4273
    %v4293 = vcombine.high %v4241, %v4273
    %v4294 = vcombine.low %v4250, %v4282
    %v4295 = vcombine.high %v4250, %v4282
    %v4296 = vcombine.low %v4257, %v4289
    %v4297 = vcombine.high %v4257, %v4289
    %4300 = vrot.lane.b32.xlu0 %v4155, 4
    %v4301 = vpop.permute.xlu0 %4300
    %4302 = vrot.lane.b32.xlu0 %v4291, 4
    %v4303 = vpop.permute.xlu0 %4302
    %4308 = vrot.lane.b32.xlu0 %v4156, 8
    %v4309 = vpop.permute.xlu0 %4308
    %4310 = vrot.lane.b32.xlu0 %v4292, 8
    %v4311 = vpop.permute.xlu0 %4310
    %4316 = vrot.lane.b32.xlu0 %v4157, 12
    %v4317 = vpop.permute.xlu0 %4316
    %4318 = vrot.lane.b32.xlu0 %v4293, 12
    %v4319 = vpop.permute.xlu0 %4318
    %4324 = vrot.lane.b32.xlu0 %v4158, 16
    %v4325 = vpop.permute.xlu0 %4324
    %4326 = vrot.lane.b32.xlu0 %v4294, 16
    %v4327 = vpop.permute.xlu0 %4326
    %4332 = vrot.lane.b32.xlu0 %v4159, 20
    %v4333 = vpop.permute.xlu0 %4332
    %4334 = vrot.lane.b32.xlu0 %v4295, 20
    %v4335 = vpop.permute.xlu0 %4334
    %4340 = vrot.lane.b32.xlu0 %v4160, 24
    %v4341 = vpop.permute.xlu0 %4340
    %4342 = vrot.lane.b32.xlu0 %v4296, 24
    %v4343 = vpop.permute.xlu0 %4342
    %4348 = vrot.lane.b32.xlu0 %v4161, 28
    %v4349 = vpop.permute.xlu0 %4348
    %4350 = vrot.lane.b32.xlu0 %v4297, 28
    %v4351 = vpop.permute.xlu0 %4350
    %v4354 = vsel %vm2087, %v4154, %v4301
    %v4355 = vsel %vm2087, %v4290, %v4303
    %v4356 = vsel %vm2824, %v4354, %v4309
    %v4357 = vsel %vm2824, %v4355, %v4311
    %vm4358 = vcmask 97280
    %v4359 = vsel %vm4358, %v4356, %v4317
    %v4360 = vsel %vm4358, %v4357, %v4319
    %vm4361 = vcmask 130048
    %v4362 = vsel %vm4361, %v4359, %v4325
    %v4363 = vsel %vm4361, %v4360, %v4327
    %vm4364 = vcmask 162816
    %v4365 = vsel %vm4364, %v4362, %v4333
    %v4366 = vsel %vm4364, %v4363, %v4335
    %vm4367 = vcmask 195584
    %v4368 = vsel %vm4367, %v4365, %v4341
    %v4369 = vsel %vm4367, %v4366, %v4343
    %vm4370 = vcmask 228352
    %v4371 = vsel %vm4370, %v4368, %v4349
    %v4372 = vsel %vm4370, %v4369, %v4351
    %v4373 = vpack.c.bf16 %v4372, %v4371
    %v4374 = vld [vmem:[#allocation10] sm:$0xf]
    %v4375 = vld [vmem:[#allocation10 + $0x4] sm:$0xf]
    %v4376 = vld [vmem:[#allocation10 + $0x8] sm:$0xf]
    %v4377 = vld [vmem:[#allocation10 + $0xc] sm:$0xf]
    %v4378 = vld [vmem:[%s5] sm:$0x1]
    %v4380 = vlaneseq
    %v4381 = vshrl.u32 %v4380, 7
    %v4382 = vsub.s32 0, %v4381
    %v4383 = vrot.slane %v4378, %v4382
    %v4389 = vunpack.c.l.b16 %v4374
    %v4390 = vunpack.c.l.b16 %v4375
    %v4391 = vunpack.c.l.b16 %v4376
    %v4392 = vunpack.c.l.b16 %v4377
    %v4393 = vpack.c.b16 %v4390, %v4389
    %v4394 = vpack.c.b16 %v4392, %v4391
    %v4398 = vsel %vm116, %v4373, 0
    %4400 = vmatprep.subr.bf16.mxu0 0
    %4401 = vmatpush1.bf16.msra.mxu0 0
    %4402 = vmatprep.subr.bf16.mxu0 0
    %4403 = vmatpush1.bf16.msra.mxu0 0
    %4404 = vmatprep.subr.bf16.mxu0 0
    %4405 = vmatpush1.bf16.msra.mxu0 0
    %4406 = vmatprep.subr.bf16.mxu0 0
    %4407 = vmatpush1.bf16.msra.mxu0 0
    %4408 = vmatprep.subr.bf16.mxu0 0
    %4409 = vmatpush1.bf16.msra.mxu0 0
    %4410 = vmatprep.subr.bf16.mxu0 0
    %4411 = vmatpush1.bf16.msra.mxu0 0
    %4412 = vmatprep.subr.bf16.mxu0 0
    %4413 = vmatpush1.bf16.msra.mxu0 %v4394
    %4414 = vmatprep.subr.bf16.mxu0 0
    %4415 = vmatpush1.bf16.msra.mxu0 %v4393
    %4416 = vmatprep.subr.bf16.mxu0 0
    %4417 = vmatpush2.bf16.msra.mxu0 0
    %4418 = vmatprep.subr.bf16.mxu0 0
    %4419 = vmatpush2.bf16.msra.mxu0 0
    %4420 = vmatprep.subr.bf16.mxu0 0
    %4421 = vmatpush2.bf16.msra.mxu0 0
    %4422 = vmatprep.subr.bf16.mxu0 0
    %4423 = vmatpush2.bf16.msra.mxu0 0
    %4424 = vmatprep.subr.bf16.mxu0 0
    %4425 = vmatpush2.bf16.msra.mxu0 0
    %4426 = vmatprep.subr.bf16.mxu0 0
    %4427 = vmatpush2.bf16.msra.mxu0 0
    %4428 = vmatprep.subr.bf16.mxu0 0
    %4429 = vmatpush2.bf16.msra.mxu0 0
    %4430 = vmatprep.subr.bf16.mxu0 0
    %4431 = vmatpush2.bf16.msra.mxu0 0
    %4432 = vmatprep.mubr.bf16.mxu0 0
    %4433 = vmatmul.mubr.bf16.gmra.mxu0 %v4398
    %v4434 = vpop.f32.mrf.mxu0
    %v4435 = vadd.f32 %v4383, %v4434
    %v4436 = vpop.f32.mrf.mxu0
    %v4437 = vpop.f32.mrf.mxu0
    %v4438 = vadd.f32 %v4383, %v4437
    %v4439 = vpop.f32.mrf.mxu0
    %4440 = vdwg.mxu0
    %4441 = vst.msk [vmem:[#allocation11] sm:$0xff] %vm116, %v4435
    %4442 = vst.msk [vmem:[#allocation11 + $0x8] sm:$0xff] %vm116, %v4438
    // Predicated region
    $region46: #{tpu_custom_call.1} parent=1 // pred_check
      _
    $region47: #{tpu_custom_call.1} parent=1 // pred_check_branch
      %4444 = sbr.rel (0) target = $region49
    $region48: #{tpu_custom_call.1} parent=1 // pred_region
      %s4446 = ssub.s32 256, 256
      %4447 = vsyncadd [#allocation4], %s4446
      %s4448 = sshll.u32 [#allocation11], 4
      %s4449 = int_to_ptr.vmem [resolvable:$true] %s4448
      %4454 = dma.vmem_to_hbm [thread:$0]  %s4449, 256, %s6, [#allocation4], 128, 128, 8
    $region49: #{tpu_custom_call.1} parent=1 // pred_fallthru
      _
    // Predicated region
    $region50: #{tpu_custom_call.1} parent=1 // pred_check
      _
    $region51: #{tpu_custom_call.1} parent=1 // pred_check_branch
      %4456 = sbr.rel (0) target = $region53
    $region52: #{tpu_custom_call.1} parent=1 // pred_region
      %4457 = dma.done [#allocation4], 256
    $region53: #{tpu_custom_call.1} parent=1 // pred_fallthru
      _
    %4458 = vsyncpa [#allocation3], 1
    %4459 = vsyncpa [#allocation6], 1
    %4460 = vsyncpa [#allocation9], 1
    %4461 = vsyncpa [#allocation4], 1

</llo_original>
